<compile_context>
chip_gen: v6e
topology: v6e:2x2x1
jax: 0.10.0
libtpu: 0.0.40
codegen_flags: <defaults>
</compile_context>

<pallas_src>
import functools
import math

import jax
import jax.numpy as jnp
from jax.experimental import pallas as pl
from jax.experimental.pallas import tpu as pltpu


def _layer_norm(x, gamma, beta, eps=1e-5):
    mu = jnp.mean(x, axis=-1, keepdims=True)
    var = jnp.mean(jnp.square(x - mu), axis=-1, keepdims=True)
    return (x - mu) * jax.lax.rsqrt(var + eps) * gamma + beta


def fused_layers_kernel(x_ref,
                        wqkv_ref, bqkv_ref, wo_ref, bo_ref,
                        w1_ref, b1_ref, w2_ref, b2_ref,
                        g1_ref, be1_ref, g2_ref, be2_ref,
                        o_ref, *, num_heads, batch_tile, seq, ffn_chunk):
    """Grid = (row_tiles, layers). Activations live in o_ref across the layer axis."""
    layer = pl.program_id(1)

    # Layer 0: bring this row tile of the input into the resident output block.
    @pl.when(layer == 0)
    def _():
        o_ref[...] = x_ref[...]

    x = o_ref[...].astype(jnp.float32)            # (rows, E), resident activations
    rows, E = x.shape
    H = num_heads
    dh = E // H
    Bt, S = batch_tile, seq
    w_dtype = wqkv_ref.dtype                      # f32 or bf16 weight-streaming dtype

    # ---- multi-head self-attention (dropout = identity in eval mode) ----
    # Host pre-transposed weights: x @ W. 1/sqrt(dh) already folded into Q columns.
    qkv = (jnp.dot(x.astype(w_dtype), wqkv_ref[0],
                   preferred_element_type=jnp.float32) + bqkv_ref[0])

    # Per-head attention with the head-concat fused into the output projection:
    # each head accumulates ctx_h @ Wo[h] directly into `attn` (no concatenate).
    # TODO(synk): at realistic dh (>=128) switch to one (B,H)-batched dot_general;
    # the static per-head loop is kept here for robust Mosaic lowering at dh=8.
    attn = jnp.broadcast_to(bo_ref[0], (rows, E)).astype(jnp.float32)
    for h in range(H):                            # static, small head count
        q = qkv[:, h * dh:(h + 1) * dh].reshape(Bt, S, dh)
        k = qkv[:, E + h * dh:E + (h + 1) * dh].reshape(Bt, S, dh)
        v = qkv[:, 2 * E + h * dh:2 * E + (h + 1) * dh].reshape(Bt, S, dh)
        s = jnp.einsum('bqd,bkd->bqk', q, k, preferred_element_type=jnp.float32)
        s = s - jnp.max(s, axis=-1, keepdims=True)
        p = jnp.exp(s)
        # approx reciprocal (EUP): tiny deviation vs exact softmax, within tolerance.
        p = p * pl.reciprocal(jnp.sum(p, axis=-1, keepdims=True), approx=True)
        ctx = jnp.einsum('bqk,bkd->bqd', p, v,
                         preferred_element_type=jnp.float32).reshape(rows, dh)
        attn = attn + jnp.dot(ctx.astype(w_dtype), wo_ref[0, h],
                              preferred_element_type=jnp.float32)

    # ---- residual + LayerNorm 1 (post-norm) ----
    h1 = _layer_norm(x + attn, g1_ref[0], be1_ref[0])

    # ---- feed-forward (ReLU); hidden dim chunked to bound the (rows, F) temp ----
    F = w1_ref.shape[-1]
    h1m = h1.astype(w_dtype)
    ff = jnp.zeros((rows, E), jnp.float32)
    for c0 in range(0, F, ffn_chunk):             # static chunk boundaries
        c1 = min(c0 + ffn_chunk, F)
        a = jnp.dot(h1m, w1_ref[0, :, c0:c1], preferred_element_type=jnp.float32)
        a = jnp.maximum(a + b1_ref[0, :, c0:c1], 0.0)
        ff = ff + jnp.dot(a.astype(w_dtype), w2_ref[0, c0:c1, :],
                          preferred_element_type=jnp.float32)
    ff = ff + b2_ref[0]

    # ---- residual + LayerNorm 2 ----
    o_ref[...] = _layer_norm(h1 + ff, g2_ref[0], be2_ref[0]).astype(o_ref.dtype)


# -------------------- host-side weight prep / tiling --------------------
def _vmem_capacity_bytes():
    try:
        return int(pltpu.get_tpu_info().vmem_capacity_bytes)
    except Exception:
        return 64 * 1024 * 1024     # conservative fallback (v7x per-TC VMEM)


def _pick_batch_tile(batch, seq, embed, dff, weight_bytes, ffn_chunk,
                     vmem_budget, min_rows_for_split=1024):
    """Largest batch tile whose working set fits the VMEM budget.

    Every extra row tile re-streams all layers' weights from HBM, so we want the
    biggest tile VMEM allows; but if a single tile leaves the v7x second
    TensorCore idle AND each half would still be compute-bound-sized, split in 2.
    Enforces the (8,128) sublane constraint unless the block spans the full array.
    """
    E, F = embed, dff
    # Double-buffered weight blocks for one layer (all streamed weight arrays).
    w_elems = E * 3 * E + E * E + E * F + F * E + 3 * E + F + 6 * E
    weights_vmem = 2 * w_elems * weight_bytes
    # Rough f32 working set per activation row: resident out block (x2 buffers),
    # input block (x2), qkv, attention temporaries, FFN chunk + accumulator, norms.
    per_row = (2 * E + 2 * E + 3 * E + 3 * E + seq + ffn_chunk + 2 * E) * 4
    avail = int(vmem_budget * 0.7) - weights_vmem
    max_rows = max(seq, avail // max(per_row, 1))

    candidates = [c for c in range(1, batch + 1)
                  if batch % c == 0 and ((c * seq) % 8 == 0 or c == batch)]
    fitting = [c for c in candidates if c * seq <= max_rows]
    bt = max(fitting) if fitting else min(candidates)

    if batch // bt == 1:
        smaller = [c for c in candidates if c < bt and c * seq >= min_rows_for_split]
        if smaller:
            bt = max(smaller)
    return bt


def _stack_weights(layer_params, num_heads, weights_dtype):
    """Stack per-layer weights on a leading layer axis, pre-transposed to (in, out).

    Folds the 1/sqrt(dh) attention scale into the Q columns of wqkv/bqkv and
    reshapes the out-projection to (H, dh, E) so the head-concat is fused away.
    Matmul weights are cast to `weights_dtype` (f32 or bf16); biases/norms stay f32.
    """
    E = layer_params[0]["wo"].shape[0]
    dh = E // num_heads
    scale = 1.0 / math.sqrt(dh)
    q_scale = jnp.concatenate([jnp.full((E,), scale, jnp.float32),
                               jnp.ones((2 * E,), jnp.float32)])

    wqkv = jnp.stack([p["wqkv"].T * q_scale for p in layer_params])              # (L,E,3E)
    bqkv = jnp.stack([p["bqkv"] * q_scale for p in layer_params])                # (L,1,3E)
    wo = jnp.stack([p["wo"].T.reshape(num_heads, dh, E) for p in layer_params])  # (L,H,dh,E)
    bo = jnp.stack([p["bo"] for p in layer_params])                              # (L,1,E)
    w1 = jnp.stack([p["w1"].T for p in layer_params])                            # (L,E,F)
    b1 = jnp.stack([p["b1"] for p in layer_params])                              # (L,1,F)
    w2 = jnp.stack([p["w2"].T for p in layer_params])                            # (L,F,E)
    b2 = jnp.stack([p["b2"] for p in layer_params])                              # (L,1,E)
    g1 = jnp.stack([p["g1"] for p in layer_params])
    be1 = jnp.stack([p["be1"] for p in layer_params])
    g2 = jnp.stack([p["g2"] for p in layer_params])
    be2 = jnp.stack([p["be2"] for p in layer_params])

    wd = weights_dtype
    return [wqkv.astype(wd), bqkv, wo.astype(wd), bo,
            w1.astype(wd), b1, w2.astype(wd), b2, g1, be1, g2, be2]


def patch_mixer(x, layer_params, num_heads, *, weights_dtype=jnp.float32,
                ffn_chunk=512):
    """x: (B, S, E). layer_params: list of dicts with PyTorch-layout weights."""
    B, S, E = x.shape
    L = len(layer_params)
    F = layer_params[0]["w1"].shape[0]
    ffn_chunk = min(ffn_chunk, F)

    weights = _stack_weights(layer_params, num_heads, weights_dtype)
    wbytes = jnp.dtype(weights_dtype).itemsize

    vmem_cap = _vmem_capacity_bytes()
    bt = _pick_batch_tile(B, S, E, F, wbytes, ffn_chunk, vmem_cap)
    rows = bt * S
    x2 = x.reshape(B * S, E)                       # fold batch into rows

    def act_spec():
        return pl.BlockSpec((rows, E), lambda i, l: (i, 0))

    def w_spec(arr):
        nd = arr.ndim
        return pl.BlockSpec((1,) + arr.shape[1:],
                            lambda i, l, _nd=nd: (l,) + (0,) * (_nd - 1))

    kernel = functools.partial(fused_layers_kernel, num_heads=num_heads,
                               batch_tile=bt, seq=S, ffn_chunk=ffn_chunk)

    out2 = pl.pallas_call(
        kernel,
        out_shape=jax.ShapeDtypeStruct((B * S, E), x.dtype),
        grid=(B // bt, L),
        in_specs=[act_spec()] + [w_spec(w) for w in weights],
        out_specs=act_spec(),
        compiler_params=pltpu.CompilerParams(
            dimension_semantics=("parallel", "arbitrary"),
            vmem_limit_bytes=int(vmem_cap * 0.85)),
    )(x2, *weights)
    return out2.reshape(B, S, E)


# -------------------- deterministic parameter init (PyTorch layout) --------------------
def xavier_uniform(key, shape):
    fan_out, fan_in = shape
    bound = math.sqrt(6.0 / (fan_in + fan_out))
    return jax.random.uniform(key, shape, jnp.float32, -bound, bound)


def init_layer_params(key, embed_dim, dim_feedforward):
    k = jax.random.split(key, 4)
    E, F = embed_dim, dim_feedforward
    return dict(
        wqkv=xavier_uniform(k[0], (3 * E, E)), bqkv=jnp.zeros((1, 3 * E), jnp.float32),
        wo=xavier_uniform(k[1], (E, E)),       bo=jnp.zeros((1, E), jnp.float32),
        w1=xavier_uniform(k[2], (F, E)),       b1=jnp.zeros((1, F), jnp.float32),
        w2=xavier_uniform(k[3], (E, F)),       b2=jnp.zeros((1, E), jnp.float32),
        g1=jnp.ones((1, E), jnp.float32),      be1=jnp.zeros((1, E), jnp.float32),
        g2=jnp.ones((1, E), jnp.float32),      be2=jnp.zeros((1, E), jnp.float32),
    )


# -------------------- pure-JAX reference (sanity check) --------------------
def ref_encoder_layer(x, p, num_heads):
    B, S, E = x.shape
    dh = E // num_heads
    qkv = x @ p["wqkv"].T + p["bqkv"][0]
    q, k, v = jnp.split(qkv, 3, axis=-1)
    sh = lambda t: t.reshape(B, S, num_heads, dh).transpose(0, 2, 1, 3)
    q, k, v = sh(q), sh(k), sh(v)
    s = (q / math.sqrt(dh)) @ k.transpose(0, 1, 3, 2)
    a = jax.nn.softmax(s, axis=-1) @ v
    a = a.transpose(0, 2, 1, 3).reshape(B, S, E)
    a = a @ p["wo"].T + p["bo"][0]
    h1 = _layer_norm(x + a, p["g1"][0], p["be1"][0])
    ff = jnp.maximum(h1 @ p["w1"].T + p["b1"][0], 0.0) @ p["w2"].T + p["b2"][0]
    return _layer_norm(h1 + ff, p["g2"][0], p["be2"][0])


def ref_patch_mixer(x, layer_params, num_heads):
    for p in layer_params:
        x = ref_encoder_layer(x, p, num_heads)
    return x


if __name__ == "__main__":
    # small shapes: batch=2, num_patches(seq)=8, embed_dim=32, heads=4, layers=2
    B, S, E, H, NUM_LAYERS = 2, 8, 32, 4, 2
    DFF = 2048  # PyTorch nn.TransformerEncoderLayer default dim_feedforward

    root = jax.random.PRNGKey(0)
    kx, *kl = jax.random.split(root, 1 + NUM_LAYERS)
    x = jax.random.normal(kx, (B, S, E), jnp.float32)
    layer_params = [init_layer_params(k, E, DFF) for k in kl]

    ref = ref_patch_mixer(x, layer_params, H)

    # f32 weight path: exact-parity check against the pure-JAX reference.
    out = jax.block_until_ready(patch_mixer(x, layer_params, H))
    if not jnp.allclose(out, ref, rtol=2e-3, atol=2e-3):
        err = float(jnp.max(jnp.abs(out - ref)))
        raise AssertionError(f"f32 Pallas kernel mismatch (max abs err {err})")

    # bf16 weight-streaming path (perf option): loose sanity check only.
    out_bf16 = jax.block_until_ready(
        patch_mixer(x, layer_params, H, weights_dtype=jnp.bfloat16))
    if not jnp.allclose(out_bf16, ref, rtol=1e-1, atol=1e-1):
        err = float(jnp.max(jnp.abs(out_bf16 - ref)))
        raise AssertionError(f"bf16-weight Pallas kernel mismatch (max abs err {err})")

    print("KERNEL_OK")
</pallas_src>

<mosaic_0001>
module attributes {stable_mosaic.version = 11 : i64} {
  func.func @fused_layers_kernel(%arg0: i32, %arg1: i32, %arg2: memref<16x32xf32, #tpu.memory_space<vmem>>, %arg3: memref<1x32x96xf32, #tpu.memory_space<vmem>>, %arg4: memref<1x1x96xf32, #tpu.memory_space<vmem>>, %arg5: memref<1x4x8x32xf32, #tpu.memory_space<vmem>>, %arg6: memref<1x1x32xf32, #tpu.memory_space<vmem>>, %arg7: memref<1x32x2048xf32, #tpu.memory_space<vmem>>, %arg8: memref<1x1x2048xf32, #tpu.memory_space<vmem>>, %arg9: memref<1x2048x32xf32, #tpu.memory_space<vmem>>, %arg10: memref<1x1x32xf32, #tpu.memory_space<vmem>>, %arg11: memref<1x1x32xf32, #tpu.memory_space<vmem>>, %arg12: memref<1x1x32xf32, #tpu.memory_space<vmem>>, %arg13: memref<1x1x32xf32, #tpu.memory_space<vmem>>, %arg14: memref<1x1x32xf32, #tpu.memory_space<vmem>>, %arg15: memref<16x32xf32, #tpu.memory_space<vmem>>) attributes {dimension_semantics = [#tpu.dimension_semantics<parallel>, #tpu.dimension_semantics<arbitrary>], iteration_bounds = array<i64: 1, 2>, scalar_prefetch = 0 : i64, scratch_operands = 0 : i64, tpu.core_type = #tpu.core_type<tc>, window_params = [{transform_indices = @transform_0, window_bounds = array<i64: 16, 32>}, {transform_indices = @transform_1, window_bounds = array<i64: 1, 32, 96>}, {transform_indices = @transform_2, window_bounds = array<i64: 1, 1, 96>}, {transform_indices = @transform_3, window_bounds = array<i64: 1, 4, 8, 32>}, {transform_indices = @transform_4, window_bounds = array<i64: 1, 1, 32>}, {transform_indices = @transform_5, window_bounds = array<i64: 1, 32, 2048>}, {transform_indices = @transform_6, window_bounds = array<i64: 1, 1, 2048>}, {transform_indices = @transform_7, window_bounds = array<i64: 1, 2048, 32>}, {transform_indices = @transform_8, window_bounds = array<i64: 1, 1, 32>}, {transform_indices = @transform_9, window_bounds = array<i64: 1, 1, 32>}, {transform_indices = @transform_10, window_bounds = array<i64: 1, 1, 32>}, {transform_indices = @transform_11, window_bounds = array<i64: 1, 1, 32>}, {transform_indices = @transform_12, window_bounds = array<i64: 1, 1, 32>}, {transform_indices = @transform_13, window_bounds = array<i64: 16, 32>}]} {
    %c0_i32 = arith.constant 0 : i32
    %0 = arith.cmpi eq, %arg1, %c0_i32 : i32
    %1 = arith.extui %0 : i1 to i32
    %c0_i32_0 = arith.constant 0 : i32
    %2 = arith.cmpi ne, %1, %c0_i32_0 : i32
    scf.if %2 {
      %c0_117 = arith.constant 0 : index
      %c0_118 = arith.constant 0 : index
      %219 = vector.load %arg2[%c0_117, %c0_118] : memref<16x32xf32, #tpu.memory_space<vmem>>, vector<16x32xf32>
      %c0_119 = arith.constant 0 : index
      %c0_120 = arith.constant 0 : index
      %220 = vector.load %arg15[%c0_119, %c0_120] : memref<16x32xf32, #tpu.memory_space<vmem>>, vector<16x32xf32>
      tpu.vector_store %arg15[%c0_119, %c0_120], %219 {strides = array<i32>} : memref<16x32xf32, #tpu.memory_space<vmem>>, vector<16x32xf32>,
    } else {
    }
    %c0 = arith.constant 0 : index
    %c0_1 = arith.constant 0 : index
    %3 = vector.load %arg15[%c0, %c0_1] : memref<16x32xf32, #tpu.memory_space<vmem>>, vector<16x32xf32>
    %c0_2 = arith.constant 0 : index
    %c0_3 = arith.constant 0 : index
    %c0_4 = arith.constant 0 : index
    %4 = vector.load %arg3[%c0_2, %c0_3, %c0_4] : memref<1x32x96xf32, #tpu.memory_space<vmem>>, vector<1x32x96xf32>
    %5 = vector.shape_cast %4 : vector<1x32x96xf32> to vector<32x96xf32>
    %cst = arith.constant dense<0.000000e+00> : vector<16x96xf32>
    %6 = tpu.matmul %3, %5, %cst {dimension_numbers = #tpu.dot_dimension_numbers<[1], [0], [0], [1], [0, 0, 1, 1], [], []>} : vector<16x32xf32>, vector<32x96xf32>, vector<16x96xf32> -> vector<16x96xf32>
    %c0_5 = arith.constant 0 : index
    %c0_6 = arith.constant 0 : index
    %c0_7 = arith.constant 0 : index
    %7 = vector.load %arg4[%c0_5, %c0_6, %c0_7] : memref<1x1x96xf32, #tpu.memory_space<vmem>>, vector<1x1x96xf32>
    %8 = vector.shape_cast %7 : vector<1x1x96xf32> to vector<1x96xf32>
    %9 = vector.broadcast %8 : vector<1x96xf32> to vector<16x96xf32>
    %10 = arith.addf %6, %9 : vector<16x96xf32>
    %c0_8 = arith.constant 0 : index
    %c0_9 = arith.constant 0 : index
    %c0_10 = arith.constant 0 : index
    %11 = vector.load %arg6[%c0_8, %c0_9, %c0_10] : memref<1x1x32xf32, #tpu.memory_space<vmem>>, vector<1x1x32xf32>
    %12 = vector.shape_cast %11 : vector<1x1x32xf32> to vector<1x32xf32>
    %13 = vector.shape_cast %12 : vector<1x32xf32> to vector<1x32xf32>
    %14 = vector.broadcast %13 : vector<1x32xf32> to vector<16x32xf32>
    %15 = vector.extract_strided_slice %10 {offsets = [0, 0], sizes = [16, 8], strides = [1, 1]} : vector<16x96xf32> to vector<16x8xf32>
    %16 = vector.shape_cast %15 : vector<16x8xf32> to vector<2x8x8xf32>
    %17 = vector.extract_strided_slice %10 {offsets = [0, 32], sizes = [16, 8], strides = [1, 1]} : vector<16x96xf32> to vector<16x8xf32>
    %18 = vector.shape_cast %17 : vector<16x8xf32> to vector<2x8x8xf32>
    %19 = vector.extract_strided_slice %10 {offsets = [0, 64], sizes = [16, 8], strides = [1, 1]} : vector<16x96xf32> to vector<16x8xf32>
    %20 = vector.shape_cast %19 : vector<16x8xf32> to vector<2x8x8xf32>
    "tpu.trace_start"() <{level = 10 : i32, message = "bqd,bkd->bqk"}> : () -> ()
    %cst_11 = arith.constant dense<0.000000e+00> : vector<2x8x8xf32>
    %21 = tpu.matmul %16, %18, %cst_11 {dimension_numbers = #tpu.dot_dimension_numbers<[2], [2], [1], [1], [0, 0, 0, 1, 1, 1], [0], [0]>} : vector<2x8x8xf32>, vector<2x8x8xf32>, vector<2x8x8xf32> -> vector<2x8x8xf32>
    "tpu.trace_stop"() : () -> ()
    %cst_12 = arith.constant dense<0xFF800000> : vector<2x8xf32>
    %22 = vector.multi_reduction <maximumf>, %21, %cst_12 [2] : vector<2x8x8xf32> to vector<2x8xf32>
    %23 = vector.shape_cast %22 : vector<2x8xf32> to vector<2x8x1xf32>
    %24 = vector.broadcast %23 : vector<2x8x1xf32> to vector<2x8x8xf32>
    %25 = arith.subf %21, %24 : vector<2x8x8xf32>
    %26 = math.exp %25 : vector<2x8x8xf32>
    %cst_13 = arith.constant dense<0.000000e+00> : vector<2x8xf32>
    %27 = vector.multi_reduction <add>, %26, %cst_13 [2] : vector<2x8x8xf32> to vector<2x8xf32>
    %28 = vector.shape_cast %27 : vector<2x8xf32> to vector<2x8x1xf32>
    %29 = tpu.reciprocal %28 {approx = true} : vector<2x8x1xf32> -> vector<2x8x1xf32>
    %30 = vector.broadcast %29 : vector<2x8x1xf32> to vector<2x8x8xf32>
    %31 = arith.mulf %26, %30 : vector<2x8x8xf32>
    "tpu.trace_start"() <{level = 10 : i32, message = "bqk,bkd->bqd"}> : () -> ()
    %cst_14 = arith.constant dense<0.000000e+00> : vector<2x8x8xf32>
    %32 = tpu.matmul %31, %20, %cst_14 {dimension_numbers = #tpu.dot_dimension_numbers<[2], [1], [1], [2], [0, 0, 0, 1, 1, 2], [0], [0]>} : vector<2x8x8xf32>, vector<2x8x8xf32>, vector<2x8x8xf32> -> vector<2x8x8xf32>
    "tpu.trace_stop"() : () -> ()
    %33 = vector.shape_cast %32 : vector<2x8x8xf32> to vector<16x8xf32>
    %c0_15 = arith.constant 0 : index
    %c0_16 = arith.constant 0 : index
    %c0_17 = arith.constant 0 : index
    %c0_18 = arith.constant 0 : index
    %34 = vector.load %arg5[%c0_15, %c0_16, %c0_17, %c0_18] : memref<1x4x8x32xf32, #tpu.memory_space<vmem>>, vector<1x1x8x32xf32>
    %35 = vector.shape_cast %34 : vector<1x1x8x32xf32> to vector<8x32xf32>
    %cst_19 = arith.constant dense<0.000000e+00> : vector<16x32xf32>
    %36 = tpu.matmul %33, %35, %cst_19 {dimension_numbers = #tpu.dot_dimension_numbers<[1], [0], [0], [1], [0, 0, 1, 1], [], []>} : vector<16x8xf32>, vector<8x32xf32>, vector<16x32xf32> -> vector<16x32xf32>
    %37 = arith.addf %14, %36 : vector<16x32xf32>
    %38 = vector.extract_strided_slice %10 {offsets = [0, 8], sizes = [16, 8], strides = [1, 1]} : vector<16x96xf32> to vector<16x8xf32>
    %39 = vector.shape_cast %38 : vector<16x8xf32> to vector<2x8x8xf32>
    %40 = vector.extract_strided_slice %10 {offsets = [0, 40], sizes = [16, 8], strides = [1, 1]} : vector<16x96xf32> to vector<16x8xf32>
    %41 = vector.shape_cast %40 : vector<16x8xf32> to vector<2x8x8xf32>
    %42 = vector.extract_strided_slice %10 {offsets = [0, 72], sizes = [16, 8], strides = [1, 1]} : vector<16x96xf32> to vector<16x8xf32>
    %43 = vector.shape_cast %42 : vector<16x8xf32> to vector<2x8x8xf32>
    "tpu.trace_start"() <{level = 10 : i32, message = "bqd,bkd->bqk"}> : () -> ()
    %cst_20 = arith.constant dense<0.000000e+00> : vector<2x8x8xf32>
    %44 = tpu.matmul %39, %41, %cst_20 {dimension_numbers = #tpu.dot_dimension_numbers<[2], [2], [1], [1], [0, 0, 0, 1, 1, 1], [0], [0]>} : vector<2x8x8xf32>, vector<2x8x8xf32>, vector<2x8x8xf32> -> vector<2x8x8xf32>
    "tpu.trace_stop"() : () -> ()
    %cst_21 = arith.constant dense<0xFF800000> : vector<2x8xf32>
    %45 = vector.multi_reduction <maximumf>, %44, %cst_21 [2] : vector<2x8x8xf32> to vector<2x8xf32>
    %46 = vector.shape_cast %45 : vector<2x8xf32> to vector<2x8x1xf32>
    %47 = vector.broadcast %46 : vector<2x8x1xf32> to vector<2x8x8xf32>
    %48 = arith.subf %44, %47 : vector<2x8x8xf32>
    %49 = math.exp %48 : vector<2x8x8xf32>
    %cst_22 = arith.constant dense<0.000000e+00> : vector<2x8xf32>
    %50 = vector.multi_reduction <add>, %49, %cst_22 [2] : vector<2x8x8xf32> to vector<2x8xf32>
    %51 = vector.shape_cast %50 : vector<2x8xf32> to vector<2x8x1xf32>
    %52 = tpu.reciprocal %51 {approx = true} : vector<2x8x1xf32> -> vector<2x8x1xf32>
    %53 = vector.broadcast %52 : vector<2x8x1xf32> to vector<2x8x8xf32>
    %54 = arith.mulf %49, %53 : vector<2x8x8xf32>
    "tpu.trace_start"() <{level = 10 : i32, message = "bqk,bkd->bqd"}> : () -> ()
    %cst_23 = arith.constant dense<0.000000e+00> : vector<2x8x8xf32>
    %55 = tpu.matmul %54, %43, %cst_23 {dimension_numbers = #tpu.dot_dimension_numbers<[2], [1], [1], [2], [0, 0, 0, 1, 1, 2], [0], [0]>} : vector<2x8x8xf32>, vector<2x8x8xf32>, vector<2x8x8xf32> -> vector<2x8x8xf32>
    "tpu.trace_stop"() : () -> ()
    %56 = vector.shape_cast %55 : vector<2x8x8xf32> to vector<16x8xf32>
    %c0_24 = arith.constant 0 : index
    %c1 = arith.constant 1 : index
    %c0_25 = arith.constant 0 : index
    %c0_26 = arith.constant 0 : index
    %57 = vector.load %arg5[%c0_24, %c1, %c0_25, %c0_26] : memref<1x4x8x32xf32, #tpu.memory_space<vmem>>, vector<1x1x8x32xf32>
    %58 = vector.shape_cast %57 : vector<1x1x8x32xf32> to vector<8x32xf32>
    %cst_27 = arith.constant dense<0.000000e+00> : vector<16x32xf32>
    %59 = tpu.matmul %56, %58, %cst_27 {dimension_numbers = #tpu.dot_dimension_numbers<[1], [0], [0], [1], [0, 0, 1, 1], [], []>} : vector<16x8xf32>, vector<8x32xf32>, vector<16x32xf32> -> vector<16x32xf32>
    %60 = arith.addf %37, %59 : vector<16x32xf32>
    %61 = vector.extract_strided_slice %10 {offsets = [0, 16], sizes = [16, 8], strides = [1, 1]} : vector<16x96xf32> to vector<16x8xf32>
    %62 = vector.shape_cast %61 : vector<16x8xf32> to vector<2x8x8xf32>
    %63 = vector.extract_strided_slice %10 {offsets = [0, 48], sizes = [16, 8], strides = [1, 1]} : vector<16x96xf32> to vector<16x8xf32>
    %64 = vector.shape_cast %63 : vector<16x8xf32> to vector<2x8x8xf32>
    %65 = vector.extract_strided_slice %10 {offsets = [0, 80], sizes = [16, 8], strides = [1, 1]} : vector<16x96xf32> to vector<16x8xf32>
    %66 = vector.shape_cast %65 : vector<16x8xf32> to vector<2x8x8xf32>
    "tpu.trace_start"() <{level = 10 : i32, message = "bqd,bkd->bqk"}> : () -> ()
    %cst_28 = arith.constant dense<0.000000e+00> : vector<2x8x8xf32>
    %67 = tpu.matmul %62, %64, %cst_28 {dimension_numbers = #tpu.dot_dimension_numbers<[2], [2], [1], [1], [0, 0, 0, 1, 1, 1], [0], [0]>} : vector<2x8x8xf32>, vector<2x8x8xf32>, vector<2x8x8xf32> -> vector<2x8x8xf32>
    "tpu.trace_stop"() : () -> ()
    %cst_29 = arith.constant dense<0xFF800000> : vector<2x8xf32>
    %68 = vector.multi_reduction <maximumf>, %67, %cst_29 [2] : vector<2x8x8xf32> to vector<2x8xf32>
    %69 = vector.shape_cast %68 : vector<2x8xf32> to vector<2x8x1xf32>
    %70 = vector.broadcast %69 : vector<2x8x1xf32> to vector<2x8x8xf32>
    %71 = arith.subf %67, %70 : vector<2x8x8xf32>
    %72 = math.exp %71 : vector<2x8x8xf32>
    %cst_30 = arith.constant dense<0.000000e+00> : vector<2x8xf32>
    %73 = vector.multi_reduction <add>, %72, %cst_30 [2] : vector<2x8x8xf32> to vector<2x8xf32>
    %74 = vector.shape_cast %73 : vector<2x8xf32> to vector<2x8x1xf32>
    %75 = tpu.reciprocal %74 {approx = true} : vector<2x8x1xf32> -> vector<2x8x1xf32>
    %76 = vector.broadcast %75 : vector<2x8x1xf32> to vector<2x8x8xf32>
    %77 = arith.mulf %72, %76 : vector<2x8x8xf32>
    "tpu.trace_start"() <{level = 10 : i32, message = "bqk,bkd->bqd"}> : () -> ()
    %cst_31 = arith.constant dense<0.000000e+00> : vector<2x8x8xf32>
    %78 = tpu.matmul %77, %66, %cst_31 {dimension_numbers = #tpu.dot_dimension_numbers<[2], [1], [1], [2], [0, 0, 0, 1, 1, 2], [0], [0]>} : vector<2x8x8xf32>, vector<2x8x8xf32>, vector<2x8x8xf32> -> vector<2x8x8xf32>
    "tpu.trace_stop"() : () -> ()
    %79 = vector.shape_cast %78 : vector<2x8x8xf32> to vector<16x8xf32>
    %c0_32 = arith.constant 0 : index
    %c2 = arith.constant 2 : index
    %c0_33 = arith.constant 0 : index
    %c0_34 = arith.constant 0 : index
    %80 = vector.load %arg5[%c0_32, %c2, %c0_33, %c0_34] : memref<1x4x8x32xf32, #tpu.memory_space<vmem>>, vector<1x1x8x32xf32>
    %81 = vector.shape_cast %80 : vector<1x1x8x32xf32> to vector<8x32xf32>
    %cst_35 = arith.constant dense<0.000000e+00> : vector<16x32xf32>
    %82 = tpu.matmul %79, %81, %cst_35 {dimension_numbers = #tpu.dot_dimension_numbers<[1], [0], [0], [1], [0, 0, 1, 1], [], []>} : vector<16x8xf32>, vector<8x32xf32>, vector<16x32xf32> -> vector<16x32xf32>
    %83 = arith.addf %60, %82 : vector<16x32xf32>
    %84 = vector.extract_strided_slice %10 {offsets = [0, 24], sizes = [16, 8], strides = [1, 1]} : vector<16x96xf32> to vector<16x8xf32>
    %85 = vector.shape_cast %84 : vector<16x8xf32> to vector<2x8x8xf32>
    %86 = vector.extract_strided_slice %10 {offsets = [0, 56], sizes = [16, 8], strides = [1, 1]} : vector<16x96xf32> to vector<16x8xf32>
    %87 = vector.shape_cast %86 : vector<16x8xf32> to vector<2x8x8xf32>
    %88 = vector.extract_strided_slice %10 {offsets = [0, 88], sizes = [16, 8], strides = [1, 1]} : vector<16x96xf32> to vector<16x8xf32>
    %89 = vector.shape_cast %88 : vector<16x8xf32> to vector<2x8x8xf32>
    "tpu.trace_start"() <{level = 10 : i32, message = "bqd,bkd->bqk"}> : () -> ()
    %cst_36 = arith.constant dense<0.000000e+00> : vector<2x8x8xf32>
    %90 = tpu.matmul %85, %87, %cst_36 {dimension_numbers = #tpu.dot_dimension_numbers<[2], [2], [1], [1], [0, 0, 0, 1, 1, 1], [0], [0]>} : vector<2x8x8xf32>, vector<2x8x8xf32>, vector<2x8x8xf32> -> vector<2x8x8xf32>
    "tpu.trace_stop"() : () -> ()
    %cst_37 = arith.constant dense<0xFF800000> : vector<2x8xf32>
    %91 = vector.multi_reduction <maximumf>, %90, %cst_37 [2] : vector<2x8x8xf32> to vector<2x8xf32>
    %92 = vector.shape_cast %91 : vector<2x8xf32> to vector<2x8x1xf32>
    %93 = vector.broadcast %92 : vector<2x8x1xf32> to vector<2x8x8xf32>
    %94 = arith.subf %90, %93 : vector<2x8x8xf32>
    %95 = math.exp %94 : vector<2x8x8xf32>
    %cst_38 = arith.constant dense<0.000000e+00> : vector<2x8xf32>
    %96 = vector.multi_reduction <add>, %95, %cst_38 [2] : vector<2x8x8xf32> to vector<2x8xf32>
    %97 = vector.shape_cast %96 : vector<2x8xf32> to vector<2x8x1xf32>
    %98 = tpu.reciprocal %97 {approx = true} : vector<2x8x1xf32> -> vector<2x8x1xf32>
    %99 = vector.broadcast %98 : vector<2x8x1xf32> to vector<2x8x8xf32>
    %100 = arith.mulf %95, %99 : vector<2x8x8xf32>
    "tpu.trace_start"() <{level = 10 : i32, message = "bqk,bkd->bqd"}> : () -> ()
    %cst_39 = arith.constant dense<0.000000e+00> : vector<2x8x8xf32>
    %101 = tpu.matmul %100, %89, %cst_39 {dimension_numbers = #tpu.dot_dimension_numbers<[2], [1], [1], [2], [0, 0, 0, 1, 1, 2], [0], [0]>} : vector<2x8x8xf32>, vector<2x8x8xf32>, vector<2x8x8xf32> -> vector<2x8x8xf32>
    "tpu.trace_stop"() : () -> ()
    %102 = vector.shape_cast %101 : vector<2x8x8xf32> to vector<16x8xf32>
    %c0_40 = arith.constant 0 : index
    %c3 = arith.constant 3 : index
    %c0_41 = arith.constant 0 : index
    %c0_42 = arith.constant 0 : index
    %103 = vector.load %arg5[%c0_40, %c3, %c0_41, %c0_42] : memref<1x4x8x32xf32, #tpu.memory_space<vmem>>, vector<1x1x8x32xf32>
    %104 = vector.shape_cast %103 : vector<1x1x8x32xf32> to vector<8x32xf32>
    %cst_43 = arith.constant dense<0.000000e+00> : vector<16x32xf32>
    %105 = tpu.matmul %102, %104, %cst_43 {dimension_numbers = #tpu.dot_dimension_numbers<[1], [0], [0], [1], [0, 0, 1, 1], [], []>} : vector<16x8xf32>, vector<8x32xf32>, vector<16x32xf32> -> vector<16x32xf32>
    %106 = arith.addf %83, %105 : vector<16x32xf32>
    %107 = arith.addf %3, %106 : vector<16x32xf32>
    %c0_44 = arith.constant 0 : index
    %c0_45 = arith.constant 0 : index
    %c0_46 = arith.constant 0 : index
    %108 = vector.load %arg11[%c0_44, %c0_45, %c0_46] : memref<1x1x32xf32, #tpu.memory_space<vmem>>, vector<1x1x32xf32>
    %109 = vector.shape_cast %108 : vector<1x1x32xf32> to vector<1x32xf32>
    %c0_47 = arith.constant 0 : index
    %c0_48 = arith.constant 0 : index
    %c0_49 = arith.constant 0 : index
    %110 = vector.load %arg12[%c0_47, %c0_48, %c0_49] : memref<1x1x32xf32, #tpu.memory_space<vmem>>, vector<1x1x32xf32>
    %111 = vector.shape_cast %110 : vector<1x1x32xf32> to vector<1x32xf32>
    %cst_50 = arith.constant dense<0.000000e+00> : vector<16xf32>
    %112 = vector.multi_reduction <add>, %107, %cst_50 [1] : vector<16x32xf32> to vector<16xf32>
    %113 = vector.shape_cast %112 : vector<16xf32> to vector<16x1xf32>
    %cst_51 = arith.constant 3.200000e+01 : f32
    %114 = vector.broadcast %cst_51 : f32 to vector<16x1xf32>
    %115 = arith.divf %113, %114 : vector<16x1xf32>
    %116 = vector.broadcast %115 : vector<16x1xf32> to vector<16x32xf32>
    %117 = arith.subf %107, %116 : vector<16x32xf32>
    %118 = arith.mulf %117, %117 : vector<16x32xf32>
    %cst_52 = arith.constant dense<0.000000e+00> : vector<16xf32>
    %119 = vector.multi_reduction <add>, %118, %cst_52 [1] : vector<16x32xf32> to vector<16xf32>
    %120 = vector.shape_cast %119 : vector<16xf32> to vector<16x1xf32>
    %cst_53 = arith.constant 3.200000e+01 : f32
    %121 = vector.broadcast %cst_53 : f32 to vector<16x1xf32>
    %122 = arith.divf %120, %121 : vector<16x1xf32>
    %123 = vector.broadcast %115 : vector<16x1xf32> to vector<16x32xf32>
    %124 = arith.subf %107, %123 : vector<16x32xf32>
    %cst_54 = arith.constant 9.99999974E-6 : f32
    %125 = vector.broadcast %cst_54 : f32 to vector<16x1xf32>
    %126 = arith.addf %122, %125 : vector<16x1xf32>
    %127 = math.rsqrt %126 : vector<16x1xf32>
    %128 = vector.broadcast %127 : vector<16x1xf32> to vector<16x32xf32>
    %129 = arith.mulf %124, %128 : vector<16x32xf32>
    %130 = vector.broadcast %109 : vector<1x32xf32> to vector<16x32xf32>
    %131 = arith.mulf %129, %130 : vector<16x32xf32>
    %132 = vector.broadcast %111 : vector<1x32xf32> to vector<16x32xf32>
    %133 = arith.addf %131, %132 : vector<16x32xf32>
    %cst_55 = arith.constant 0.000000e+00 : f32
    %134 = vector.broadcast %cst_55 : f32 to vector<16x32xf32>
    %c0_56 = arith.constant 0 : index
    %c0_57 = arith.constant 0 : index
    %c0_58 = arith.constant 0 : index
    %135 = vector.load %arg7[%c0_56, %c0_57, %c0_58] : memref<1x32x2048xf32, #tpu.memory_space<vmem>>, vector<1x32x512xf32>
    %136 = vector.shape_cast %135 : vector<1x32x512xf32> to vector<32x512xf32>
    %cst_59 = arith.constant dense<0.000000e+00> : vector<16x512xf32>
    %137 = tpu.matmul %133, %136, %cst_59 {dimension_numbers = #tpu.dot_dimension_numbers<[1], [0], [0], [1], [0, 0, 1, 1], [], []>} : vector<16x32xf32>, vector<32x512xf32>, vector<16x512xf32> -> vector<16x512xf32>
    %c0_60 = arith.constant 0 : index
    %c0_61 = arith.constant 0 : index
    %c0_62 = arith.constant 0 : index
    %138 = vector.load %arg8[%c0_60, %c0_61, %c0_62] : memref<1x1x2048xf32, #tpu.memory_space<vmem>>, vector<1x1x512xf32>
    %139 = vector.shape_cast %138 : vector<1x1x512xf32> to vector<1x512xf32>
    %140 = vector.broadcast %139 : vector<1x512xf32> to vector<16x512xf32>
    %141 = arith.addf %137, %140 : vector<16x512xf32>
    %cst_63 = arith.constant 0.000000e+00 : f32
    %142 = vector.broadcast %cst_63 : f32 to vector<16x512xf32>
    %143 = arith.maximumf %141, %142 : vector<16x512xf32>
    %c0_64 = arith.constant 0 : index
    %c0_65 = arith.constant 0 : index
    %c0_66 = arith.constant 0 : index
    %144 = vector.load %arg9[%c0_64, %c0_65, %c0_66] : memref<1x2048x32xf32, #tpu.memory_space<vmem>>, vector<1x512x32xf32>
    %145 = vector.shape_cast %144 : vector<1x512x32xf32> to vector<512x32xf32>
    %cst_67 = arith.constant dense<0.000000e+00> : vector<16x32xf32>
    %146 = tpu.matmul %143, %145, %cst_67 {dimension_numbers = #tpu.dot_dimension_numbers<[1], [0], [0], [1], [0, 0, 1, 1], [], []>} : vector<16x512xf32>, vector<512x32xf32>, vector<16x32xf32> -> vector<16x32xf32>
    %147 = arith.addf %134, %146 : vector<16x32xf32>
    %c0_68 = arith.constant 0 : index
    %c0_69 = arith.constant 0 : index
    %c512 = arith.constant 512 : index
    %148 = vector.load %arg7[%c0_68, %c0_69, %c512] : memref<1x32x2048xf32, #tpu.memory_space<vmem>>, vector<1x32x512xf32>
    %149 = vector.shape_cast %148 : vector<1x32x512xf32> to vector<32x512xf32>
    %cst_70 = arith.constant dense<0.000000e+00> : vector<16x512xf32>
    %150 = tpu.matmul %133, %149, %cst_70 {dimension_numbers = #tpu.dot_dimension_numbers<[1], [0], [0], [1], [0, 0, 1, 1], [], []>} : vector<16x32xf32>, vector<32x512xf32>, vector<16x512xf32> -> vector<16x512xf32>
    %c0_71 = arith.constant 0 : index
    %c0_72 = arith.constant 0 : index
    %c512_73 = arith.constant 512 : index
    %151 = vector.load %arg8[%c0_71, %c0_72, %c512_73] : memref<1x1x2048xf32, #tpu.memory_space<vmem>>, vector<1x1x512xf32>
    %152 = vector.shape_cast %151 : vector<1x1x512xf32> to vector<1x512xf32>
    %153 = vector.broadcast %152 : vector<1x512xf32> to vector<16x512xf32>
    %154 = arith.addf %150, %153 : vector<16x512xf32>
    %cst_74 = arith.constant 0.000000e+00 : f32
    %155 = vector.broadcast %cst_74 : f32 to vector<16x512xf32>
    %156 = arith.maximumf %154, %155 : vector<16x512xf32>
    %c0_75 = arith.constant 0 : index
    %c512_76 = arith.constant 512 : index
    %c0_77 = arith.constant 0 : index
    %157 = vector.load %arg9[%c0_75, %c512_76, %c0_77] : memref<1x2048x32xf32, #tpu.memory_space<vmem>>, vector<1x512x32xf32>
    %158 = vector.shape_cast %157 : vector<1x512x32xf32> to vector<512x32xf32>
    %cst_78 = arith.constant dense<0.000000e+00> : vector<16x32xf32>
    %159 = tpu.matmul %156, %158, %cst_78 {dimension_numbers = #tpu.dot_dimension_numbers<[1], [0], [0], [1], [0, 0, 1, 1], [], []>} : vector<16x512xf32>, vector<512x32xf32>, vector<16x32xf32> -> vector<16x32xf32>
    %160 = arith.addf %147, %159 : vector<16x32xf32>
    %c0_79 = arith.constant 0 : index
    %c0_80 = arith.constant 0 : index
    %c1024 = arith.constant 1024 : index
    %161 = vector.load %arg7[%c0_79, %c0_80, %c1024] : memref<1x32x2048xf32, #tpu.memory_space<vmem>>, vector<1x32x512xf32>
    %162 = vector.shape_cast %161 : vector<1x32x512xf32> to vector<32x512xf32>
    %cst_81 = arith.constant dense<0.000000e+00> : vector<16x512xf32>
    %163 = tpu.matmul %133, %162, %cst_81 {dimension_numbers = #tpu.dot_dimension_numbers<[1], [0], [0], [1], [0, 0, 1, 1], [], []>} : vector<16x32xf32>, vector<32x512xf32>, vector<16x512xf32> -> vector<16x512xf32>
    %c0_82 = arith.constant 0 : index
    %c0_83 = arith.constant 0 : index
    %c1024_84 = arith.constant 1024 : index
    %164 = vector.load %arg8[%c0_82, %c0_83, %c1024_84] : memref<1x1x2048xf32, #tpu.memory_space<vmem>>, vector<1x1x512xf32>
    %165 = vector.shape_cast %164 : vector<1x1x512xf32> to vector<1x512xf32>
    %166 = vector.broadcast %165 : vector<1x512xf32> to vector<16x512xf32>
    %167 = arith.addf %163, %166 : vector<16x512xf32>
    %cst_85 = arith.constant 0.000000e+00 : f32
    %168 = vector.broadcast %cst_85 : f32 to vector<16x512xf32>
    %169 = arith.maximumf %167, %168 : vector<16x512xf32>
    %c0_86 = arith.constant 0 : index
    %c1024_87 = arith.constant 1024 : index
    %c0_88 = arith.constant 0 : index
    %170 = vector.load %arg9[%c0_86, %c1024_87, %c0_88] : memref<1x2048x32xf32, #tpu.memory_space<vmem>>, vector<1x512x32xf32>
    %171 = vector.shape_cast %170 : vector<1x512x32xf32> to vector<512x32xf32>
    %cst_89 = arith.constant dense<0.000000e+00> : vector<16x32xf32>
    %172 = tpu.matmul %169, %171, %cst_89 {dimension_numbers = #tpu.dot_dimension_numbers<[1], [0], [0], [1], [0, 0, 1, 1], [], []>} : vector<16x512xf32>, vector<512x32xf32>, vector<16x32xf32> -> vector<16x32xf32>
    %173 = arith.addf %160, %172 : vector<16x32xf32>
    %c0_90 = arith.constant 0 : index
    %c0_91 = arith.constant 0 : index
    %c1536 = arith.constant 1536 : index
    %174 = vector.load %arg7[%c0_90, %c0_91, %c1536] : memref<1x32x2048xf32, #tpu.memory_space<vmem>>, vector<1x32x512xf32>
    %175 = vector.shape_cast %174 : vector<1x32x512xf32> to vector<32x512xf32>
    %cst_92 = arith.constant dense<0.000000e+00> : vector<16x512xf32>
    %176 = tpu.matmul %133, %175, %cst_92 {dimension_numbers = #tpu.dot_dimension_numbers<[1], [0], [0], [1], [0, 0, 1, 1], [], []>} : vector<16x32xf32>, vector<32x512xf32>, vector<16x512xf32> -> vector<16x512xf32>
    %c0_93 = arith.constant 0 : index
    %c0_94 = arith.constant 0 : index
    %c1536_95 = arith.constant 1536 : index
    %177 = vector.load %arg8[%c0_93, %c0_94, %c1536_95] : memref<1x1x2048xf32, #tpu.memory_space<vmem>>, vector<1x1x512xf32>
    %178 = vector.shape_cast %177 : vector<1x1x512xf32> to vector<1x512xf32>
    %179 = vector.broadcast %178 : vector<1x512xf32> to vector<16x512xf32>
    %180 = arith.addf %176, %179 : vector<16x512xf32>
    %cst_96 = arith.constant 0.000000e+00 : f32
    %181 = vector.broadcast %cst_96 : f32 to vector<16x512xf32>
    %182 = arith.maximumf %180, %181 : vector<16x512xf32>
    %c0_97 = arith.constant 0 : index
    %c1536_98 = arith.constant 1536 : index
    %c0_99 = arith.constant 0 : index
    %183 = vector.load %arg9[%c0_97, %c1536_98, %c0_99] : memref<1x2048x32xf32, #tpu.memory_space<vmem>>, vector<1x512x32xf32>
    %184 = vector.shape_cast %183 : vector<1x512x32xf32> to vector<512x32xf32>
    %cst_100 = arith.constant dense<0.000000e+00> : vector<16x32xf32>
    %185 = tpu.matmul %182, %184, %cst_100 {dimension_numbers = #tpu.dot_dimension_numbers<[1], [0], [0], [1], [0, 0, 1, 1], [], []>} : vector<16x512xf32>, vector<512x32xf32>, vector<16x32xf32> -> vector<16x32xf32>
    %186 = arith.addf %173, %185 : vector<16x32xf32>
    %c0_101 = arith.constant 0 : index
    %c0_102 = arith.constant 0 : index
    %c0_103 = arith.constant 0 : index
    %187 = vector.load %arg10[%c0_101, %c0_102, %c0_103] : memref<1x1x32xf32, #tpu.memory_space<vmem>>, vector<1x1x32xf32>
    %188 = vector.shape_cast %187 : vector<1x1x32xf32> to vector<1x32xf32>
    %189 = vector.broadcast %188 : vector<1x32xf32> to vector<16x32xf32>
    %190 = arith.addf %186, %189 : vector<16x32xf32>
    %191 = arith.addf %133, %190 : vector<16x32xf32>
    %c0_104 = arith.constant 0 : index
    %c0_105 = arith.constant 0 : index
    %c0_106 = arith.constant 0 : index
    %192 = vector.load %arg13[%c0_104, %c0_105, %c0_106] : memref<1x1x32xf32, #tpu.memory_space<vmem>>, vector<1x1x32xf32>
    %193 = vector.shape_cast %192 : vector<1x1x32xf32> to vector<1x32xf32>
    %c0_107 = arith.constant 0 : index
    %c0_108 = arith.constant 0 : index
    %c0_109 = arith.constant 0 : index
    %194 = vector.load %arg14[%c0_107, %c0_108, %c0_109] : memref<1x1x32xf32, #tpu.memory_space<vmem>>, vector<1x1x32xf32>
    %195 = vector.shape_cast %194 : vector<1x1x32xf32> to vector<1x32xf32>
    %cst_110 = arith.constant dense<0.000000e+00> : vector<16xf32>
    %196 = vector.multi_reduction <add>, %191, %cst_110 [1] : vector<16x32xf32> to vector<16xf32>
    %197 = vector.shape_cast %196 : vector<16xf32> to vector<16x1xf32>
    %cst_111 = arith.constant 3.200000e+01 : f32
    %198 = vector.broadcast %cst_111 : f32 to vector<16x1xf32>
    %199 = arith.divf %197, %198 : vector<16x1xf32>
    %200 = vector.broadcast %199 : vector<16x1xf32> to vector<16x32xf32>
    %201 = arith.subf %191, %200 : vector<16x32xf32>
    %202 = arith.mulf %201, %201 : vector<16x32xf32>
    %cst_112 = arith.constant dense<0.000000e+00> : vector<16xf32>
    %203 = vector.multi_reduction <add>, %202, %cst_112 [1] : vector<16x32xf32> to vector<16xf32>
    %204 = vector.shape_cast %203 : vector<16xf32> to vector<16x1xf32>
    %cst_113 = arith.constant 3.200000e+01 : f32
    %205 = vector.broadcast %cst_113 : f32 to vector<16x1xf32>
    %206 = arith.divf %204, %205 : vector<16x1xf32>
    %207 = vector.broadcast %199 : vector<16x1xf32> to vector<16x32xf32>
    %208 = arith.subf %191, %207 : vector<16x32xf32>
    %cst_114 = arith.constant 9.99999974E-6 : f32
    %209 = vector.broadcast %cst_114 : f32 to vector<16x1xf32>
    %210 = arith.addf %206, %209 : vector<16x1xf32>
    %211 = math.rsqrt %210 : vector<16x1xf32>
    %212 = vector.broadcast %211 : vector<16x1xf32> to vector<16x32xf32>
    %213 = arith.mulf %208, %212 : vector<16x32xf32>
    %214 = vector.broadcast %193 : vector<1x32xf32> to vector<16x32xf32>
    %215 = arith.mulf %213, %214 : vector<16x32xf32>
    %216 = vector.broadcast %195 : vector<1x32xf32> to vector<16x32xf32>
    %217 = arith.addf %215, %216 : vector<16x32xf32>
    %c0_115 = arith.constant 0 : index
    %c0_116 = arith.constant 0 : index
    %218 = vector.load %arg15[%c0_115, %c0_116] : memref<16x32xf32, #tpu.memory_space<vmem>>, vector<16x32xf32>
    tpu.vector_store %arg15[%c0_115, %c0_116], %217 {strides = array<i32>} : memref<16x32xf32, #tpu.memory_space<vmem>>, vector<16x32xf32>,
    return
  }
  func.func @transform_0(%arg0: i32, %arg1: i32) -> (i32, i32) {
    %c0_i32 = arith.constant 0 : i32
    %c0_i32_0 = arith.constant 0 : i32
    return %arg0, %c0_i32 : i32, i32
  }
  func.func @transform_1(%arg0: i32, %arg1: i32) -> (i32, i32, i32) {
    %c0_i32 = arith.constant 0 : i32
    %c0_i32_0 = arith.constant 0 : i32
    %c0_i32_1 = arith.constant 0 : i32
    return %arg1, %c0_i32, %c0_i32_0 : i32, i32, i32
  }
  func.func @transform_2(%arg0: i32, %arg1: i32) -> (i32, i32, i32) {
    %c0_i32 = arith.constant 0 : i32
    %c0_i32_0 = arith.constant 0 : i32
    %c0_i32_1 = arith.constant 0 : i32
    return %arg1, %c0_i32, %c0_i32_0 : i32, i32, i32
  }
  func.func @transform_3(%arg0: i32, %arg1: i32) -> (i32, i32, i32, i32) {
    %c0_i32 = arith.constant 0 : i32
    %c0_i32_0 = arith.constant 0 : i32
    %c0_i32_1 = arith.constant 0 : i32
    %c0_i32_2 = arith.constant 0 : i32
    return %arg1, %c0_i32, %c0_i32_0, %c0_i32_1 : i32, i32, i32, i32
  }
  func.func @transform_4(%arg0: i32, %arg1: i32) -> (i32, i32, i32) {
    %c0_i32 = arith.constant 0 : i32
    %c0_i32_0 = arith.constant 0 : i32
    %c0_i32_1 = arith.constant 0 : i32
    return %arg1, %c0_i32, %c0_i32_0 : i32, i32, i32
  }
  func.func @transform_5(%arg0: i32, %arg1: i32) -> (i32, i32, i32) {
    %c0_i32 = arith.constant 0 : i32
    %c0_i32_0 = arith.constant 0 : i32
    %c0_i32_1 = arith.constant 0 : i32
    return %arg1, %c0_i32, %c0_i32_0 : i32, i32, i32
  }
  func.func @transform_6(%arg0: i32, %arg1: i32) -> (i32, i32, i32) {
    %c0_i32 = arith.constant 0 : i32
    %c0_i32_0 = arith.constant 0 : i32
    %c0_i32_1 = arith.constant 0 : i32
    return %arg1, %c0_i32, %c0_i32_0 : i32, i32, i32
  }
  func.func @transform_7(%arg0: i32, %arg1: i32) -> (i32, i32, i32) {
    %c0_i32 = arith.constant 0 : i32
    %c0_i32_0 = arith.constant 0 : i32
    %c0_i32_1 = arith.constant 0 : i32
    return %arg1, %c0_i32, %c0_i32_0 : i32, i32, i32
  }
  func.func @transform_8(%arg0: i32, %arg1: i32) -> (i32, i32, i32) {
    %c0_i32 = arith.constant 0 : i32
    %c0_i32_0 = arith.constant 0 : i32
    %c0_i32_1 = arith.constant 0 : i32
    return %arg1, %c0_i32, %c0_i32_0 : i32, i32, i32
  }
  func.func @transform_9(%arg0: i32, %arg1: i32) -> (i32, i32, i32) {
    %c0_i32 = arith.constant 0 : i32
    %c0_i32_0 = arith.constant 0 : i32
    %c0_i32_1 = arith.constant 0 : i32
    return %arg1, %c0_i32, %c0_i32_0 : i32, i32, i32
  }
  func.func @transform_10(%arg0: i32, %arg1: i32) -> (i32, i32, i32) {
    %c0_i32 = arith.constant 0 : i32
    %c0_i32_0 = arith.constant 0 : i32
    %c0_i32_1 = arith.constant 0 : i32
    return %arg1, %c0_i32, %c0_i32_0 : i32, i32, i32
  }
  func.func @transform_11(%arg0: i32, %arg1: i32) -> (i32, i32, i32) {
    %c0_i32 = arith.constant 0 : i32
    %c0_i32_0 = arith.constant 0 : i32
    %c0_i32_1 = arith.constant 0 : i32
    return %arg1, %c0_i32, %c0_i32_0 : i32, i32, i32
  }
  func.func @transform_12(%arg0: i32, %arg1: i32) -> (i32, i32, i32) {
    %c0_i32 = arith.constant 0 : i32
    %c0_i32_0 = arith.constant 0 : i32
    %c0_i32_1 = arith.constant 0 : i32
    return %arg1, %c0_i32, %c0_i32_0 : i32, i32, i32
  }
  func.func @transform_13(%arg0: i32, %arg1: i32) -> (i32, i32) {
    %c0_i32 = arith.constant 0 : i32
    %c0_i32_0 = arith.constant 0 : i32
    return %arg0, %c0_i32 : i32, i32
  }
}

</mosaic_0001>

<llo_original>
// kernel: tpu_custom_call.1
$region0: #{tpu_custom_call.1}
  #allocation0 [shape = 'u32[]', space=smem, size = 0x4, offset = 0x4, fixed_abs, tag = 'smem constant byte address 0x4 - core index']
  #allocation1 [shape = 'u32[144,128]{1,0:T(1,128)}', space=vmem, size = 0x12000, scoped, tag = 'internal scratch']
  %s0 = inlined_call_operand.vmem [shape: f32[16,32], index: 0, kind: input, shape index: {}]
  %s1 = inlined_call_operand.vmem [shape: f32[2,32,96], index: 1, kind: input, shape index: {}]
  %s2 = inlined_call_operand.vmem [shape: f32[2,1,96], index: 2, kind: input, shape index: {}]
  %s3 = inlined_call_operand.vmem [shape: f32[2,4,8,32], index: 3, kind: input, shape index: {}]
  %s4 = inlined_call_operand.vmem [shape: f32[2,1,32], index: 4, kind: input, shape index: {}]
  %s5 = inlined_call_operand.vmem [shape: f32[2,32,2048], index: 5, kind: input, shape index: {}]
  %s6 = inlined_call_operand.vmem [shape: f32[2,1,2048], index: 6, kind: input, shape index: {}]
  %s7 = inlined_call_operand.vmem [shape: f32[2,2048,32], index: 7, kind: input, shape index: {}]
  %s8 = inlined_call_operand.vmem [shape: f32[2,1,32], index: 8, kind: input, shape index: {}]
  %s9 = inlined_call_operand.vmem [shape: f32[2,1,32], index: 9, kind: input, shape index: {}]
  %s10 = inlined_call_operand.vmem [shape: f32[2,1,32], index: 10, kind: input, shape index: {}]
  %s11 = inlined_call_operand.vmem [shape: f32[2,1,32], index: 11, kind: input, shape index: {}]
  %s12 = inlined_call_operand.vmem [shape: f32[2,1,32], index: 12, kind: input, shape index: {}]
  %s13 = inlined_call_operand.hbm [shape: f32[16,32], index: 13, kind: output, shape index: {}]
  %s14 = sld [smem:[#allocation0]]
  $region89: #{tpu_custom_call.1} parent=0
    _
  %s16 = ssub.s32 1, %s14
  %s17 = scalar_select 0, %s16, %s14
  $region1: #{tpu_custom_call.1} parent=0
    #allocation2 [shape = 'u8[8192]{0}', space=vmem, size = 0x2000, scoped, tag = 'output window, operand 0, single buffered']
    #allocation3 [shape = 's32[2]{0}', space=sflag, size = 0x8, scoped, tag = 'scoped memory for tpu_custom_call.1']
    %18 = vsyncpa [#allocation3], 0
    loop: start=0, step=1, limit=4
    $region2: #{tpu_custom_call.1} parent=1 // loop_pre_header
      _
    $region3: #{tpu_custom_call.1} parent=1 // loop_header
      %s20 = sphi 0, %s24
      %p21 = scmp.ge.s32.totalorder %s20, 4
      %s27 = sphi 0, %s39
      %s28 = sphi 0, %s35
      %s29 = sphi 0, %s27
      %s30 = sphi 0, %s28
      %s31 = sphi 0, %s29
      %s32 = sphi 0, %s30
      %s42 = sphi 0, %s44
      %s45 = sphi 0, %s42
      %s46 = sphi 0, %s45
      %s62 = sphi 0, %s46
      %s68 = sphi 0, %s70
      %s71 = sphi 0, %s68
      %s72 = sphi 0, %s71
      %s88 = sphi 0, %s72
      %s94 = sphi 0, %s96
      %s97 = sphi 0, %s94
      %s98 = sphi 0, %s97
      %s114 = sphi 0, %s98
      %s120 = sphi 0, %s122
      %s123 = sphi 0, %s120
      %s124 = sphi 0, %s123
      %s140 = sphi 0, %s124
      %s146 = sphi 0, %s148
      %s149 = sphi 0, %s146
      %s150 = sphi 0, %s149
      %s166 = sphi 0, %s150
      %s172 = sphi 0, %s174
      %s175 = sphi 0, %s172
      %s176 = sphi 0, %s175
      %s192 = sphi 0, %s176
      %s198 = sphi 0, %s200
      %s201 = sphi 0, %s198
      %s202 = sphi 0, %s201
      %s218 = sphi 0, %s202
      %s224 = sphi 0, %s226
      %s227 = sphi 0, %s224
      %s228 = sphi 0, %s227
      %s244 = sphi 0, %s228
      %s250 = sphi 0, %s252
      %s253 = sphi 0, %s250
      %s254 = sphi 0, %s253
      %s270 = sphi 0, %s254
      %s276 = sphi 0, %s278
      %s279 = sphi 0, %s276
      %s280 = sphi 0, %s279
      %s296 = sphi 0, %s280
      %s302 = sphi 0, %s304
      %s305 = sphi 0, %s302
      %s306 = sphi 0, %s305
      %s322 = sphi 0, %s306
      %s328 = sphi 0, %s330
      %s331 = sphi 0, %s328
      %s332 = sphi 0, %s331
      %s348 = sphi 0, %s332
      %s354 = sphi 0, %s356
      %s357 = sphi 0, %s354
      %s358 = sphi 0, %s357
      %s374 = sphi 0, %s358
      %s380 = sphi 0, %s382
      %s383 = sphi 0, %s380
      %s384 = sphi 0, %s383
      %s400 = sphi 0, %s384
    $region4: #{tpu_custom_call.1} parent=1 // loop_header_branch
      %23 = sbr.rel (%p21) target = $region8
    $region5: #{tpu_custom_call.1} parent=1 // loop_body
      %s25 = ssub.s32 %s20, 1
      %s26 = ssub.s32 %s20, 2
      %s33 = sadd.s32 1, %s28
      %p34 = scmp.ge.s32.totalorder %s33, 2
      %s35 = scalar_select %p34, 0, %s33
      %s36 = sadd.s32 1, %s27
      %s37 = scalar_select %p34, %s36, %s27
      %p38 = scmp.ge.s32.totalorder %s37, 1
      %s39 = scalar_select %p38, 0, %s37
      %s40 = ssub.s32 %s27, %s39
      %p41 = scmp.eq.s32.totalorder %s40, 0
      %s43 = sadd.s32 %s42, 1
      %s44 = scalar_select %p41, %s42, %s43
      %p47 = pneg %p41
      %p48 = scmp.eq.s32.totalorder %s20, 1
      %p49 = por %p47, %p48
      %p50 = scmp.ne.s32.totalorder %s42, %s45
      %p51 = scmp.eq.s32.totalorder %s20, 0
      %p52 = por %p50, %p51
      %p53 = scmp.ne.s32.totalorder %s42, %s45
      %p54 = scmp.eq.s32.totalorder %s25, 1
      %p55 = por %p53, %p54
      %p56 = scmp.ne.s32.totalorder %s45, %s46
      %p57 = scmp.eq.s32.totalorder %s25, 0
      %p58 = por %p56, %p57
      %p59 = scmp.ne.s32.totalorder %s45, %s46
      %p60 = scmp.eq.s32.totalorder %s26, 1
      %p61 = por %p59, %p60
      %p63 = scmp.ne.s32.totalorder %s46, %s62
      %p64 = scmp.eq.s32.totalorder %s26, 0
      %p65 = por %p63, %p64
      %s66 = ssub.s32 %s28, %s35
      %p67 = scmp.eq.s32.totalorder %s66, 0
      %s69 = sadd.s32 %s68, 1
      %s70 = scalar_select %p67, %s68, %s69
      %p73 = pneg %p67
      %p74 = scmp.eq.s32.totalorder %s20, 1
      %p75 = por %p73, %p74
      %p76 = scmp.ne.s32.totalorder %s68, %s71
      %p77 = scmp.eq.s32.totalorder %s20, 0
      %p78 = por %p76, %p77
      %p79 = scmp.ne.s32.totalorder %s68, %s71
      %p80 = scmp.eq.s32.totalorder %s25, 1
      %p81 = por %p79, %p80
      %p82 = scmp.ne.s32.totalorder %s71, %s72
      %p83 = scmp.eq.s32.totalorder %s25, 0
      %p84 = por %p82, %p83
      %p85 = scmp.ne.s32.totalorder %s71, %s72
      %p86 = scmp.eq.s32.totalorder %s26, 1
      %p87 = por %p85, %p86
      %p89 = scmp.ne.s32.totalorder %s72, %s88
      %p90 = scmp.eq.s32.totalorder %s26, 0
      %p91 = por %p89, %p90
      %s92 = ssub.s32 %s28, %s35
      %p93 = scmp.eq.s32.totalorder %s92, 0
      %s95 = sadd.s32 %s94, 1
      %s96 = scalar_select %p93, %s94, %s95
      %p99 = pneg %p93
      %p100 = scmp.eq.s32.totalorder %s20, 1
      %p101 = por %p99, %p100
      %p102 = scmp.ne.s32.totalorder %s94, %s97
      %p103 = scmp.eq.s32.totalorder %s20, 0
      %p104 = por %p102, %p103
      %p105 = scmp.ne.s32.totalorder %s94, %s97
      %p106 = scmp.eq.s32.totalorder %s25, 1
      %p107 = por %p105, %p106
      %p108 = scmp.ne.s32.totalorder %s97, %s98
      %p109 = scmp.eq.s32.totalorder %s25, 0
      %p110 = por %p108, %p109
      %p111 = scmp.ne.s32.totalorder %s97, %s98
      %p112 = scmp.eq.s32.totalorder %s26, 1
      %p113 = por %p111, %p112
      %p115 = scmp.ne.s32.totalorder %s98, %s114
      %p116 = scmp.eq.s32.totalorder %s26, 0
      %p117 = por %p115, %p116
      %s118 = ssub.s32 %s28, %s35
      %p119 = scmp.eq.s32.totalorder %s118, 0
      %s121 = sadd.s32 %s120, 1
      %s122 = scalar_select %p119, %s120, %s121
      %p125 = pneg %p119
      %p126 = scmp.eq.s32.totalorder %s20, 1
      %p127 = por %p125, %p126
      %p128 = scmp.ne.s32.totalorder %s120, %s123
      %p129 = scmp.eq.s32.totalorder %s20, 0
      %p130 = por %p128, %p129
      %p131 = scmp.ne.s32.totalorder %s120, %s123
      %p132 = scmp.eq.s32.totalorder %s25, 1
      %p133 = por %p131, %p132
      %p134 = scmp.ne.s32.totalorder %s123, %s124
      %p135 = scmp.eq.s32.totalorder %s25, 0
      %p136 = por %p134, %p135
      %p137 = scmp.ne.s32.totalorder %s123, %s124
      %p138 = scmp.eq.s32.totalorder %s26, 1
      %p139 = por %p137, %p138
      %p141 = scmp.ne.s32.totalorder %s124, %s140
      %p142 = scmp.eq.s32.totalorder %s26, 0
      %p143 = por %p141, %p142
      %s144 = ssub.s32 %s28, %s35
      %p145 = scmp.eq.s32.totalorder %s144, 0
      %s147 = sadd.s32 %s146, 1
      %s148 = scalar_select %p145, %s146, %s147
      %p151 = pneg %p145
      %p152 = scmp.eq.s32.totalorder %s20, 1
      %p153 = por %p151, %p152
      %p154 = scmp.ne.s32.totalorder %s146, %s149
      %p155 = scmp.eq.s32.totalorder %s20, 0
      %p156 = por %p154, %p155
      %p157 = scmp.ne.s32.totalorder %s146, %s149
      %p158 = scmp.eq.s32.totalorder %s25, 1
      %p159 = por %p157, %p158
      %p160 = scmp.ne.s32.totalorder %s149, %s150
      %p161 = scmp.eq.s32.totalorder %s25, 0
      %p162 = por %p160, %p161
      %p163 = scmp.ne.s32.totalorder %s149, %s150
      %p164 = scmp.eq.s32.totalorder %s26, 1
      %p165 = por %p163, %p164
      %p167 = scmp.ne.s32.totalorder %s150, %s166
      %p168 = scmp.eq.s32.totalorder %s26, 0
      %p169 = por %p167, %p168
      %s170 = ssub.s32 %s28, %s35
      %p171 = scmp.eq.s32.totalorder %s170, 0
      %s173 = sadd.s32 %s172, 1
      %s174 = scalar_select %p171, %s172, %s173
      %p177 = pneg %p171
      %p178 = scmp.eq.s32.totalorder %s20, 1
      %p179 = por %p177, %p178
      %p180 = scmp.ne.s32.totalorder %s172, %s175
      %p181 = scmp.eq.s32.totalorder %s20, 0
      %p182 = por %p180, %p181
      %p183 = scmp.ne.s32.totalorder %s172, %s175
      %p184 = scmp.eq.s32.totalorder %s25, 1
      %p185 = por %p183, %p184
      %p186 = scmp.ne.s32.totalorder %s175, %s176
      %p187 = scmp.eq.s32.totalorder %s25, 0
      %p188 = por %p186, %p187
      %p189 = scmp.ne.s32.totalorder %s175, %s176
      %p190 = scmp.eq.s32.totalorder %s26, 1
      %p191 = por %p189, %p190
      %p193 = scmp.ne.s32.totalorder %s176, %s192
      %p194 = scmp.eq.s32.totalorder %s26, 0
      %p195 = por %p193, %p194
      %s196 = ssub.s32 %s28, %s35
      %p197 = scmp.eq.s32.totalorder %s196, 0
      %s199 = sadd.s32 %s198, 1
      %s200 = scalar_select %p197, %s198, %s199
      %p203 = pneg %p197
      %p204 = scmp.eq.s32.totalorder %s20, 1
      %p205 = por %p203, %p204
      %p206 = scmp.ne.s32.totalorder %s198, %s201
      %p207 = scmp.eq.s32.totalorder %s20, 0
      %p208 = por %p206, %p207
      %p209 = scmp.ne.s32.totalorder %s198, %s201
      %p210 = scmp.eq.s32.totalorder %s25, 1
      %p211 = por %p209, %p210
      %p212 = scmp.ne.s32.totalorder %s201, %s202
      %p213 = scmp.eq.s32.totalorder %s25, 0
      %p214 = por %p212, %p213
      %p215 = scmp.ne.s32.totalorder %s201, %s202
      %p216 = scmp.eq.s32.totalorder %s26, 1
      %p217 = por %p215, %p216
      %p219 = scmp.ne.s32.totalorder %s202, %s218
      %p220 = scmp.eq.s32.totalorder %s26, 0
      %p221 = por %p219, %p220
      %s222 = ssub.s32 %s28, %s35
      %p223 = scmp.eq.s32.totalorder %s222, 0
      %s225 = sadd.s32 %s224, 1
      %s226 = scalar_select %p223, %s224, %s225
      %p229 = pneg %p223
      %p230 = scmp.eq.s32.totalorder %s20, 1
      %p231 = por %p229, %p230
      %p232 = scmp.ne.s32.totalorder %s224, %s227
      %p233 = scmp.eq.s32.totalorder %s20, 0
      %p234 = por %p232, %p233
      %p235 = scmp.ne.s32.totalorder %s224, %s227
      %p236 = scmp.eq.s32.totalorder %s25, 1
      %p237 = por %p235, %p236
      %p238 = scmp.ne.s32.totalorder %s227, %s228
      %p239 = scmp.eq.s32.totalorder %s25, 0
      %p240 = por %p238, %p239
      %p241 = scmp.ne.s32.totalorder %s227, %s228
      %p242 = scmp.eq.s32.totalorder %s26, 1
      %p243 = por %p241, %p242
      %p245 = scmp.ne.s32.totalorder %s228, %s244
      %p246 = scmp.eq.s32.totalorder %s26, 0
      %p247 = por %p245, %p246
      %s248 = ssub.s32 %s28, %s35
      %p249 = scmp.eq.s32.totalorder %s248, 0
      %s251 = sadd.s32 %s250, 1
      %s252 = scalar_select %p249, %s250, %s251
      %p255 = pneg %p249
      %p256 = scmp.eq.s32.totalorder %s20, 1
      %p257 = por %p255, %p256
      %p258 = scmp.ne.s32.totalorder %s250, %s253
      %p259 = scmp.eq.s32.totalorder %s20, 0
      %p260 = por %p258, %p259
      %p261 = scmp.ne.s32.totalorder %s250, %s253
      %p262 = scmp.eq.s32.totalorder %s25, 1
      %p263 = por %p261, %p262
      %p264 = scmp.ne.s32.totalorder %s253, %s254
      %p265 = scmp.eq.s32.totalorder %s25, 0
      %p266 = por %p264, %p265
      %p267 = scmp.ne.s32.totalorder %s253, %s254
      %p268 = scmp.eq.s32.totalorder %s26, 1
      %p269 = por %p267, %p268
      %p271 = scmp.ne.s32.totalorder %s254, %s270
      %p272 = scmp.eq.s32.totalorder %s26, 0
      %p273 = por %p271, %p272
      %s274 = ssub.s32 %s28, %s35
      %p275 = scmp.eq.s32.totalorder %s274, 0
      %s277 = sadd.s32 %s276, 1
      %s278 = scalar_select %p275, %s276, %s277
      %p281 = pneg %p275
      %p282 = scmp.eq.s32.totalorder %s20, 1
      %p283 = por %p281, %p282
      %p284 = scmp.ne.s32.totalorder %s276, %s279
      %p285 = scmp.eq.s32.totalorder %s20, 0
      %p286 = por %p284, %p285
      %p287 = scmp.ne.s32.totalorder %s276, %s279
      %p288 = scmp.eq.s32.totalorder %s25, 1
      %p289 = por %p287, %p288
      %p290 = scmp.ne.s32.totalorder %s279, %s280
      %p291 = scmp.eq.s32.totalorder %s25, 0
      %p292 = por %p290, %p291
      %p293 = scmp.ne.s32.totalorder %s279, %s280
      %p294 = scmp.eq.s32.totalorder %s26, 1
      %p295 = por %p293, %p294
      %p297 = scmp.ne.s32.totalorder %s280, %s296
      %p298 = scmp.eq.s32.totalorder %s26, 0
      %p299 = por %p297, %p298
      %s300 = ssub.s32 %s28, %s35
      %p301 = scmp.eq.s32.totalorder %s300, 0
      %s303 = sadd.s32 %s302, 1
      %s304 = scalar_select %p301, %s302, %s303
      %p307 = pneg %p301
      %p308 = scmp.eq.s32.totalorder %s20, 1
      %p309 = por %p307, %p308
      %p310 = scmp.ne.s32.totalorder %s302, %s305
      %p311 = scmp.eq.s32.totalorder %s20, 0
      %p312 = por %p310, %p311
      %p313 = scmp.ne.s32.totalorder %s302, %s305
      %p314 = scmp.eq.s32.totalorder %s25, 1
      %p315 = por %p313, %p314
      %p316 = scmp.ne.s32.totalorder %s305, %s306
      %p317 = scmp.eq.s32.totalorder %s25, 0
      %p318 = por %p316, %p317
      %p319 = scmp.ne.s32.totalorder %s305, %s306
      %p320 = scmp.eq.s32.totalorder %s26, 1
      %p321 = por %p319, %p320
      %p323 = scmp.ne.s32.totalorder %s306, %s322
      %p324 = scmp.eq.s32.totalorder %s26, 0
      %p325 = por %p323, %p324
      %s326 = ssub.s32 %s28, %s35
      %p327 = scmp.eq.s32.totalorder %s326, 0
      %s329 = sadd.s32 %s328, 1
      %s330 = scalar_select %p327, %s328, %s329
      %p333 = pneg %p327
      %p334 = scmp.eq.s32.totalorder %s20, 1
      %p335 = por %p333, %p334
      %p336 = scmp.ne.s32.totalorder %s328, %s331
      %p337 = scmp.eq.s32.totalorder %s20, 0
      %p338 = por %p336, %p337
      %p339 = scmp.ne.s32.totalorder %s328, %s331
      %p340 = scmp.eq.s32.totalorder %s25, 1
      %p341 = por %p339, %p340
      %p342 = scmp.ne.s32.totalorder %s331, %s332
      %p343 = scmp.eq.s32.totalorder %s25, 0
      %p344 = por %p342, %p343
      %p345 = scmp.ne.s32.totalorder %s331, %s332
      %p346 = scmp.eq.s32.totalorder %s26, 1
      %p347 = por %p345, %p346
      %p349 = scmp.ne.s32.totalorder %s332, %s348
      %p350 = scmp.eq.s32.totalorder %s26, 0
      %p351 = por %p349, %p350
      %s352 = ssub.s32 %s28, %s35
      %p353 = scmp.eq.s32.totalorder %s352, 0
      %s355 = sadd.s32 %s354, 1
      %s356 = scalar_select %p353, %s354, %s355
      %p359 = pneg %p353
      %p360 = scmp.eq.s32.totalorder %s20, 1
      %p361 = por %p359, %p360
      %p362 = scmp.ne.s32.totalorder %s354, %s357
      %p363 = scmp.eq.s32.totalorder %s20, 0
      %p364 = por %p362, %p363
      %p365 = scmp.ne.s32.totalorder %s354, %s357
      %p366 = scmp.eq.s32.totalorder %s25, 1
      %p367 = por %p365, %p366
      %p368 = scmp.ne.s32.totalorder %s357, %s358
      %p369 = scmp.eq.s32.totalorder %s25, 0
      %p370 = por %p368, %p369
      %p371 = scmp.ne.s32.totalorder %s357, %s358
      %p372 = scmp.eq.s32.totalorder %s26, 1
      %p373 = por %p371, %p372
      %p375 = scmp.ne.s32.totalorder %s358, %s374
      %p376 = scmp.eq.s32.totalorder %s26, 0
      %p377 = por %p375, %p376
      %s378 = ssub.s32 %s27, %s39
      %p379 = scmp.eq.s32.totalorder %s378, 0
      %s381 = sadd.s32 %s380, 1
      %s382 = scalar_select %p379, %s380, %s381
      %p385 = pneg %p379
      %p386 = scmp.eq.s32.totalorder %s20, 1
      %p387 = por %p385, %p386
      %p388 = scmp.ne.s32.totalorder %s380, %s383
      %p389 = scmp.eq.s32.totalorder %s20, 0
      %p390 = por %p388, %p389
      %p391 = scmp.ne.s32.totalorder %s380, %s383
      %p392 = scmp.eq.s32.totalorder %s25, 1
      %p393 = por %p391, %p392
      %p394 = scmp.ne.s32.totalorder %s383, %s384
      %p395 = scmp.eq.s32.totalorder %s25, 0
      %p396 = por %p394, %p395
      %p397 = scmp.ne.s32.totalorder %s383, %s384
      %p398 = scmp.eq.s32.totalorder %s26, 1
      %p399 = por %p397, %p398
      %p401 = scmp.ne.s32.totalorder %s384, %s400
      %p402 = scmp.eq.s32.totalorder %s26, 0
      %p403 = por %p401, %p402
      %p404 = scmp.le.s32.totalorder 1, %s20
      %p405 = scmp.lt.s32.totalorder %s20, 3
      %p406 = pnand %p404, %p405
      %p407 = pneg %p406
      // Predicated region
      $region9: #{tpu_custom_call.1} parent=5 // pred_check
        _
      $region10: #{tpu_custom_call.1} parent=5 // pred_check_branch
        %409 = sbr.rel (%p406) target = $region12
      $region11: #{tpu_custom_call.1} parent=5 // pred_region
        %s410 = ssub.s32 %s20, 1
        // Predicated region
        $region13: #{tpu_custom_call.1} parent=11 // pred_check
          %p411 = pneg %p58
        $region14: #{tpu_custom_call.1} parent=11 // pred_check_branch
          %413 = sbr.rel (%p411) target = $region16
        $region15: #{tpu_custom_call.1} parent=11 // pred_region
          %s414 = smul.u32 2, %s29
          %p415 = scmp.lt.s32.totalorder %s414, 1
          %s416 = scalar_select %p415, %s414, 1
          %s417 = smul.addr %s416, 8
          %s418 = scalar_lea.vmem %s0, %s417
          %s419 = smul.u32 2, %s29
        $region16: #{tpu_custom_call.1} parent=11 // pred_fallthru
          _
      $region12: #{tpu_custom_call.1} parent=5 // pred_fallthru
        _
      %p420 = scmp.lt.s32.totalorder %s20, 2
      // Predicated region
      $region17: #{tpu_custom_call.1} parent=5 // pred_check
        %p421 = pneg %p420
      $region18: #{tpu_custom_call.1} parent=5 // pred_check_branch
        %423 = sbr.rel (%p421) target = $region20
      $region19: #{tpu_custom_call.1} parent=5 // pred_region
        // Predicated region
        $region21: #{tpu_custom_call.1} parent=19 // pred_check
          %p424 = pneg %p78
        $region22: #{tpu_custom_call.1} parent=19 // pred_check_branch
          %426 = sbr.rel (%p424) target = $region24
        $region23: #{tpu_custom_call.1} parent=19 // pred_region
          %p427 = scmp.lt.s32.totalorder %s28, 1
          %s428 = scalar_select %p427, %s28, 1
          %s429 = smul.addr %s428, 4
          %s430 = smul.addr %s429, 8
          %s431 = scalar_lea.vmem %s1, %s430
        $region24: #{tpu_custom_call.1} parent=19 // pred_fallthru
          _
        // Predicated region
        $region25: #{tpu_custom_call.1} parent=19 // pred_check
          %p432 = pneg %p104
        $region26: #{tpu_custom_call.1} parent=19 // pred_check_branch
          %434 = sbr.rel (%p432) target = $region28
        $region27: #{tpu_custom_call.1} parent=19 // pred_region
          %p435 = scmp.lt.s32.totalorder %s28, 1
          %s436 = scalar_select %p435, %s28, 1
          %s437 = scalar_lea.vmem %s2, %s436
        $region28: #{tpu_custom_call.1} parent=19 // pred_fallthru
          _
        // Predicated region
        $region29: #{tpu_custom_call.1} parent=19 // pred_check
          %p438 = pneg %p130
        $region30: #{tpu_custom_call.1} parent=19 // pred_check_branch
          %440 = sbr.rel (%p438) target = $region32
        $region31: #{tpu_custom_call.1} parent=19 // pred_region
          %p441 = scmp.lt.s32.totalorder %s28, 1
          %s442 = scalar_select %p441, %s28, 1
          %s443 = smul.addr %s442, 4
          %s444 = smul.addr %s443, 8
          %s445 = scalar_lea.vmem %s3, %s444
        $region32: #{tpu_custom_call.1} parent=19 // pred_fallthru
          _
        // Predicated region
        $region33: #{tpu_custom_call.1} parent=19 // pred_check
          %p446 = pneg %p156
        $region34: #{tpu_custom_call.1} parent=19 // pred_check_branch
          %448 = sbr.rel (%p446) target = $region36
        $region35: #{tpu_custom_call.1} parent=19 // pred_region
          %p449 = scmp.lt.s32.totalorder %s28, 1
          %s450 = scalar_select %p449, %s28, 1
          %s451 = scalar_lea.vmem %s4, %s450
        $region36: #{tpu_custom_call.1} parent=19 // pred_fallthru
          _
        // Predicated region
        $region37: #{tpu_custom_call.1} parent=19 // pred_check
          %p452 = pneg %p182
        $region38: #{tpu_custom_call.1} parent=19 // pred_check_branch
          %454 = sbr.rel (%p452) target = $region40
        $region39: #{tpu_custom_call.1} parent=19 // pred_region
          %p455 = scmp.lt.s32.totalorder %s28, 1
          %s456 = scalar_select %p455, %s28, 1
          %s457 = smul.addr %s456, 64
          %s458 = smul.addr %s457, 8
          %s459 = scalar_lea.vmem %s5, %s458
        $region40: #{tpu_custom_call.1} parent=19 // pred_fallthru
          _
        // Predicated region
        $region41: #{tpu_custom_call.1} parent=19 // pred_check
          %p460 = pneg %p208
        $region42: #{tpu_custom_call.1} parent=19 // pred_check_branch
          %462 = sbr.rel (%p460) target = $region44
        $region43: #{tpu_custom_call.1} parent=19 // pred_region
          %p463 = scmp.lt.s32.totalorder %s28, 1
          %s464 = scalar_select %p463, %s28, 1
          %s465 = smul.addr %s464, 16
          %s466 = scalar_lea.vmem %s6, %s465
        $region44: #{tpu_custom_call.1} parent=19 // pred_fallthru
          _
        // Predicated region
        $region45: #{tpu_custom_call.1} parent=19 // pred_check
          %p467 = pneg %p234
        $region46: #{tpu_custom_call.1} parent=19 // pred_check_branch
          %469 = sbr.rel (%p467) target = $region48
        $region47: #{tpu_custom_call.1} parent=19 // pred_region
          %p470 = scmp.lt.s32.totalorder %s28, 1
          %s471 = scalar_select %p470, %s28, 1
          %s472 = smul.addr %s471, 256
          %s473 = smul.addr %s472, 8
          %s474 = scalar_lea.vmem %s7, %s473
        $region48: #{tpu_custom_call.1} parent=19 // pred_fallthru
          _
        // Predicated region
        $region49: #{tpu_custom_call.1} parent=19 // pred_check
          %p475 = pneg %p260
        $region50: #{tpu_custom_call.1} parent=19 // pred_check_branch
          %477 = sbr.rel (%p475) target = $region52
        $region51: #{tpu_custom_call.1} parent=19 // pred_region
          %p478 = scmp.lt.s32.totalorder %s28, 1
          %s479 = scalar_select %p478, %s28, 1
          %s480 = scalar_lea.vmem %s8, %s479
        $region52: #{tpu_custom_call.1} parent=19 // pred_fallthru
          _
        // Predicated region
        $region53: #{tpu_custom_call.1} parent=19 // pred_check
          %p481 = pneg %p286
        $region54: #{tpu_custom_call.1} parent=19 // pred_check_branch
          %483 = sbr.rel (%p481) target = $region56
        $region55: #{tpu_custom_call.1} parent=19 // pred_region
          %p484 = scmp.lt.s32.totalorder %s28, 1
          %s485 = scalar_select %p484, %s28, 1
          %s486 = scalar_lea.vmem %s9, %s485
        $region56: #{tpu_custom_call.1} parent=19 // pred_fallthru
          _
        // Predicated region
        $region57: #{tpu_custom_call.1} parent=19 // pred_check
          %p487 = pneg %p312
        $region58: #{tpu_custom_call.1} parent=19 // pred_check_branch
          %489 = sbr.rel (%p487) target = $region60
        $region59: #{tpu_custom_call.1} parent=19 // pred_region
          %p490 = scmp.lt.s32.totalorder %s28, 1
          %s491 = scalar_select %p490, %s28, 1
          %s492 = scalar_lea.vmem %s10, %s491
        $region60: #{tpu_custom_call.1} parent=19 // pred_fallthru
          _
        // Predicated region
        $region61: #{tpu_custom_call.1} parent=19 // pred_check
          %p493 = pneg %p338
        $region62: #{tpu_custom_call.1} parent=19 // pred_check_branch
          %495 = sbr.rel (%p493) target = $region64
        $region63: #{tpu_custom_call.1} parent=19 // pred_region
          %p496 = scmp.lt.s32.totalorder %s28, 1
          %s497 = scalar_select %p496, %s28, 1
          %s498 = scalar_lea.vmem %s11, %s497
        $region64: #{tpu_custom_call.1} parent=19 // pred_fallthru
          _
        // Predicated region
        $region65: #{tpu_custom_call.1} parent=19 // pred_check
          %p499 = pneg %p364
        $region66: #{tpu_custom_call.1} parent=19 // pred_check_branch
          %501 = sbr.rel (%p499) target = $region68
        $region67: #{tpu_custom_call.1} parent=19 // pred_region
          %p502 = scmp.lt.s32.totalorder %s28, 1
          %s503 = scalar_select %p502, %s28, 1
          %s504 = scalar_lea.vmem %s12, %s503
        $region68: #{tpu_custom_call.1} parent=19 // pred_fallthru
          _
      $region20: #{tpu_custom_call.1} parent=5 // pred_fallthru
        _
      %p505 = scmp.le.s32.totalorder 1, %s20
      %p506 = scmp.lt.s32.totalorder %s20, 3
      %p507 = pnand %p505, %p506
      %p508 = pneg %p507
      // Predicated region
      $region69: #{tpu_custom_call.1} parent=5 // pred_check
        _
      $region70: #{tpu_custom_call.1} parent=5 // pred_check_branch
        %510 = sbr.rel (%p507) target = $region72
      $region71: #{tpu_custom_call.1} parent=5 // pred_region
        %s511 = ssub.s32 %s20, 1
        %s512 = smul.u32 2, %s29
        %p513 = scmp.lt.s32.totalorder %s512, 1
        %s514 = scalar_select %p513, %s512, 1
        %s515 = smul.addr %s514, 8
        %s516 = scalar_lea.vmem %s0, %s515
        %p517 = pneg %p58
        %p518 = pneg %p55
        %p519 = scmp.lt.s32.totalorder %s30, 1
        %s520 = scalar_select %p519, %s30, 1
        %s521 = smul.addr %s520, 4
        %s522 = smul.addr %s521, 8
        %s523 = scalar_lea.vmem %s1, %s522
        %p524 = pneg %p84
        %p525 = pneg %p81
        %p526 = scmp.lt.s32.totalorder %s30, 1
        %s527 = scalar_select %p526, %s30, 1
        %s528 = scalar_lea.vmem %s2, %s527
        %p529 = pneg %p110
        %p530 = pneg %p107
        %p531 = scmp.lt.s32.totalorder %s30, 1
        %s532 = scalar_select %p531, %s30, 1
        %s533 = smul.addr %s532, 4
        %s534 = smul.addr %s533, 8
        %s535 = scalar_lea.vmem %s3, %s534
        %p536 = pneg %p136
        %p537 = pneg %p133
        %p538 = scmp.lt.s32.totalorder %s30, 1
        %s539 = scalar_select %p538, %s30, 1
        %s540 = scalar_lea.vmem %s4, %s539
        %p541 = pneg %p162
        %p542 = pneg %p159
        %p543 = scmp.lt.s32.totalorder %s30, 1
        %s544 = scalar_select %p543, %s30, 1
        %s545 = smul.addr %s544, 64
        %s546 = smul.addr %s545, 8
        %s547 = scalar_lea.vmem %s5, %s546
        %p548 = pneg %p188
        %p549 = pneg %p185
        %p550 = scmp.lt.s32.totalorder %s30, 1
        %s551 = scalar_select %p550, %s30, 1
        %s552 = smul.addr %s551, 16
        %s553 = scalar_lea.vmem %s6, %s552
        %p554 = pneg %p214
        %p555 = pneg %p211
        %p556 = scmp.lt.s32.totalorder %s30, 1
        %s557 = scalar_select %p556, %s30, 1
        %s558 = smul.addr %s557, 256
        %s559 = smul.addr %s558, 8
        %s560 = scalar_lea.vmem %s7, %s559
        %p561 = pneg %p240
        %p562 = pneg %p237
        %p563 = scmp.lt.s32.totalorder %s30, 1
        %s564 = scalar_select %p563, %s30, 1
        %s565 = scalar_lea.vmem %s8, %s564
        %p566 = pneg %p266
        %p567 = pneg %p263
        %p568 = scmp.lt.s32.totalorder %s30, 1
        %s569 = scalar_select %p568, %s30, 1
        %s570 = scalar_lea.vmem %s9, %s569
        %p571 = pneg %p292
        %p572 = pneg %p289
        %p573 = scmp.lt.s32.totalorder %s30, 1
        %s574 = scalar_select %p573, %s30, 1
        %s575 = scalar_lea.vmem %s10, %s574
        %p576 = pneg %p318
        %p577 = pneg %p315
        %p578 = scmp.lt.s32.totalorder %s30, 1
        %s579 = scalar_select %p578, %s30, 1
        %s580 = scalar_lea.vmem %s11, %s579
        %p581 = pneg %p344
        %p582 = pneg %p341
        %p583 = scmp.lt.s32.totalorder %s30, 1
        %s584 = scalar_select %p583, %s30, 1
        %s585 = scalar_lea.vmem %s12, %s584
        %p586 = pneg %p370
        %p587 = pneg %p367
        %p588 = pneg %p396
        %p589 = pneg %p393
        %s590 = smul.u32 2, %s29
        %p591 = scmp.lt.s32.totalorder %s590, 1
        %s592 = scalar_select %p591, %s590, 1
        %s593 = smul.addr %s592, 8
        %s594 = scalar_lea.vmem %s0, %s593
        %s595 = smul.u32 2, %s29
        %p596 = scmp.lt.s32.totalorder %s30, 1
        %s597 = scalar_select %p596, %s30, 1
        %s598 = smul.addr %s597, 4
        %s599 = smul.addr %s598, 8
        %s600 = scalar_lea.vmem %s1, %s599
        %p601 = scmp.lt.s32.totalorder %s30, 1
        %s602 = scalar_select %p601, %s30, 1
        %s603 = scalar_lea.vmem %s2, %s602
        %p604 = scmp.lt.s32.totalorder %s30, 1
        %s605 = scalar_select %p604, %s30, 1
        %s606 = smul.addr %s605, 4
        %s607 = smul.addr %s606, 8
        %s608 = scalar_lea.vmem %s3, %s607
        %p609 = scmp.lt.s32.totalorder %s30, 1
        %s610 = scalar_select %p609, %s30, 1
        %s611 = scalar_lea.vmem %s4, %s610
        %p612 = scmp.lt.s32.totalorder %s30, 1
        %s613 = scalar_select %p612, %s30, 1
        %s614 = smul.addr %s613, 64
        %s615 = smul.addr %s614, 8
        %s616 = scalar_lea.vmem %s5, %s615
        %p617 = scmp.lt.s32.totalorder %s30, 1
        %s618 = scalar_select %p617, %s30, 1
        %s619 = smul.addr %s618, 16
        %s620 = scalar_lea.vmem %s6, %s619
        %p621 = scmp.lt.s32.totalorder %s30, 1
        %s622 = scalar_select %p621, %s30, 1
        %s623 = smul.addr %s622, 256
        %s624 = smul.addr %s623, 8
        %s625 = scalar_lea.vmem %s7, %s624
        %p626 = scmp.lt.s32.totalorder %s30, 1
        %s627 = scalar_select %p626, %s30, 1
        %s628 = scalar_lea.vmem %s8, %s627
        %p629 = scmp.lt.s32.totalorder %s30, 1
        %s630 = scalar_select %p629, %s30, 1
        %s631 = scalar_lea.vmem %s9, %s630
        %p632 = scmp.lt.s32.totalorder %s30, 1
        %s633 = scalar_select %p632, %s30, 1
        %s634 = scalar_lea.vmem %s10, %s633
        %p635 = scmp.lt.s32.totalorder %s30, 1
        %s636 = scalar_select %p635, %s30, 1
        %s637 = scalar_lea.vmem %s11, %s636
        %p638 = scmp.lt.s32.totalorder %s30, 1
        %s639 = scalar_select %p638, %s30, 1
        %s640 = scalar_lea.vmem %s12, %s639
        %s641 = smul.u32 2, %s29
        %p642 = scmp.eq.s32.totalorder %s30, 0
        // Predicated region
        $region73: #{tpu_custom_call.1} parent=71 // pred_check
          %p643 = pneg %p642
        $region74: #{tpu_custom_call.1} parent=71 // pred_check_branch
          %645 = sbr.rel (%p643) target = $region76
        $region75: #{tpu_custom_call.1} parent=71 // pred_region
          %v646 = vld [vmem:[%s594] sm:$0xff]
          %v647 = vld [vmem:[%s594 + $0x8] sm:$0xff]
          %vm648 = vcmask 261120
          %649 = vst.msk [vmem:[#allocation2] sm:$0xff] %vm648, %v646
          %650 = vst.msk [vmem:[#allocation2 + $0x8] sm:$0xff] %vm648, %v647
        $region76: #{tpu_custom_call.1} parent=71 // pred_fallthru
          _
        %v651 = vld [vmem:[#allocation2] sm:$0xff]
        %v652 = vld [vmem:[#allocation2 + $0x8] sm:$0xff]
        %v653 = vld [vmem:[%s600] sm:$0xff]
        %v654 = vld [vmem:[%s600 + $0x8] sm:$0xff]
        %v655 = vld [vmem:[%s600 + $0x10] sm:$0xff]
        %v656 = vld [vmem:[%s600 + $0x18] sm:$0xff]
        %v657 = vld [vmem:[%s603] sm:$0x1]
        %v659 = vlaneseq
        %v660 = vshrl.u32 %v659, 7
        %v661 = vsub.s32 0, %v660
        %v662 = vrot.slane %v657, %v661
        %vm664 = vcmask 261120
        %v666 = vsel %vm664, %v651, 0
        %v669 = vsel %vm664, %v652, 0
        %671 = vmatprep.subr.mxu0 0.0
        %672 = vmatpush1.msra.mxu0 0.0
        %673 = vmatprep.subr.mxu0 0.0
        %674 = vmatpush1.msra.mxu0 0.0
        %675 = vmatprep.subr.mxu0 0.0
        %676 = vmatpush1.msra.mxu0 0.0
        %677 = vmatprep.subr.mxu0 0.0
        %678 = vmatpush1.msra.mxu0 0.0
        %679 = vmatprep.subr.mxu0 0.0
        %680 = vmatpush1.msra.mxu0 0.0
        %681 = vmatprep.subr.mxu0 0.0
        %682 = vmatpush1.msra.mxu0 0.0
        %683 = vmatprep.subr.mxu0 0.0
        %684 = vmatpush1.msra.mxu0 0.0
        %685 = vmatprep.subr.mxu0 0.0
        %686 = vmatpush1.msra.mxu0 0.0
        %687 = vmatprep.subr.mxu0 0.0
        %688 = vmatpush1.msra.mxu0 0.0
        %689 = vmatprep.subr.mxu0 0.0
        %690 = vmatpush1.msra.mxu0 0.0
        %691 = vmatprep.subr.mxu0 0.0
        %692 = vmatpush1.msra.mxu0 0.0
        %693 = vmatprep.subr.mxu0 0.0
        %694 = vmatpush1.msra.mxu0 0.0
        %695 = vmatprep.subr.mxu0 0.0
        %696 = vmatpush1.msra.mxu0 %v656
        %697 = vmatprep.subr.mxu0 0.0
        %698 = vmatpush1.msra.mxu0 %v655
        %699 = vmatprep.subr.mxu0 0.0
        %700 = vmatpush1.msra.mxu0 %v654
        %701 = vmatprep.subr.mxu0 0.0
        %702 = vmatpush1.msra.mxu0 %v653
        %703 = vmatprep.subr.mxu0 0.0
        %704 = vmatpush2.msra.mxu0 0.0
        %705 = vmatprep.subr.mxu0 0.0
        %706 = vmatpush2.msra.mxu0 0.0
        %707 = vmatprep.subr.mxu0 0.0
        %708 = vmatpush2.msra.mxu0 0.0
        %709 = vmatprep.subr.mxu0 0.0
        %710 = vmatpush2.msra.mxu0 0.0
        %711 = vmatprep.subr.mxu0 0.0
        %712 = vmatpush2.msra.mxu0 0.0
        %713 = vmatprep.subr.mxu0 0.0
        %714 = vmatpush2.msra.mxu0 0.0
        %715 = vmatprep.subr.mxu0 0.0
        %716 = vmatpush2.msra.mxu0 0.0
        %717 = vmatprep.subr.mxu0 0.0
        %718 = vmatpush2.msra.mxu0 0.0
        %719 = vmatprep.subr.mxu0 0.0
        %720 = vmatpush2.msra.mxu0 0.0
        %721 = vmatprep.subr.mxu0 0.0
        %722 = vmatpush2.msra.mxu0 0.0
        %723 = vmatprep.subr.mxu0 0.0
        %724 = vmatpush2.msra.mxu0 0.0
        %725 = vmatprep.subr.mxu0 0.0
        %726 = vmatpush2.msra.mxu0 0.0
        %727 = vmatprep.subr.mxu0 0.0
        %728 = vmatpush2.msra.mxu0 0.0
        %729 = vmatprep.subr.mxu0 0.0
        %730 = vmatpush2.msra.mxu0 0.0
        %731 = vmatprep.subr.mxu0 0.0
        %732 = vmatpush2.msra.mxu0 0.0
        %733 = vmatprep.subr.mxu0 0.0
        %734 = vmatpush2.msra.mxu0 0.0
        %735 = vmatprep.mubr.f32.mxu0 0.0
        %736 = vmatmul.mubr.f32.gmra.mxu0 %v666
        %v737 = vpop.f32.mrf.mxu0
        %v738 = vadd.f32 %v662, %v737
        %v739 = vpop.f32.mrf.mxu0
        %740 = vmatprep.mubr.f32.mxu0 0.0
        %741 = vmatmul.mubr.f32.gmra.mxu0 %v669
        %v742 = vpop.f32.mrf.mxu0
        %v743 = vadd.f32 %v662, %v742
        %v744 = vpop.f32.mrf.mxu0
        %745 = vdwg.mxu0
        %v746 = vld [vmem:[%s611] sm:$0x1]
        %v748 = vlaneseq
        %v749 = vshrl.u32 %v748, 7
        %v750 = vsub.s32 0, %v749
        %v751 = vrot.slane %v746, %v750
        %754 = vrot.lane.b32.xlu0 %v738, 96
        %v755 = vpop.permute.xlu0 %754
        %vm756 = vcmask 64512
        %v757 = vsel %vm756, %v738, 0
        %v759 = vsel %vm756, %v755, 0
        %761 = vmatprep.subr.mxu0 0.0
        %762 = vmatpush1.xpose.msra.mxu0 0.0
        %763 = vmatprep.subr.mxu0 0.0
        %764 = vmatpush1.xpose.msra.mxu0 0.0
        %765 = vmatprep.subr.mxu0 0.0
        %766 = vmatpush1.xpose.msra.mxu0 0.0
        %767 = vmatprep.subr.mxu0 0.0
        %768 = vmatpush1.xpose.msra.mxu0 0.0
        %769 = vmatprep.subr.mxu0 0.0
        %770 = vmatpush1.xpose.msra.mxu0 0.0
        %771 = vmatprep.subr.mxu0 0.0
        %772 = vmatpush1.xpose.msra.mxu0 0.0
        %773 = vmatprep.subr.mxu0 0.0
        %774 = vmatpush1.xpose.msra.mxu0 0.0
        %775 = vmatprep.subr.mxu0 0.0
        %776 = vmatpush1.xpose.msra.mxu0 0.0
        %777 = vmatprep.subr.mxu0 0.0
        %778 = vmatpush1.xpose.msra.mxu0 0.0
        %779 = vmatprep.subr.mxu0 0.0
        %780 = vmatpush1.xpose.msra.mxu0 0.0
        %781 = vmatprep.subr.mxu0 0.0
        %782 = vmatpush1.xpose.msra.mxu0 0.0
        %783 = vmatprep.subr.mxu0 0.0
        %784 = vmatpush1.xpose.msra.mxu0 0.0
        %785 = vmatprep.subr.mxu0 0.0
        %786 = vmatpush1.xpose.msra.mxu0 0.0
        %787 = vmatprep.subr.mxu0 0.0
        %788 = vmatpush1.xpose.msra.mxu0 0.0
        %789 = vmatprep.subr.mxu0 0.0
        %790 = vmatpush1.xpose.msra.mxu0 0.0
        %791 = vmatprep.subr.mxu0 0.0
        %792 = vmatpush1.xpose.msra.mxu0 %v759
        %793 = vmatprep.subr.mxu0 0.0
        %794 = vmatpush2.xpose.msra.mxu0 0.0
        %795 = vmatprep.subr.mxu0 0.0
        %796 = vmatpush2.xpose.msra.mxu0 0.0
        %797 = vmatprep.subr.mxu0 0.0
        %798 = vmatpush2.xpose.msra.mxu0 0.0
        %799 = vmatprep.subr.mxu0 0.0
        %800 = vmatpush2.xpose.msra.mxu0 0.0
        %801 = vmatprep.subr.mxu0 0.0
        %802 = vmatpush2.xpose.msra.mxu0 0.0
        %803 = vmatprep.subr.mxu0 0.0
        %804 = vmatpush2.xpose.msra.mxu0 0.0
        %805 = vmatprep.subr.mxu0 0.0
        %806 = vmatpush2.xpose.msra.mxu0 0.0
        %807 = vmatprep.subr.mxu0 0.0
        %808 = vmatpush2.xpose.msra.mxu0 0.0
        %809 = vmatprep.subr.mxu0 0.0
        %810 = vmatpush2.xpose.msra.mxu0 0.0
        %811 = vmatprep.subr.mxu0 0.0
        %812 = vmatpush2.xpose.msra.mxu0 0.0
        %813 = vmatprep.subr.mxu0 0.0
        %814 = vmatpush2.xpose.msra.mxu0 0.0
        %815 = vmatprep.subr.mxu0 0.0
        %816 = vmatpush2.xpose.msra.mxu0 0.0
        %817 = vmatprep.subr.mxu0 0.0
        %818 = vmatpush2.xpose.msra.mxu0 0.0
        %819 = vmatprep.subr.mxu0 0.0
        %820 = vmatpush2.xpose.msra.mxu0 0.0
        %821 = vmatprep.subr.mxu0 0.0
        %822 = vmatpush2.xpose.msra.mxu0 0.0
        %823 = vmatprep.subr.mxu0 0.0
        %824 = vmatpush2.xpose.msra.mxu0 0.0
        %825 = vmatprep.mubr.f32.mxu0 0.0
        %826 = vmatmul.mubr.f32.gmra.mxu0 %v757
        %v827 = vpop.f32.mrf.mxu0
        %v828 = vadd.f32 0.0, %v827
        %v829 = vpop.f32.mrf.mxu0
        %830 = vdwg.mxu0
        %832 = vrot.lane.b32.xlu0 %v743, 96
        %v833 = vpop.permute.xlu0 %832
        %v834 = vsel %vm756, %v743, 0
        %v836 = vsel %vm756, %v833, 0
        %838 = vmatprep.subr.mxu0 0.0
        %839 = vmatpush1.xpose.msra.mxu0 0.0
        %840 = vmatprep.subr.mxu0 0.0
        %841 = vmatpush1.xpose.msra.mxu0 0.0
        %842 = vmatprep.subr.mxu0 0.0
        %843 = vmatpush1.xpose.msra.mxu0 0.0
        %844 = vmatprep.subr.mxu0 0.0
        %845 = vmatpush1.xpose.msra.mxu0 0.0
        %846 = vmatprep.subr.mxu0 0.0
        %847 = vmatpush1.xpose.msra.mxu0 0.0
        %848 = vmatprep.subr.mxu0 0.0
        %849 = vmatpush1.xpose.msra.mxu0 0.0
        %850 = vmatprep.subr.mxu0 0.0
        %851 = vmatpush1.xpose.msra.mxu0 0.0
        %852 = vmatprep.subr.mxu0 0.0
        %853 = vmatpush1.xpose.msra.mxu0 0.0
        %854 = vmatprep.subr.mxu0 0.0
        %855 = vmatpush1.xpose.msra.mxu0 0.0
        %856 = vmatprep.subr.mxu0 0.0
        %857 = vmatpush1.xpose.msra.mxu0 0.0
        %858 = vmatprep.subr.mxu0 0.0
        %859 = vmatpush1.xpose.msra.mxu0 0.0
        %860 = vmatprep.subr.mxu0 0.0
        %861 = vmatpush1.xpose.msra.mxu0 0.0
        %862 = vmatprep.subr.mxu0 0.0
        %863 = vmatpush1.xpose.msra.mxu0 0.0
        %864 = vmatprep.subr.mxu0 0.0
        %865 = vmatpush1.xpose.msra.mxu0 0.0
        %866 = vmatprep.subr.mxu0 0.0
        %867 = vmatpush1.xpose.msra.mxu0 0.0
        %868 = vmatprep.subr.mxu0 0.0
        %869 = vmatpush1.xpose.msra.mxu0 %v836
        %870 = vmatprep.subr.mxu0 0.0
        %871 = vmatpush2.xpose.msra.mxu0 0.0
        %872 = vmatprep.subr.mxu0 0.0
        %873 = vmatpush2.xpose.msra.mxu0 0.0
        %874 = vmatprep.subr.mxu0 0.0
        %875 = vmatpush2.xpose.msra.mxu0 0.0
        %876 = vmatprep.subr.mxu0 0.0
        %877 = vmatpush2.xpose.msra.mxu0 0.0
        %878 = vmatprep.subr.mxu0 0.0
        %879 = vmatpush2.xpose.msra.mxu0 0.0
        %880 = vmatprep.subr.mxu0 0.0
        %881 = vmatpush2.xpose.msra.mxu0 0.0
        %882 = vmatprep.subr.mxu0 0.0
        %883 = vmatpush2.xpose.msra.mxu0 0.0
        %884 = vmatprep.subr.mxu0 0.0
        %885 = vmatpush2.xpose.msra.mxu0 0.0
        %886 = vmatprep.subr.mxu0 0.0
        %887 = vmatpush2.xpose.msra.mxu0 0.0
        %888 = vmatprep.subr.mxu0 0.0
        %889 = vmatpush2.xpose.msra.mxu0 0.0
        %890 = vmatprep.subr.mxu0 0.0
        %891 = vmatpush2.xpose.msra.mxu0 0.0
        %892 = vmatprep.subr.mxu0 0.0
        %893 = vmatpush2.xpose.msra.mxu0 0.0
        %894 = vmatprep.subr.mxu0 0.0
        %895 = vmatpush2.xpose.msra.mxu0 0.0
        %896 = vmatprep.subr.mxu0 0.0
        %897 = vmatpush2.xpose.msra.mxu0 0.0
        %898 = vmatprep.subr.mxu0 0.0
        %899 = vmatpush2.xpose.msra.mxu0 0.0
        %900 = vmatprep.subr.mxu0 0.0
        %901 = vmatpush2.xpose.msra.mxu0 0.0
        %902 = vmatprep.mubr.f32.mxu0 0.0
        %903 = vmatmul.mubr.f32.gmra.mxu0 %v834
        %v904 = vpop.f32.mrf.mxu0
        %v905 = vadd.f32 0.0, %v904
        %v906 = vpop.f32.mrf.mxu0
        %907 = vdwg.mxu0
        %v908 = vsel %vm756, %v828, -inf
        %909 = vmax.xlane.f32.xlu0 %v908
        %v910 = vpop.xlane.xlu0 %909
        %v911 = vsel %vm756, %v905, -inf
        %912 = vmax.xlane.f32.xlu0 %v911
        %v913 = vpop.xlane.xlu0 %912
        %v914 = vsub.f32 %v828, %v910
        %v915 = vsub.f32 %v905, %v913
        %v916 = vmul.f32 %v914, 1.442695
        %v917 = vpow.pop %v916
        %v918 = vmul.f32 %v915, 1.442695
        %v919 = vpow.pop %v918
        %v920 = vsel %vm756, %v917, 0.0
        %921 = vadd.xlane.f32.xlu0 %v920
        %v922 = vpop.xlane.xlu0 %921
        %v923 = vsel %vm756, %v919, 0.0
        %924 = vadd.xlane.f32.xlu0 %v923
        %v925 = vpop.xlane.xlu0 %924
        %v926 = vrcp.pop %v922
        %v927 = vrcp.pop %v925
        %v928 = vmul.f32 %v917, %v926
        %v929 = vmul.f32 %v919, %v927
        %930 = vrot.lane.b32.xlu0 %v738, 64
        %v931 = vpop.permute.xlu0 %930
        %v934 = vsel %vm756, %v928, 0
        %936 = vmatprep.subr.mxu0 0.0
        %937 = vmatpush1.msra.mxu0 0.0
        %938 = vmatprep.subr.mxu0 0.0
        %939 = vmatpush1.msra.mxu0 0.0
        %940 = vmatprep.subr.mxu0 0.0
        %941 = vmatpush1.msra.mxu0 0.0
        %942 = vmatprep.subr.mxu0 0.0
        %943 = vmatpush1.msra.mxu0 0.0
        %944 = vmatprep.subr.mxu0 0.0
        %945 = vmatpush1.msra.mxu0 0.0
        %946 = vmatprep.subr.mxu0 0.0
        %947 = vmatpush1.msra.mxu0 0.0
        %948 = vmatprep.subr.mxu0 0.0
        %949 = vmatpush1.msra.mxu0 0.0
        %950 = vmatprep.subr.mxu0 0.0
        %951 = vmatpush1.msra.mxu0 0.0
        %952 = vmatprep.subr.mxu0 0.0
        %953 = vmatpush1.msra.mxu0 0.0
        %954 = vmatprep.subr.mxu0 0.0
        %955 = vmatpush1.msra.mxu0 0.0
        %956 = vmatprep.subr.mxu0 0.0
        %957 = vmatpush1.msra.mxu0 0.0
        %958 = vmatprep.subr.mxu0 0.0
        %959 = vmatpush1.msra.mxu0 0.0
        %960 = vmatprep.subr.mxu0 0.0
        %961 = vmatpush1.msra.mxu0 0.0
        %962 = vmatprep.subr.mxu0 0.0
        %963 = vmatpush1.msra.mxu0 0.0
        %964 = vmatprep.subr.mxu0 0.0
        %965 = vmatpush1.msra.mxu0 0.0
        %966 = vmatprep.subr.mxu0 0.0
        %967 = vmatpush1.msra.mxu0 %v931
        %968 = vmatprep.subr.mxu0 0.0
        %969 = vmatpush2.msra.mxu0 0.0
        %970 = vmatprep.subr.mxu0 0.0
        %971 = vmatpush2.msra.mxu0 0.0
        %972 = vmatprep.subr.mxu0 0.0
        %973 = vmatpush2.msra.mxu0 0.0
        %974 = vmatprep.subr.mxu0 0.0
        %975 = vmatpush2.msra.mxu0 0.0
        %976 = vmatprep.subr.mxu0 0.0
        %977 = vmatpush2.msra.mxu0 0.0
        %978 = vmatprep.subr.mxu0 0.0
        %979 = vmatpush2.msra.mxu0 0.0
        %980 = vmatprep.subr.mxu0 0.0
        %981 = vmatpush2.msra.mxu0 0.0
        %982 = vmatprep.subr.mxu0 0.0
        %983 = vmatpush2.msra.mxu0 0.0
        %984 = vmatprep.subr.mxu0 0.0
        %985 = vmatpush2.msra.mxu0 0.0
        %986 = vmatprep.subr.mxu0 0.0
        %987 = vmatpush2.msra.mxu0 0.0
        %988 = vmatprep.subr.mxu0 0.0
        %989 = vmatpush2.msra.mxu0 0.0
        %990 = vmatprep.subr.mxu0 0.0
        %991 = vmatpush2.msra.mxu0 0.0
        %992 = vmatprep.subr.mxu0 0.0
        %993 = vmatpush2.msra.mxu0 0.0
        %994 = vmatprep.subr.mxu0 0.0
        %995 = vmatpush2.msra.mxu0 0.0
        %996 = vmatprep.subr.mxu0 0.0
        %997 = vmatpush2.msra.mxu0 0.0
        %998 = vmatprep.subr.mxu0 0.0
        %999 = vmatpush2.msra.mxu0 0.0
        %1000 = vmatprep.mubr.f32.mxu0 0.0
        %1001 = vmatmul.mubr.f32.gmra.mxu0 %v934
        %v1002 = vpop.f32.mrf.mxu0
        %v1003 = vadd.f32 0.0, %v1002
        %v1004 = vpop.f32.mrf.mxu0
        %1005 = vdwg.mxu0
        %1006 = vrot.lane.b32.xlu0 %v743, 64
        %v1007 = vpop.permute.xlu0 %1006
        %v1010 = vsel %vm756, %v929, 0
        %1012 = vmatprep.subr.mxu0 0.0
        %1013 = vmatpush1.msra.mxu0 0.0
        %1014 = vmatprep.subr.mxu0 0.0
        %1015 = vmatpush1.msra.mxu0 0.0
        %1016 = vmatprep.subr.mxu0 0.0
        %1017 = vmatpush1.msra.mxu0 0.0
        %1018 = vmatprep.subr.mxu0 0.0
        %1019 = vmatpush1.msra.mxu0 0.0
        %1020 = vmatprep.subr.mxu0 0.0
        %1021 = vmatpush1.msra.mxu0 0.0
        %1022 = vmatprep.subr.mxu0 0.0
        %1023 = vmatpush1.msra.mxu0 0.0
        %1024 = vmatprep.subr.mxu0 0.0
        %1025 = vmatpush1.msra.mxu0 0.0
        %1026 = vmatprep.subr.mxu0 0.0
        %1027 = vmatpush1.msra.mxu0 0.0
        %1028 = vmatprep.subr.mxu0 0.0
        %1029 = vmatpush1.msra.mxu0 0.0
        %1030 = vmatprep.subr.mxu0 0.0
        %1031 = vmatpush1.msra.mxu0 0.0
        %1032 = vmatprep.subr.mxu0 0.0
        %1033 = vmatpush1.msra.mxu0 0.0
        %1034 = vmatprep.subr.mxu0 0.0
        %1035 = vmatpush1.msra.mxu0 0.0
        %1036 = vmatprep.subr.mxu0 0.0
        %1037 = vmatpush1.msra.mxu0 0.0
        %1038 = vmatprep.subr.mxu0 0.0
        %1039 = vmatpush1.msra.mxu0 0.0
        %1040 = vmatprep.subr.mxu0 0.0
        %1041 = vmatpush1.msra.mxu0 0.0
        %1042 = vmatprep.subr.mxu0 0.0
        %1043 = vmatpush1.msra.mxu0 %v1007
        %1044 = vmatprep.subr.mxu0 0.0
        %1045 = vmatpush2.msra.mxu0 0.0
        %1046 = vmatprep.subr.mxu0 0.0
        %1047 = vmatpush2.msra.mxu0 0.0
        %1048 = vmatprep.subr.mxu0 0.0
        %1049 = vmatpush2.msra.mxu0 0.0
        %1050 = vmatprep.subr.mxu0 0.0
        %1051 = vmatpush2.msra.mxu0 0.0
        %1052 = vmatprep.subr.mxu0 0.0
        %1053 = vmatpush2.msra.mxu0 0.0
        %1054 = vmatprep.subr.mxu0 0.0
        %1055 = vmatpush2.msra.mxu0 0.0
        %1056 = vmatprep.subr.mxu0 0.0
        %1057 = vmatpush2.msra.mxu0 0.0
        %1058 = vmatprep.subr.mxu0 0.0
        %1059 = vmatpush2.msra.mxu0 0.0
        %1060 = vmatprep.subr.mxu0 0.0
        %1061 = vmatpush2.msra.mxu0 0.0
        %1062 = vmatprep.subr.mxu0 0.0
        %1063 = vmatpush2.msra.mxu0 0.0
        %1064 = vmatprep.subr.mxu0 0.0
        %1065 = vmatpush2.msra.mxu0 0.0
        %1066 = vmatprep.subr.mxu0 0.0
        %1067 = vmatpush2.msra.mxu0 0.0
        %1068 = vmatprep.subr.mxu0 0.0
        %1069 = vmatpush2.msra.mxu0 0.0
        %1070 = vmatprep.subr.mxu0 0.0
        %1071 = vmatpush2.msra.mxu0 0.0
        %1072 = vmatprep.subr.mxu0 0.0
        %1073 = vmatpush2.msra.mxu0 0.0
        %1074 = vmatprep.subr.mxu0 0.0
        %1075 = vmatpush2.msra.mxu0 0.0
        %1076 = vmatprep.mubr.f32.mxu0 0.0
        %1077 = vmatmul.mubr.f32.gmra.mxu0 %v1010
        %v1078 = vpop.f32.mrf.mxu0
        %v1079 = vadd.f32 0.0, %v1078
        %v1080 = vpop.f32.mrf.mxu0
        %1081 = vdwg.mxu0
        %v1082 = vld [vmem:[%s608] sm:$0xff]
        %v1084 = vsel %vm756, %v1003, 0
        %v1087 = vsel %vm756, %v1079, 0
        %1089 = vmatprep.subr.mxu0 0.0
        %1090 = vmatpush1.msra.mxu0 0.0
        %1091 = vmatprep.subr.mxu0 0.0
        %1092 = vmatpush1.msra.mxu0 0.0
        %1093 = vmatprep.subr.mxu0 0.0
        %1094 = vmatpush1.msra.mxu0 0.0
        %1095 = vmatprep.subr.mxu0 0.0
        %1096 = vmatpush1.msra.mxu0 0.0
        %1097 = vmatprep.subr.mxu0 0.0
        %1098 = vmatpush1.msra.mxu0 0.0
        %1099 = vmatprep.subr.mxu0 0.0
        %1100 = vmatpush1.msra.mxu0 0.0
        %1101 = vmatprep.subr.mxu0 0.0
        %1102 = vmatpush1.msra.mxu0 0.0
        %1103 = vmatprep.subr.mxu0 0.0
        %1104 = vmatpush1.msra.mxu0 0.0
        %1105 = vmatprep.subr.mxu0 0.0
        %1106 = vmatpush1.msra.mxu0 0.0
        %1107 = vmatprep.subr.mxu0 0.0
        %1108 = vmatpush1.msra.mxu0 0.0
        %1109 = vmatprep.subr.mxu0 0.0
        %1110 = vmatpush1.msra.mxu0 0.0
        %1111 = vmatprep.subr.mxu0 0.0
        %1112 = vmatpush1.msra.mxu0 0.0
        %1113 = vmatprep.subr.mxu0 0.0
        %1114 = vmatpush1.msra.mxu0 0.0
        %1115 = vmatprep.subr.mxu0 0.0
        %1116 = vmatpush1.msra.mxu0 0.0
        %1117 = vmatprep.subr.mxu0 0.0
        %1118 = vmatpush1.msra.mxu0 0.0
        %1119 = vmatprep.subr.mxu0 0.0
        %1120 = vmatpush1.msra.mxu0 %v1082
        %1121 = vmatprep.subr.mxu0 0.0
        %1122 = vmatpush2.msra.mxu0 0.0
        %1123 = vmatprep.subr.mxu0 0.0
        %1124 = vmatpush2.msra.mxu0 0.0
        %1125 = vmatprep.subr.mxu0 0.0
        %1126 = vmatpush2.msra.mxu0 0.0
        %1127 = vmatprep.subr.mxu0 0.0
        %1128 = vmatpush2.msra.mxu0 0.0
        %1129 = vmatprep.subr.mxu0 0.0
        %1130 = vmatpush2.msra.mxu0 0.0
        %1131 = vmatprep.subr.mxu0 0.0
        %1132 = vmatpush2.msra.mxu0 0.0
        %1133 = vmatprep.subr.mxu0 0.0
        %1134 = vmatpush2.msra.mxu0 0.0
        %1135 = vmatprep.subr.mxu0 0.0
        %1136 = vmatpush2.msra.mxu0 0.0
        %1137 = vmatprep.subr.mxu0 0.0
        %1138 = vmatpush2.msra.mxu0 0.0
        %1139 = vmatprep.subr.mxu0 0.0
        %1140 = vmatpush2.msra.mxu0 0.0
        %1141 = vmatprep.subr.mxu0 0.0
        %1142 = vmatpush2.msra.mxu0 0.0
        %1143 = vmatprep.subr.mxu0 0.0
        %1144 = vmatpush2.msra.mxu0 0.0
        %1145 = vmatprep.subr.mxu0 0.0
        %1146 = vmatpush2.msra.mxu0 0.0
        %1147 = vmatprep.subr.mxu0 0.0
        %1148 = vmatpush2.msra.mxu0 0.0
        %1149 = vmatprep.subr.mxu0 0.0
        %1150 = vmatpush2.msra.mxu0 0.0
        %1151 = vmatprep.subr.mxu0 0.0
        %1152 = vmatpush2.msra.mxu0 0.0
        %1153 = vmatprep.mubr.f32.mxu0 0.0
        %1154 = vmatmul.mubr.f32.gmra.mxu0 %v1084
        %v1155 = vpop.f32.mrf.mxu0
        %v1156 = vadd.f32 0.0, %v1155
        %v1157 = vpop.f32.mrf.mxu0
        %1158 = vmatprep.mubr.f32.mxu0 0.0
        %1159 = vmatmul.mubr.f32.gmra.mxu0 %v1087
        %v1160 = vpop.f32.mrf.mxu0
        %v1161 = vadd.f32 0.0, %v1160
        %v1162 = vpop.f32.mrf.mxu0
        %1163 = vdwg.mxu0
        %v1164 = vadd.f32 %v751, %v1156
        %v1165 = vadd.f32 %v751, %v1161
        %1166 = vrot.lane.b32.xlu0 %v738, 120
        %v1167 = vpop.permute.xlu0 %1166
        %1168 = vrot.lane.b32.xlu0 %v738, 88
        %v1169 = vpop.permute.xlu0 %1168
        %v1170 = vsel %vm756, %v1167, 0
        %v1172 = vsel %vm756, %v1169, 0
        %1174 = vmatprep.subr.mxu0 0.0
        %1175 = vmatpush1.xpose.msra.mxu0 0.0
        %1176 = vmatprep.subr.mxu0 0.0
        %1177 = vmatpush1.xpose.msra.mxu0 0.0
        %1178 = vmatprep.subr.mxu0 0.0
        %1179 = vmatpush1.xpose.msra.mxu0 0.0
        %1180 = vmatprep.subr.mxu0 0.0
        %1181 = vmatpush1.xpose.msra.mxu0 0.0
        %1182 = vmatprep.subr.mxu0 0.0
        %1183 = vmatpush1.xpose.msra.mxu0 0.0
        %1184 = vmatprep.subr.mxu0 0.0
        %1185 = vmatpush1.xpose.msra.mxu0 0.0
        %1186 = vmatprep.subr.mxu0 0.0
        %1187 = vmatpush1.xpose.msra.mxu0 0.0
        %1188 = vmatprep.subr.mxu0 0.0
        %1189 = vmatpush1.xpose.msra.mxu0 0.0
        %1190 = vmatprep.subr.mxu0 0.0
        %1191 = vmatpush1.xpose.msra.mxu0 0.0
        %1192 = vmatprep.subr.mxu0 0.0
        %1193 = vmatpush1.xpose.msra.mxu0 0.0
        %1194 = vmatprep.subr.mxu0 0.0
        %1195 = vmatpush1.xpose.msra.mxu0 0.0
        %1196 = vmatprep.subr.mxu0 0.0
        %1197 = vmatpush1.xpose.msra.mxu0 0.0
        %1198 = vmatprep.subr.mxu0 0.0
        %1199 = vmatpush1.xpose.msra.mxu0 0.0
        %1200 = vmatprep.subr.mxu0 0.0
        %1201 = vmatpush1.xpose.msra.mxu0 0.0
        %1202 = vmatprep.subr.mxu0 0.0
        %1203 = vmatpush1.xpose.msra.mxu0 0.0
        %1204 = vmatprep.subr.mxu0 0.0
        %1205 = vmatpush1.xpose.msra.mxu0 %v1172
        %1206 = vmatprep.subr.mxu0 0.0
        %1207 = vmatpush2.xpose.msra.mxu0 0.0
        %1208 = vmatprep.subr.mxu0 0.0
        %1209 = vmatpush2.xpose.msra.mxu0 0.0
        %1210 = vmatprep.subr.mxu0 0.0
        %1211 = vmatpush2.xpose.msra.mxu0 0.0
        %1212 = vmatprep.subr.mxu0 0.0
        %1213 = vmatpush2.xpose.msra.mxu0 0.0
        %1214 = vmatprep.subr.mxu0 0.0
        %1215 = vmatpush2.xpose.msra.mxu0 0.0
        %1216 = vmatprep.subr.mxu0 0.0
        %1217 = vmatpush2.xpose.msra.mxu0 0.0
        %1218 = vmatprep.subr.mxu0 0.0
        %1219 = vmatpush2.xpose.msra.mxu0 0.0
        %1220 = vmatprep.subr.mxu0 0.0
        %1221 = vmatpush2.xpose.msra.mxu0 0.0
        %1222 = vmatprep.subr.mxu0 0.0
        %1223 = vmatpush2.xpose.msra.mxu0 0.0
        %1224 = vmatprep.subr.mxu0 0.0
        %1225 = vmatpush2.xpose.msra.mxu0 0.0
        %1226 = vmatprep.subr.mxu0 0.0
        %1227 = vmatpush2.xpose.msra.mxu0 0.0
        %1228 = vmatprep.subr.mxu0 0.0
        %1229 = vmatpush2.xpose.msra.mxu0 0.0
        %1230 = vmatprep.subr.mxu0 0.0
        %1231 = vmatpush2.xpose.msra.mxu0 0.0
        %1232 = vmatprep.subr.mxu0 0.0
        %1233 = vmatpush2.xpose.msra.mxu0 0.0
        %1234 = vmatprep.subr.mxu0 0.0
        %1235 = vmatpush2.xpose.msra.mxu0 0.0
        %1236 = vmatprep.subr.mxu0 0.0
        %1237 = vmatpush2.xpose.msra.mxu0 0.0
        %1238 = vmatprep.mubr.f32.mxu0 0.0
        %1239 = vmatmul.mubr.f32.gmra.mxu0 %v1170
        %v1240 = vpop.f32.mrf.mxu0
        %v1241 = vadd.f32 0.0, %v1240
        %v1242 = vpop.f32.mrf.mxu0
        %1243 = vdwg.mxu0
        %1244 = vrot.lane.b32.xlu0 %v743, 120
        %v1245 = vpop.permute.xlu0 %1244
        %1246 = vrot.lane.b32.xlu0 %v743, 88
        %v1247 = vpop.permute.xlu0 %1246
        %v1248 = vsel %vm756, %v1245, 0
        %v1250 = vsel %vm756, %v1247, 0
        %1252 = vmatprep.subr.mxu0 0.0
        %1253 = vmatpush1.xpose.msra.mxu0 0.0
        %1254 = vmatprep.subr.mxu0 0.0
        %1255 = vmatpush1.xpose.msra.mxu0 0.0
        %1256 = vmatprep.subr.mxu0 0.0
        %1257 = vmatpush1.xpose.msra.mxu0 0.0
        %1258 = vmatprep.subr.mxu0 0.0
        %1259 = vmatpush1.xpose.msra.mxu0 0.0
        %1260 = vmatprep.subr.mxu0 0.0
        %1261 = vmatpush1.xpose.msra.mxu0 0.0
        %1262 = vmatprep.subr.mxu0 0.0
        %1263 = vmatpush1.xpose.msra.mxu0 0.0
        %1264 = vmatprep.subr.mxu0 0.0
        %1265 = vmatpush1.xpose.msra.mxu0 0.0
        %1266 = vmatprep.subr.mxu0 0.0
        %1267 = vmatpush1.xpose.msra.mxu0 0.0
        %1268 = vmatprep.subr.mxu0 0.0
        %1269 = vmatpush1.xpose.msra.mxu0 0.0
        %1270 = vmatprep.subr.mxu0 0.0
        %1271 = vmatpush1.xpose.msra.mxu0 0.0
        %1272 = vmatprep.subr.mxu0 0.0
        %1273 = vmatpush1.xpose.msra.mxu0 0.0
        %1274 = vmatprep.subr.mxu0 0.0
        %1275 = vmatpush1.xpose.msra.mxu0 0.0
        %1276 = vmatprep.subr.mxu0 0.0
        %1277 = vmatpush1.xpose.msra.mxu0 0.0
        %1278 = vmatprep.subr.mxu0 0.0
        %1279 = vmatpush1.xpose.msra.mxu0 0.0
        %1280 = vmatprep.subr.mxu0 0.0
        %1281 = vmatpush1.xpose.msra.mxu0 0.0
        %1282 = vmatprep.subr.mxu0 0.0
        %1283 = vmatpush1.xpose.msra.mxu0 %v1250
        %1284 = vmatprep.subr.mxu0 0.0
        %1285 = vmatpush2.xpose.msra.mxu0 0.0
        %1286 = vmatprep.subr.mxu0 0.0
        %1287 = vmatpush2.xpose.msra.mxu0 0.0
        %1288 = vmatprep.subr.mxu0 0.0
        %1289 = vmatpush2.xpose.msra.mxu0 0.0
        %1290 = vmatprep.subr.mxu0 0.0
        %1291 = vmatpush2.xpose.msra.mxu0 0.0
        %1292 = vmatprep.subr.mxu0 0.0
        %1293 = vmatpush2.xpose.msra.mxu0 0.0
        %1294 = vmatprep.subr.mxu0 0.0
        %1295 = vmatpush2.xpose.msra.mxu0 0.0
        %1296 = vmatprep.subr.mxu0 0.0
        %1297 = vmatpush2.xpose.msra.mxu0 0.0
        %1298 = vmatprep.subr.mxu0 0.0
        %1299 = vmatpush2.xpose.msra.mxu0 0.0
        %1300 = vmatprep.subr.mxu0 0.0
        %1301 = vmatpush2.xpose.msra.mxu0 0.0
        %1302 = vmatprep.subr.mxu0 0.0
        %1303 = vmatpush2.xpose.msra.mxu0 0.0
        %1304 = vmatprep.subr.mxu0 0.0
        %1305 = vmatpush2.xpose.msra.mxu0 0.0
        %1306 = vmatprep.subr.mxu0 0.0
        %1307 = vmatpush2.xpose.msra.mxu0 0.0
        %1308 = vmatprep.subr.mxu0 0.0
        %1309 = vmatpush2.xpose.msra.mxu0 0.0
        %1310 = vmatprep.subr.mxu0 0.0
        %1311 = vmatpush2.xpose.msra.mxu0 0.0
        %1312 = vmatprep.subr.mxu0 0.0
        %1313 = vmatpush2.xpose.msra.mxu0 0.0
        %1314 = vmatprep.subr.mxu0 0.0
        %1315 = vmatpush2.xpose.msra.mxu0 0.0
        %1316 = vmatprep.mubr.f32.mxu0 0.0
        %1317 = vmatmul.mubr.f32.gmra.mxu0 %v1248
        %v1318 = vpop.f32.mrf.mxu0
        %v1319 = vadd.f32 0.0, %v1318
        %v1320 = vpop.f32.mrf.mxu0
        %1321 = vdwg.mxu0
        %v1322 = vsel %vm756, %v1241, -inf
        %1323 = vmax.xlane.f32.xlu0 %v1322
        %v1324 = vpop.xlane.xlu0 %1323
        %v1325 = vsel %vm756, %v1319, -inf
        %1326 = vmax.xlane.f32.xlu0 %v1325
        %v1327 = vpop.xlane.xlu0 %1326
        %v1328 = vsub.f32 %v1241, %v1324
        %v1329 = vsub.f32 %v1319, %v1327
        %v1330 = vmul.f32 %v1328, 1.442695
        %v1331 = vpow.pop %v1330
        %v1332 = vmul.f32 %v1329, 1.442695
        %v1333 = vpow.pop %v1332
        %v1334 = vsel %vm756, %v1331, 0.0
        %1335 = vadd.xlane.f32.xlu0 %v1334
        %v1336 = vpop.xlane.xlu0 %1335
        %v1337 = vsel %vm756, %v1333, 0.0
        %1338 = vadd.xlane.f32.xlu0 %v1337
        %v1339 = vpop.xlane.xlu0 %1338
        %v1340 = vrcp.pop %v1336
        %v1341 = vrcp.pop %v1339
        %v1342 = vmul.f32 %v1331, %v1340
        %v1343 = vmul.f32 %v1333, %v1341
        %1344 = vrot.lane.b32.xlu0 %v738, 56
        %v1345 = vpop.permute.xlu0 %1344
        %v1348 = vsel %vm756, %v1342, 0
        %1350 = vmatprep.subr.mxu0 0.0
        %1351 = vmatpush1.msra.mxu0 0.0
        %1352 = vmatprep.subr.mxu0 0.0
        %1353 = vmatpush1.msra.mxu0 0.0
        %1354 = vmatprep.subr.mxu0 0.0
        %1355 = vmatpush1.msra.mxu0 0.0
        %1356 = vmatprep.subr.mxu0 0.0
        %1357 = vmatpush1.msra.mxu0 0.0
        %1358 = vmatprep.subr.mxu0 0.0
        %1359 = vmatpush1.msra.mxu0 0.0
        %1360 = vmatprep.subr.mxu0 0.0
        %1361 = vmatpush1.msra.mxu0 0.0
        %1362 = vmatprep.subr.mxu0 0.0
        %1363 = vmatpush1.msra.mxu0 0.0
        %1364 = vmatprep.subr.mxu0 0.0
        %1365 = vmatpush1.msra.mxu0 0.0
        %1366 = vmatprep.subr.mxu0 0.0
        %1367 = vmatpush1.msra.mxu0 0.0
        %1368 = vmatprep.subr.mxu0 0.0
        %1369 = vmatpush1.msra.mxu0 0.0
        %1370 = vmatprep.subr.mxu0 0.0
        %1371 = vmatpush1.msra.mxu0 0.0
        %1372 = vmatprep.subr.mxu0 0.0
        %1373 = vmatpush1.msra.mxu0 0.0
        %1374 = vmatprep.subr.mxu0 0.0
        %1375 = vmatpush1.msra.mxu0 0.0
        %1376 = vmatprep.subr.mxu0 0.0
        %1377 = vmatpush1.msra.mxu0 0.0
        %1378 = vmatprep.subr.mxu0 0.0
        %1379 = vmatpush1.msra.mxu0 0.0
        %1380 = vmatprep.subr.mxu0 0.0
        %1381 = vmatpush1.msra.mxu0 %v1345
        %1382 = vmatprep.subr.mxu0 0.0
        %1383 = vmatpush2.msra.mxu0 0.0
        %1384 = vmatprep.subr.mxu0 0.0
        %1385 = vmatpush2.msra.mxu0 0.0
        %1386 = vmatprep.subr.mxu0 0.0
        %1387 = vmatpush2.msra.mxu0 0.0
        %1388 = vmatprep.subr.mxu0 0.0
        %1389 = vmatpush2.msra.mxu0 0.0
        %1390 = vmatprep.subr.mxu0 0.0
        %1391 = vmatpush2.msra.mxu0 0.0
        %1392 = vmatprep.subr.mxu0 0.0
        %1393 = vmatpush2.msra.mxu0 0.0
        %1394 = vmatprep.subr.mxu0 0.0
        %1395 = vmatpush2.msra.mxu0 0.0
        %1396 = vmatprep.subr.mxu0 0.0
        %1397 = vmatpush2.msra.mxu0 0.0
        %1398 = vmatprep.subr.mxu0 0.0
        %1399 = vmatpush2.msra.mxu0 0.0
        %1400 = vmatprep.subr.mxu0 0.0
        %1401 = vmatpush2.msra.mxu0 0.0
        %1402 = vmatprep.subr.mxu0 0.0
        %1403 = vmatpush2.msra.mxu0 0.0
        %1404 = vmatprep.subr.mxu0 0.0
        %1405 = vmatpush2.msra.mxu0 0.0
        %1406 = vmatprep.subr.mxu0 0.0
        %1407 = vmatpush2.msra.mxu0 0.0
        %1408 = vmatprep.subr.mxu0 0.0
        %1409 = vmatpush2.msra.mxu0 0.0
        %1410 = vmatprep.subr.mxu0 0.0
        %1411 = vmatpush2.msra.mxu0 0.0
        %1412 = vmatprep.subr.mxu0 0.0
        %1413 = vmatpush2.msra.mxu0 0.0
        %1414 = vmatprep.mubr.f32.mxu0 0.0
        %1415 = vmatmul.mubr.f32.gmra.mxu0 %v1348
        %v1416 = vpop.f32.mrf.mxu0
        %v1417 = vadd.f32 0.0, %v1416
        %v1418 = vpop.f32.mrf.mxu0
        %1419 = vdwg.mxu0
        %1420 = vrot.lane.b32.xlu0 %v743, 56
        %v1421 = vpop.permute.xlu0 %1420
        %v1424 = vsel %vm756, %v1343, 0
        %1426 = vmatprep.subr.mxu0 0.0
        %1427 = vmatpush1.msra.mxu0 0.0
        %1428 = vmatprep.subr.mxu0 0.0
        %1429 = vmatpush1.msra.mxu0 0.0
        %1430 = vmatprep.subr.mxu0 0.0
        %1431 = vmatpush1.msra.mxu0 0.0
        %1432 = vmatprep.subr.mxu0 0.0
        %1433 = vmatpush1.msra.mxu0 0.0
        %1434 = vmatprep.subr.mxu0 0.0
        %1435 = vmatpush1.msra.mxu0 0.0
        %1436 = vmatprep.subr.mxu0 0.0
        %1437 = vmatpush1.msra.mxu0 0.0
        %1438 = vmatprep.subr.mxu0 0.0
        %1439 = vmatpush1.msra.mxu0 0.0
        %1440 = vmatprep.subr.mxu0 0.0
        %1441 = vmatpush1.msra.mxu0 0.0
        %1442 = vmatprep.subr.mxu0 0.0
        %1443 = vmatpush1.msra.mxu0 0.0
        %1444 = vmatprep.subr.mxu0 0.0
        %1445 = vmatpush1.msra.mxu0 0.0
        %1446 = vmatprep.subr.mxu0 0.0
        %1447 = vmatpush1.msra.mxu0 0.0
        %1448 = vmatprep.subr.mxu0 0.0
        %1449 = vmatpush1.msra.mxu0 0.0
        %1450 = vmatprep.subr.mxu0 0.0
        %1451 = vmatpush1.msra.mxu0 0.0
        %1452 = vmatprep.subr.mxu0 0.0
        %1453 = vmatpush1.msra.mxu0 0.0
        %1454 = vmatprep.subr.mxu0 0.0
        %1455 = vmatpush1.msra.mxu0 0.0
        %1456 = vmatprep.subr.mxu0 0.0
        %1457 = vmatpush1.msra.mxu0 %v1421
        %1458 = vmatprep.subr.mxu0 0.0
        %1459 = vmatpush2.msra.mxu0 0.0
        %1460 = vmatprep.subr.mxu0 0.0
        %1461 = vmatpush2.msra.mxu0 0.0
        %1462 = vmatprep.subr.mxu0 0.0
        %1463 = vmatpush2.msra.mxu0 0.0
        %1464 = vmatprep.subr.mxu0 0.0
        %1465 = vmatpush2.msra.mxu0 0.0
        %1466 = vmatprep.subr.mxu0 0.0
        %1467 = vmatpush2.msra.mxu0 0.0
        %1468 = vmatprep.subr.mxu0 0.0
        %1469 = vmatpush2.msra.mxu0 0.0
        %1470 = vmatprep.subr.mxu0 0.0
        %1471 = vmatpush2.msra.mxu0 0.0
        %1472 = vmatprep.subr.mxu0 0.0
        %1473 = vmatpush2.msra.mxu0 0.0
        %1474 = vmatprep.subr.mxu0 0.0
        %1475 = vmatpush2.msra.mxu0 0.0
        %1476 = vmatprep.subr.mxu0 0.0
        %1477 = vmatpush2.msra.mxu0 0.0
        %1478 = vmatprep.subr.mxu0 0.0
        %1479 = vmatpush2.msra.mxu0 0.0
        %1480 = vmatprep.subr.mxu0 0.0
        %1481 = vmatpush2.msra.mxu0 0.0
        %1482 = vmatprep.subr.mxu0 0.0
        %1483 = vmatpush2.msra.mxu0 0.0
        %1484 = vmatprep.subr.mxu0 0.0
        %1485 = vmatpush2.msra.mxu0 0.0
        %1486 = vmatprep.subr.mxu0 0.0
        %1487 = vmatpush2.msra.mxu0 0.0
        %1488 = vmatprep.subr.mxu0 0.0
        %1489 = vmatpush2.msra.mxu0 0.0
        %1490 = vmatprep.mubr.f32.mxu0 0.0
        %1491 = vmatmul.mubr.f32.gmra.mxu0 %v1424
        %v1492 = vpop.f32.mrf.mxu0
        %v1493 = vadd.f32 0.0, %v1492
        %v1494 = vpop.f32.mrf.mxu0
        %1495 = vdwg.mxu0
        %s1496 = scalar_lea.vmem %s608, 8
        %v1497 = vld [vmem:[%s1496] sm:$0xff]
        %v1499 = vsel %vm756, %v1417, 0
        %v1502 = vsel %vm756, %v1493, 0
        %1504 = vmatprep.subr.mxu0 0.0
        %1505 = vmatpush1.msra.mxu0 0.0
        %1506 = vmatprep.subr.mxu0 0.0
        %1507 = vmatpush1.msra.mxu0 0.0
        %1508 = vmatprep.subr.mxu0 0.0
        %1509 = vmatpush1.msra.mxu0 0.0
        %1510 = vmatprep.subr.mxu0 0.0
        %1511 = vmatpush1.msra.mxu0 0.0
        %1512 = vmatprep.subr.mxu0 0.0
        %1513 = vmatpush1.msra.mxu0 0.0
        %1514 = vmatprep.subr.mxu0 0.0
        %1515 = vmatpush1.msra.mxu0 0.0
        %1516 = vmatprep.subr.mxu0 0.0
        %1517 = vmatpush1.msra.mxu0 0.0
        %1518 = vmatprep.subr.mxu0 0.0
        %1519 = vmatpush1.msra.mxu0 0.0
        %1520 = vmatprep.subr.mxu0 0.0
        %1521 = vmatpush1.msra.mxu0 0.0
        %1522 = vmatprep.subr.mxu0 0.0
        %1523 = vmatpush1.msra.mxu0 0.0
        %1524 = vmatprep.subr.mxu0 0.0
        %1525 = vmatpush1.msra.mxu0 0.0
        %1526 = vmatprep.subr.mxu0 0.0
        %1527 = vmatpush1.msra.mxu0 0.0
        %1528 = vmatprep.subr.mxu0 0.0
        %1529 = vmatpush1.msra.mxu0 0.0
        %1530 = vmatprep.subr.mxu0 0.0
        %1531 = vmatpush1.msra.mxu0 0.0
        %1532 = vmatprep.subr.mxu0 0.0
        %1533 = vmatpush1.msra.mxu0 0.0
        %1534 = vmatprep.subr.mxu0 0.0
        %1535 = vmatpush1.msra.mxu0 %v1497
        %1536 = vmatprep.subr.mxu0 0.0
        %1537 = vmatpush2.msra.mxu0 0.0
        %1538 = vmatprep.subr.mxu0 0.0
        %1539 = vmatpush2.msra.mxu0 0.0
        %1540 = vmatprep.subr.mxu0 0.0
        %1541 = vmatpush2.msra.mxu0 0.0
        %1542 = vmatprep.subr.mxu0 0.0
        %1543 = vmatpush2.msra.mxu0 0.0
        %1544 = vmatprep.subr.mxu0 0.0
        %1545 = vmatpush2.msra.mxu0 0.0
        %1546 = vmatprep.subr.mxu0 0.0
        %1547 = vmatpush2.msra.mxu0 0.0
        %1548 = vmatprep.subr.mxu0 0.0
        %1549 = vmatpush2.msra.mxu0 0.0
        %1550 = vmatprep.subr.mxu0 0.0
        %1551 = vmatpush2.msra.mxu0 0.0
        %1552 = vmatprep.subr.mxu0 0.0
        %1553 = vmatpush2.msra.mxu0 0.0
        %1554 = vmatprep.subr.mxu0 0.0
        %1555 = vmatpush2.msra.mxu0 0.0
        %1556 = vmatprep.subr.mxu0 0.0
        %1557 = vmatpush2.msra.mxu0 0.0
        %1558 = vmatprep.subr.mxu0 0.0
        %1559 = vmatpush2.msra.mxu0 0.0
        %1560 = vmatprep.subr.mxu0 0.0
        %1561 = vmatpush2.msra.mxu0 0.0
        %1562 = vmatprep.subr.mxu0 0.0
        %1563 = vmatpush2.msra.mxu0 0.0
        %1564 = vmatprep.subr.mxu0 0.0
        %1565 = vmatpush2.msra.mxu0 0.0
        %1566 = vmatprep.subr.mxu0 0.0
        %1567 = vmatpush2.msra.mxu0 0.0
        %1568 = vmatprep.mubr.f32.mxu0 0.0
        %1569 = vmatmul.mubr.f32.gmra.mxu0 %v1499
        %v1570 = vpop.f32.mrf.mxu0
        %v1571 = vadd.f32 0.0, %v1570
        %v1572 = vpop.f32.mrf.mxu0
        %1573 = vmatprep.mubr.f32.mxu0 0.0
        %1574 = vmatmul.mubr.f32.gmra.mxu0 %v1502
        %v1575 = vpop.f32.mrf.mxu0
        %v1576 = vadd.f32 0.0, %v1575
        %v1577 = vpop.f32.mrf.mxu0
        %1578 = vdwg.mxu0
        %v1579 = vadd.f32 %v1164, %v1571
        %v1580 = vadd.f32 %v1165, %v1576
        %1581 = vrot.lane.b32.xlu0 %v738, 112
        %v1582 = vpop.permute.xlu0 %1581
        %1583 = vrot.lane.b32.xlu0 %v738, 80
        %v1584 = vpop.permute.xlu0 %1583
        %v1585 = vsel %vm756, %v1582, 0
        %v1587 = vsel %vm756, %v1584, 0
        %1589 = vmatprep.subr.mxu0 0.0
        %1590 = vmatpush1.xpose.msra.mxu0 0.0
        %1591 = vmatprep.subr.mxu0 0.0
        %1592 = vmatpush1.xpose.msra.mxu0 0.0
        %1593 = vmatprep.subr.mxu0 0.0
        %1594 = vmatpush1.xpose.msra.mxu0 0.0
        %1595 = vmatprep.subr.mxu0 0.0
        %1596 = vmatpush1.xpose.msra.mxu0 0.0
        %1597 = vmatprep.subr.mxu0 0.0
        %1598 = vmatpush1.xpose.msra.mxu0 0.0
        %1599 = vmatprep.subr.mxu0 0.0
        %1600 = vmatpush1.xpose.msra.mxu0 0.0
        %1601 = vmatprep.subr.mxu0 0.0
        %1602 = vmatpush1.xpose.msra.mxu0 0.0
        %1603 = vmatprep.subr.mxu0 0.0
        %1604 = vmatpush1.xpose.msra.mxu0 0.0
        %1605 = vmatprep.subr.mxu0 0.0
        %1606 = vmatpush1.xpose.msra.mxu0 0.0
        %1607 = vmatprep.subr.mxu0 0.0
        %1608 = vmatpush1.xpose.msra.mxu0 0.0
        %1609 = vmatprep.subr.mxu0 0.0
        %1610 = vmatpush1.xpose.msra.mxu0 0.0
        %1611 = vmatprep.subr.mxu0 0.0
        %1612 = vmatpush1.xpose.msra.mxu0 0.0
        %1613 = vmatprep.subr.mxu0 0.0
        %1614 = vmatpush1.xpose.msra.mxu0 0.0
        %1615 = vmatprep.subr.mxu0 0.0
        %1616 = vmatpush1.xpose.msra.mxu0 0.0
        %1617 = vmatprep.subr.mxu0 0.0
        %1618 = vmatpush1.xpose.msra.mxu0 0.0
        %1619 = vmatprep.subr.mxu0 0.0
        %1620 = vmatpush1.xpose.msra.mxu0 %v1587
        %1621 = vmatprep.subr.mxu0 0.0
        %1622 = vmatpush2.xpose.msra.mxu0 0.0
        %1623 = vmatprep.subr.mxu0 0.0
        %1624 = vmatpush2.xpose.msra.mxu0 0.0
        %1625 = vmatprep.subr.mxu0 0.0
        %1626 = vmatpush2.xpose.msra.mxu0 0.0
        %1627 = vmatprep.subr.mxu0 0.0
        %1628 = vmatpush2.xpose.msra.mxu0 0.0
        %1629 = vmatprep.subr.mxu0 0.0
        %1630 = vmatpush2.xpose.msra.mxu0 0.0
        %1631 = vmatprep.subr.mxu0 0.0
        %1632 = vmatpush2.xpose.msra.mxu0 0.0
        %1633 = vmatprep.subr.mxu0 0.0
        %1634 = vmatpush2.xpose.msra.mxu0 0.0
        %1635 = vmatprep.subr.mxu0 0.0
        %1636 = vmatpush2.xpose.msra.mxu0 0.0
        %1637 = vmatprep.subr.mxu0 0.0
        %1638 = vmatpush2.xpose.msra.mxu0 0.0
        %1639 = vmatprep.subr.mxu0 0.0
        %1640 = vmatpush2.xpose.msra.mxu0 0.0
        %1641 = vmatprep.subr.mxu0 0.0
        %1642 = vmatpush2.xpose.msra.mxu0 0.0
        %1643 = vmatprep.subr.mxu0 0.0
        %1644 = vmatpush2.xpose.msra.mxu0 0.0
        %1645 = vmatprep.subr.mxu0 0.0
        %1646 = vmatpush2.xpose.msra.mxu0 0.0
        %1647 = vmatprep.subr.mxu0 0.0
        %1648 = vmatpush2.xpose.msra.mxu0 0.0
        %1649 = vmatprep.subr.mxu0 0.0
        %1650 = vmatpush2.xpose.msra.mxu0 0.0
        %1651 = vmatprep.subr.mxu0 0.0
        %1652 = vmatpush2.xpose.msra.mxu0 0.0
        %1653 = vmatprep.mubr.f32.mxu0 0.0
        %1654 = vmatmul.mubr.f32.gmra.mxu0 %v1585
        %v1655 = vpop.f32.mrf.mxu0
        %v1656 = vadd.f32 0.0, %v1655
        %v1657 = vpop.f32.mrf.mxu0
        %1658 = vdwg.mxu0
        %1659 = vrot.lane.b32.xlu0 %v743, 112
        %v1660 = vpop.permute.xlu0 %1659
        %1661 = vrot.lane.b32.xlu0 %v743, 80
        %v1662 = vpop.permute.xlu0 %1661
        %v1663 = vsel %vm756, %v1660, 0
        %v1665 = vsel %vm756, %v1662, 0
        %1667 = vmatprep.subr.mxu0 0.0
        %1668 = vmatpush1.xpose.msra.mxu0 0.0
        %1669 = vmatprep.subr.mxu0 0.0
        %1670 = vmatpush1.xpose.msra.mxu0 0.0
        %1671 = vmatprep.subr.mxu0 0.0
        %1672 = vmatpush1.xpose.msra.mxu0 0.0
        %1673 = vmatprep.subr.mxu0 0.0
        %1674 = vmatpush1.xpose.msra.mxu0 0.0
        %1675 = vmatprep.subr.mxu0 0.0
        %1676 = vmatpush1.xpose.msra.mxu0 0.0
        %1677 = vmatprep.subr.mxu0 0.0
        %1678 = vmatpush1.xpose.msra.mxu0 0.0
        %1679 = vmatprep.subr.mxu0 0.0
        %1680 = vmatpush1.xpose.msra.mxu0 0.0
        %1681 = vmatprep.subr.mxu0 0.0
        %1682 = vmatpush1.xpose.msra.mxu0 0.0
        %1683 = vmatprep.subr.mxu0 0.0
        %1684 = vmatpush1.xpose.msra.mxu0 0.0
        %1685 = vmatprep.subr.mxu0 0.0
        %1686 = vmatpush1.xpose.msra.mxu0 0.0
        %1687 = vmatprep.subr.mxu0 0.0
        %1688 = vmatpush1.xpose.msra.mxu0 0.0
        %1689 = vmatprep.subr.mxu0 0.0
        %1690 = vmatpush1.xpose.msra.mxu0 0.0
        %1691 = vmatprep.subr.mxu0 0.0
        %1692 = vmatpush1.xpose.msra.mxu0 0.0
        %1693 = vmatprep.subr.mxu0 0.0
        %1694 = vmatpush1.xpose.msra.mxu0 0.0
        %1695 = vmatprep.subr.mxu0 0.0
        %1696 = vmatpush1.xpose.msra.mxu0 0.0
        %1697 = vmatprep.subr.mxu0 0.0
        %1698 = vmatpush1.xpose.msra.mxu0 %v1665
        %1699 = vmatprep.subr.mxu0 0.0
        %1700 = vmatpush2.xpose.msra.mxu0 0.0
        %1701 = vmatprep.subr.mxu0 0.0
        %1702 = vmatpush2.xpose.msra.mxu0 0.0
        %1703 = vmatprep.subr.mxu0 0.0
        %1704 = vmatpush2.xpose.msra.mxu0 0.0
        %1705 = vmatprep.subr.mxu0 0.0
        %1706 = vmatpush2.xpose.msra.mxu0 0.0
        %1707 = vmatprep.subr.mxu0 0.0
        %1708 = vmatpush2.xpose.msra.mxu0 0.0
        %1709 = vmatprep.subr.mxu0 0.0
        %1710 = vmatpush2.xpose.msra.mxu0 0.0
        %1711 = vmatprep.subr.mxu0 0.0
        %1712 = vmatpush2.xpose.msra.mxu0 0.0
        %1713 = vmatprep.subr.mxu0 0.0
        %1714 = vmatpush2.xpose.msra.mxu0 0.0
        %1715 = vmatprep.subr.mxu0 0.0
        %1716 = vmatpush2.xpose.msra.mxu0 0.0
        %1717 = vmatprep.subr.mxu0 0.0
        %1718 = vmatpush2.xpose.msra.mxu0 0.0
        %1719 = vmatprep.subr.mxu0 0.0
        %1720 = vmatpush2.xpose.msra.mxu0 0.0
        %1721 = vmatprep.subr.mxu0 0.0
        %1722 = vmatpush2.xpose.msra.mxu0 0.0
        %1723 = vmatprep.subr.mxu0 0.0
        %1724 = vmatpush2.xpose.msra.mxu0 0.0
        %1725 = vmatprep.subr.mxu0 0.0
        %1726 = vmatpush2.xpose.msra.mxu0 0.0
        %1727 = vmatprep.subr.mxu0 0.0
        %1728 = vmatpush2.xpose.msra.mxu0 0.0
        %1729 = vmatprep.subr.mxu0 0.0
        %1730 = vmatpush2.xpose.msra.mxu0 0.0
        %1731 = vmatprep.mubr.f32.mxu0 0.0
        %1732 = vmatmul.mubr.f32.gmra.mxu0 %v1663
        %v1733 = vpop.f32.mrf.mxu0
        %v1734 = vadd.f32 0.0, %v1733
        %v1735 = vpop.f32.mrf.mxu0
        %1736 = vdwg.mxu0
        %v1737 = vsel %vm756, %v1656, -inf
        %1738 = vmax.xlane.f32.xlu0 %v1737
        %v1739 = vpop.xlane.xlu0 %1738
        %v1740 = vsel %vm756, %v1734, -inf
        %1741 = vmax.xlane.f32.xlu0 %v1740
        %v1742 = vpop.xlane.xlu0 %1741
        %v1743 = vsub.f32 %v1656, %v1739
        %v1744 = vsub.f32 %v1734, %v1742
        %v1745 = vmul.f32 %v1743, 1.442695
        %v1746 = vpow.pop %v1745
        %v1747 = vmul.f32 %v1744, 1.442695
        %v1748 = vpow.pop %v1747
        %v1749 = vsel %vm756, %v1746, 0.0
        %1750 = vadd.xlane.f32.xlu0 %v1749
        %v1751 = vpop.xlane.xlu0 %1750
        %v1752 = vsel %vm756, %v1748, 0.0
        %1753 = vadd.xlane.f32.xlu0 %v1752
        %v1754 = vpop.xlane.xlu0 %1753
        %v1755 = vrcp.pop %v1751
        %v1756 = vrcp.pop %v1754
        %v1757 = vmul.f32 %v1746, %v1755
        %v1758 = vmul.f32 %v1748, %v1756
        %1759 = vrot.lane.b32.xlu0 %v738, 48
        %v1760 = vpop.permute.xlu0 %1759
        %v1763 = vsel %vm756, %v1757, 0
        %1765 = vmatprep.subr.mxu0 0.0
        %1766 = vmatpush1.msra.mxu0 0.0
        %1767 = vmatprep.subr.mxu0 0.0
        %1768 = vmatpush1.msra.mxu0 0.0
        %1769 = vmatprep.subr.mxu0 0.0
        %1770 = vmatpush1.msra.mxu0 0.0
        %1771 = vmatprep.subr.mxu0 0.0
        %1772 = vmatpush1.msra.mxu0 0.0
        %1773 = vmatprep.subr.mxu0 0.0
        %1774 = vmatpush1.msra.mxu0 0.0
        %1775 = vmatprep.subr.mxu0 0.0
        %1776 = vmatpush1.msra.mxu0 0.0
        %1777 = vmatprep.subr.mxu0 0.0
        %1778 = vmatpush1.msra.mxu0 0.0
        %1779 = vmatprep.subr.mxu0 0.0
        %1780 = vmatpush1.msra.mxu0 0.0
        %1781 = vmatprep.subr.mxu0 0.0
        %1782 = vmatpush1.msra.mxu0 0.0
        %1783 = vmatprep.subr.mxu0 0.0
        %1784 = vmatpush1.msra.mxu0 0.0
        %1785 = vmatprep.subr.mxu0 0.0
        %1786 = vmatpush1.msra.mxu0 0.0
        %1787 = vmatprep.subr.mxu0 0.0
        %1788 = vmatpush1.msra.mxu0 0.0
        %1789 = vmatprep.subr.mxu0 0.0
        %1790 = vmatpush1.msra.mxu0 0.0
        %1791 = vmatprep.subr.mxu0 0.0
        %1792 = vmatpush1.msra.mxu0 0.0
        %1793 = vmatprep.subr.mxu0 0.0
        %1794 = vmatpush1.msra.mxu0 0.0
        %1795 = vmatprep.subr.mxu0 0.0
        %1796 = vmatpush1.msra.mxu0 %v1760
        %1797 = vmatprep.subr.mxu0 0.0
        %1798 = vmatpush2.msra.mxu0 0.0
        %1799 = vmatprep.subr.mxu0 0.0
        %1800 = vmatpush2.msra.mxu0 0.0
        %1801 = vmatprep.subr.mxu0 0.0
        %1802 = vmatpush2.msra.mxu0 0.0
        %1803 = vmatprep.subr.mxu0 0.0
        %1804 = vmatpush2.msra.mxu0 0.0
        %1805 = vmatprep.subr.mxu0 0.0
        %1806 = vmatpush2.msra.mxu0 0.0
        %1807 = vmatprep.subr.mxu0 0.0
        %1808 = vmatpush2.msra.mxu0 0.0
        %1809 = vmatprep.subr.mxu0 0.0
        %1810 = vmatpush2.msra.mxu0 0.0
        %1811 = vmatprep.subr.mxu0 0.0
        %1812 = vmatpush2.msra.mxu0 0.0
        %1813 = vmatprep.subr.mxu0 0.0
        %1814 = vmatpush2.msra.mxu0 0.0
        %1815 = vmatprep.subr.mxu0 0.0
        %1816 = vmatpush2.msra.mxu0 0.0
        %1817 = vmatprep.subr.mxu0 0.0
        %1818 = vmatpush2.msra.mxu0 0.0
        %1819 = vmatprep.subr.mxu0 0.0
        %1820 = vmatpush2.msra.mxu0 0.0
        %1821 = vmatprep.subr.mxu0 0.0
        %1822 = vmatpush2.msra.mxu0 0.0
        %1823 = vmatprep.subr.mxu0 0.0
        %1824 = vmatpush2.msra.mxu0 0.0
        %1825 = vmatprep.subr.mxu0 0.0
        %1826 = vmatpush2.msra.mxu0 0.0
        %1827 = vmatprep.subr.mxu0 0.0
        %1828 = vmatpush2.msra.mxu0 0.0
        %1829 = vmatprep.mubr.f32.mxu0 0.0
        %1830 = vmatmul.mubr.f32.gmra.mxu0 %v1763
        %v1831 = vpop.f32.mrf.mxu0
        %v1832 = vadd.f32 0.0, %v1831
        %v1833 = vpop.f32.mrf.mxu0
        %1834 = vdwg.mxu0
        %1835 = vrot.lane.b32.xlu0 %v743, 48
        %v1836 = vpop.permute.xlu0 %1835
        %v1839 = vsel %vm756, %v1758, 0
        %1841 = vmatprep.subr.mxu0 0.0
        %1842 = vmatpush1.msra.mxu0 0.0
        %1843 = vmatprep.subr.mxu0 0.0
        %1844 = vmatpush1.msra.mxu0 0.0
        %1845 = vmatprep.subr.mxu0 0.0
        %1846 = vmatpush1.msra.mxu0 0.0
        %1847 = vmatprep.subr.mxu0 0.0
        %1848 = vmatpush1.msra.mxu0 0.0
        %1849 = vmatprep.subr.mxu0 0.0
        %1850 = vmatpush1.msra.mxu0 0.0
        %1851 = vmatprep.subr.mxu0 0.0
        %1852 = vmatpush1.msra.mxu0 0.0
        %1853 = vmatprep.subr.mxu0 0.0
        %1854 = vmatpush1.msra.mxu0 0.0
        %1855 = vmatprep.subr.mxu0 0.0
        %1856 = vmatpush1.msra.mxu0 0.0
        %1857 = vmatprep.subr.mxu0 0.0
        %1858 = vmatpush1.msra.mxu0 0.0
        %1859 = vmatprep.subr.mxu0 0.0
        %1860 = vmatpush1.msra.mxu0 0.0
        %1861 = vmatprep.subr.mxu0 0.0
        %1862 = vmatpush1.msra.mxu0 0.0
        %1863 = vmatprep.subr.mxu0 0.0
        %1864 = vmatpush1.msra.mxu0 0.0
        %1865 = vmatprep.subr.mxu0 0.0
        %1866 = vmatpush1.msra.mxu0 0.0
        %1867 = vmatprep.subr.mxu0 0.0
        %1868 = vmatpush1.msra.mxu0 0.0
        %1869 = vmatprep.subr.mxu0 0.0
        %1870 = vmatpush1.msra.mxu0 0.0
        %1871 = vmatprep.subr.mxu0 0.0
        %1872 = vmatpush1.msra.mxu0 %v1836
        %1873 = vmatprep.subr.mxu0 0.0
        %1874 = vmatpush2.msra.mxu0 0.0
        %1875 = vmatprep.subr.mxu0 0.0
        %1876 = vmatpush2.msra.mxu0 0.0
        %1877 = vmatprep.subr.mxu0 0.0
        %1878 = vmatpush2.msra.mxu0 0.0
        %1879 = vmatprep.subr.mxu0 0.0
        %1880 = vmatpush2.msra.mxu0 0.0
        %1881 = vmatprep.subr.mxu0 0.0
        %1882 = vmatpush2.msra.mxu0 0.0
        %1883 = vmatprep.subr.mxu0 0.0
        %1884 = vmatpush2.msra.mxu0 0.0
        %1885 = vmatprep.subr.mxu0 0.0
        %1886 = vmatpush2.msra.mxu0 0.0
        %1887 = vmatprep.subr.mxu0 0.0
        %1888 = vmatpush2.msra.mxu0 0.0
        %1889 = vmatprep.subr.mxu0 0.0
        %1890 = vmatpush2.msra.mxu0 0.0
        %1891 = vmatprep.subr.mxu0 0.0
        %1892 = vmatpush2.msra.mxu0 0.0
        %1893 = vmatprep.subr.mxu0 0.0
        %1894 = vmatpush2.msra.mxu0 0.0
        %1895 = vmatprep.subr.mxu0 0.0
        %1896 = vmatpush2.msra.mxu0 0.0
        %1897 = vmatprep.subr.mxu0 0.0
        %1898 = vmatpush2.msra.mxu0 0.0
        %1899 = vmatprep.subr.mxu0 0.0
        %1900 = vmatpush2.msra.mxu0 0.0
        %1901 = vmatprep.subr.mxu0 0.0
        %1902 = vmatpush2.msra.mxu0 0.0
        %1903 = vmatprep.subr.mxu0 0.0
        %1904 = vmatpush2.msra.mxu0 0.0
        %1905 = vmatprep.mubr.f32.mxu0 0.0
        %1906 = vmatmul.mubr.f32.gmra.mxu0 %v1839
        %v1907 = vpop.f32.mrf.mxu0
        %v1908 = vadd.f32 0.0, %v1907
        %v1909 = vpop.f32.mrf.mxu0
        %1910 = vdwg.mxu0
        %s1911 = scalar_lea.vmem %s608, 16
        %v1912 = vld [vmem:[%s1911] sm:$0xff]
        %v1914 = vsel %vm756, %v1832, 0
        %v1917 = vsel %vm756, %v1908, 0
        %1919 = vmatprep.subr.mxu0 0.0
        %1920 = vmatpush1.msra.mxu0 0.0
        %1921 = vmatprep.subr.mxu0 0.0
        %1922 = vmatpush1.msra.mxu0 0.0
        %1923 = vmatprep.subr.mxu0 0.0
        %1924 = vmatpush1.msra.mxu0 0.0
        %1925 = vmatprep.subr.mxu0 0.0
        %1926 = vmatpush1.msra.mxu0 0.0
        %1927 = vmatprep.subr.mxu0 0.0
        %1928 = vmatpush1.msra.mxu0 0.0
        %1929 = vmatprep.subr.mxu0 0.0
        %1930 = vmatpush1.msra.mxu0 0.0
        %1931 = vmatprep.subr.mxu0 0.0
        %1932 = vmatpush1.msra.mxu0 0.0
        %1933 = vmatprep.subr.mxu0 0.0
        %1934 = vmatpush1.msra.mxu0 0.0
        %1935 = vmatprep.subr.mxu0 0.0
        %1936 = vmatpush1.msra.mxu0 0.0
        %1937 = vmatprep.subr.mxu0 0.0
        %1938 = vmatpush1.msra.mxu0 0.0
        %1939 = vmatprep.subr.mxu0 0.0
        %1940 = vmatpush1.msra.mxu0 0.0
        %1941 = vmatprep.subr.mxu0 0.0
        %1942 = vmatpush1.msra.mxu0 0.0
        %1943 = vmatprep.subr.mxu0 0.0
        %1944 = vmatpush1.msra.mxu0 0.0
        %1945 = vmatprep.subr.mxu0 0.0
        %1946 = vmatpush1.msra.mxu0 0.0
        %1947 = vmatprep.subr.mxu0 0.0
        %1948 = vmatpush1.msra.mxu0 0.0
        %1949 = vmatprep.subr.mxu0 0.0
        %1950 = vmatpush1.msra.mxu0 %v1912
        %1951 = vmatprep.subr.mxu0 0.0
        %1952 = vmatpush2.msra.mxu0 0.0
        %1953 = vmatprep.subr.mxu0 0.0
        %1954 = vmatpush2.msra.mxu0 0.0
        %1955 = vmatprep.subr.mxu0 0.0
        %1956 = vmatpush2.msra.mxu0 0.0
        %1957 = vmatprep.subr.mxu0 0.0
        %1958 = vmatpush2.msra.mxu0 0.0
        %1959 = vmatprep.subr.mxu0 0.0
        %1960 = vmatpush2.msra.mxu0 0.0
        %1961 = vmatprep.subr.mxu0 0.0
        %1962 = vmatpush2.msra.mxu0 0.0
        %1963 = vmatprep.subr.mxu0 0.0
        %1964 = vmatpush2.msra.mxu0 0.0
        %1965 = vmatprep.subr.mxu0 0.0
        %1966 = vmatpush2.msra.mxu0 0.0
        %1967 = vmatprep.subr.mxu0 0.0
        %1968 = vmatpush2.msra.mxu0 0.0
        %1969 = vmatprep.subr.mxu0 0.0
        %1970 = vmatpush2.msra.mxu0 0.0
        %1971 = vmatprep.subr.mxu0 0.0
        %1972 = vmatpush2.msra.mxu0 0.0
        %1973 = vmatprep.subr.mxu0 0.0
        %1974 = vmatpush2.msra.mxu0 0.0
        %1975 = vmatprep.subr.mxu0 0.0
        %1976 = vmatpush2.msra.mxu0 0.0
        %1977 = vmatprep.subr.mxu0 0.0
        %1978 = vmatpush2.msra.mxu0 0.0
        %1979 = vmatprep.subr.mxu0 0.0
        %1980 = vmatpush2.msra.mxu0 0.0
        %1981 = vmatprep.subr.mxu0 0.0
        %1982 = vmatpush2.msra.mxu0 0.0
        %1983 = vmatprep.mubr.f32.mxu0 0.0
        %1984 = vmatmul.mubr.f32.gmra.mxu0 %v1914
        %v1985 = vpop.f32.mrf.mxu0
        %v1986 = vadd.f32 0.0, %v1985
        %v1987 = vpop.f32.mrf.mxu0
        %1988 = vmatprep.mubr.f32.mxu0 0.0
        %1989 = vmatmul.mubr.f32.gmra.mxu0 %v1917
        %v1990 = vpop.f32.mrf.mxu0
        %v1991 = vadd.f32 0.0, %v1990
        %v1992 = vpop.f32.mrf.mxu0
        %1993 = vdwg.mxu0
        %v1994 = vadd.f32 %v1579, %v1986
        %v1995 = vadd.f32 %v1580, %v1991
        %1996 = vrot.lane.b32.xlu0 %v738, 104
        %v1997 = vpop.permute.xlu0 %1996
        %1998 = vrot.lane.b32.xlu0 %v738, 72
        %v1999 = vpop.permute.xlu0 %1998
        %v2000 = vsel %vm756, %v1997, 0
        %v2002 = vsel %vm756, %v1999, 0
        %2004 = vmatprep.subr.mxu0 0.0
        %2005 = vmatpush1.xpose.msra.mxu0 0.0
        %2006 = vmatprep.subr.mxu0 0.0
        %2007 = vmatpush1.xpose.msra.mxu0 0.0
        %2008 = vmatprep.subr.mxu0 0.0
        %2009 = vmatpush1.xpose.msra.mxu0 0.0
        %2010 = vmatprep.subr.mxu0 0.0
        %2011 = vmatpush1.xpose.msra.mxu0 0.0
        %2012 = vmatprep.subr.mxu0 0.0
        %2013 = vmatpush1.xpose.msra.mxu0 0.0
        %2014 = vmatprep.subr.mxu0 0.0
        %2015 = vmatpush1.xpose.msra.mxu0 0.0
        %2016 = vmatprep.subr.mxu0 0.0
        %2017 = vmatpush1.xpose.msra.mxu0 0.0
        %2018 = vmatprep.subr.mxu0 0.0
        %2019 = vmatpush1.xpose.msra.mxu0 0.0
        %2020 = vmatprep.subr.mxu0 0.0
        %2021 = vmatpush1.xpose.msra.mxu0 0.0
        %2022 = vmatprep.subr.mxu0 0.0
        %2023 = vmatpush1.xpose.msra.mxu0 0.0
        %2024 = vmatprep.subr.mxu0 0.0
        %2025 = vmatpush1.xpose.msra.mxu0 0.0
        %2026 = vmatprep.subr.mxu0 0.0
        %2027 = vmatpush1.xpose.msra.mxu0 0.0
        %2028 = vmatprep.subr.mxu0 0.0
        %2029 = vmatpush1.xpose.msra.mxu0 0.0
        %2030 = vmatprep.subr.mxu0 0.0
        %2031 = vmatpush1.xpose.msra.mxu0 0.0
        %2032 = vmatprep.subr.mxu0 0.0
        %2033 = vmatpush1.xpose.msra.mxu0 0.0
        %2034 = vmatprep.subr.mxu0 0.0
        %2035 = vmatpush1.xpose.msra.mxu0 %v2002
        %2036 = vmatprep.subr.mxu0 0.0
        %2037 = vmatpush2.xpose.msra.mxu0 0.0
        %2038 = vmatprep.subr.mxu0 0.0
        %2039 = vmatpush2.xpose.msra.mxu0 0.0
        %2040 = vmatprep.subr.mxu0 0.0
        %2041 = vmatpush2.xpose.msra.mxu0 0.0
        %2042 = vmatprep.subr.mxu0 0.0
        %2043 = vmatpush2.xpose.msra.mxu0 0.0
        %2044 = vmatprep.subr.mxu0 0.0
        %2045 = vmatpush2.xpose.msra.mxu0 0.0
        %2046 = vmatprep.subr.mxu0 0.0
        %2047 = vmatpush2.xpose.msra.mxu0 0.0
        %2048 = vmatprep.subr.mxu0 0.0
        %2049 = vmatpush2.xpose.msra.mxu0 0.0
        %2050 = vmatprep.subr.mxu0 0.0
        %2051 = vmatpush2.xpose.msra.mxu0 0.0
        %2052 = vmatprep.subr.mxu0 0.0
        %2053 = vmatpush2.xpose.msra.mxu0 0.0
        %2054 = vmatprep.subr.mxu0 0.0
        %2055 = vmatpush2.xpose.msra.mxu0 0.0
        %2056 = vmatprep.subr.mxu0 0.0
        %2057 = vmatpush2.xpose.msra.mxu0 0.0
        %2058 = vmatprep.subr.mxu0 0.0
        %2059 = vmatpush2.xpose.msra.mxu0 0.0
        %2060 = vmatprep.subr.mxu0 0.0
        %2061 = vmatpush2.xpose.msra.mxu0 0.0
        %2062 = vmatprep.subr.mxu0 0.0
        %2063 = vmatpush2.xpose.msra.mxu0 0.0
        %2064 = vmatprep.subr.mxu0 0.0
        %2065 = vmatpush2.xpose.msra.mxu0 0.0
        %2066 = vmatprep.subr.mxu0 0.0
        %2067 = vmatpush2.xpose.msra.mxu0 0.0
        %2068 = vmatprep.mubr.f32.mxu0 0.0
        %2069 = vmatmul.mubr.f32.gmra.mxu0 %v2000
        %v2070 = vpop.f32.mrf.mxu0
        %v2071 = vadd.f32 0.0, %v2070
        %v2072 = vpop.f32.mrf.mxu0
        %2073 = vdwg.mxu0
        %2074 = vrot.lane.b32.xlu0 %v743, 104
        %v2075 = vpop.permute.xlu0 %2074
        %2076 = vrot.lane.b32.xlu0 %v743, 72
        %v2077 = vpop.permute.xlu0 %2076
        %v2078 = vsel %vm756, %v2075, 0
        %v2080 = vsel %vm756, %v2077, 0
        %2082 = vmatprep.subr.mxu0 0.0
        %2083 = vmatpush1.xpose.msra.mxu0 0.0
        %2084 = vmatprep.subr.mxu0 0.0
        %2085 = vmatpush1.xpose.msra.mxu0 0.0
        %2086 = vmatprep.subr.mxu0 0.0
        %2087 = vmatpush1.xpose.msra.mxu0 0.0
        %2088 = vmatprep.subr.mxu0 0.0
        %2089 = vmatpush1.xpose.msra.mxu0 0.0
        %2090 = vmatprep.subr.mxu0 0.0
        %2091 = vmatpush1.xpose.msra.mxu0 0.0
        %2092 = vmatprep.subr.mxu0 0.0
        %2093 = vmatpush1.xpose.msra.mxu0 0.0
        %2094 = vmatprep.subr.mxu0 0.0
        %2095 = vmatpush1.xpose.msra.mxu0 0.0
        %2096 = vmatprep.subr.mxu0 0.0
        %2097 = vmatpush1.xpose.msra.mxu0 0.0
        %2098 = vmatprep.subr.mxu0 0.0
        %2099 = vmatpush1.xpose.msra.mxu0 0.0
        %2100 = vmatprep.subr.mxu0 0.0
        %2101 = vmatpush1.xpose.msra.mxu0 0.0
        %2102 = vmatprep.subr.mxu0 0.0
        %2103 = vmatpush1.xpose.msra.mxu0 0.0
        %2104 = vmatprep.subr.mxu0 0.0
        %2105 = vmatpush1.xpose.msra.mxu0 0.0
        %2106 = vmatprep.subr.mxu0 0.0
        %2107 = vmatpush1.xpose.msra.mxu0 0.0
        %2108 = vmatprep.subr.mxu0 0.0
        %2109 = vmatpush1.xpose.msra.mxu0 0.0
        %2110 = vmatprep.subr.mxu0 0.0
        %2111 = vmatpush1.xpose.msra.mxu0 0.0
        %2112 = vmatprep.subr.mxu0 0.0
        %2113 = vmatpush1.xpose.msra.mxu0 %v2080
        %2114 = vmatprep.subr.mxu0 0.0
        %2115 = vmatpush2.xpose.msra.mxu0 0.0
        %2116 = vmatprep.subr.mxu0 0.0
        %2117 = vmatpush2.xpose.msra.mxu0 0.0
        %2118 = vmatprep.subr.mxu0 0.0
        %2119 = vmatpush2.xpose.msra.mxu0 0.0
        %2120 = vmatprep.subr.mxu0 0.0
        %2121 = vmatpush2.xpose.msra.mxu0 0.0
        %2122 = vmatprep.subr.mxu0 0.0
        %2123 = vmatpush2.xpose.msra.mxu0 0.0
        %2124 = vmatprep.subr.mxu0 0.0
        %2125 = vmatpush2.xpose.msra.mxu0 0.0
        %2126 = vmatprep.subr.mxu0 0.0
        %2127 = vmatpush2.xpose.msra.mxu0 0.0
        %2128 = vmatprep.subr.mxu0 0.0
        %2129 = vmatpush2.xpose.msra.mxu0 0.0
        %2130 = vmatprep.subr.mxu0 0.0
        %2131 = vmatpush2.xpose.msra.mxu0 0.0
        %2132 = vmatprep.subr.mxu0 0.0
        %2133 = vmatpush2.xpose.msra.mxu0 0.0
        %2134 = vmatprep.subr.mxu0 0.0
        %2135 = vmatpush2.xpose.msra.mxu0 0.0
        %2136 = vmatprep.subr.mxu0 0.0
        %2137 = vmatpush2.xpose.msra.mxu0 0.0
        %2138 = vmatprep.subr.mxu0 0.0
        %2139 = vmatpush2.xpose.msra.mxu0 0.0
        %2140 = vmatprep.subr.mxu0 0.0
        %2141 = vmatpush2.xpose.msra.mxu0 0.0
        %2142 = vmatprep.subr.mxu0 0.0
        %2143 = vmatpush2.xpose.msra.mxu0 0.0
        %2144 = vmatprep.subr.mxu0 0.0
        %2145 = vmatpush2.xpose.msra.mxu0 0.0
        %2146 = vmatprep.mubr.f32.mxu0 0.0
        %2147 = vmatmul.mubr.f32.gmra.mxu0 %v2078
        %v2148 = vpop.f32.mrf.mxu0
        %v2149 = vadd.f32 0.0, %v2148
        %v2150 = vpop.f32.mrf.mxu0
        %2151 = vdwg.mxu0
        %v2152 = vsel %vm756, %v2071, -inf
        %2153 = vmax.xlane.f32.xlu0 %v2152
        %v2154 = vpop.xlane.xlu0 %2153
        %v2155 = vsel %vm756, %v2149, -inf
        %2156 = vmax.xlane.f32.xlu0 %v2155
        %v2157 = vpop.xlane.xlu0 %2156
        %v2158 = vsub.f32 %v2071, %v2154
        %v2159 = vsub.f32 %v2149, %v2157
        %v2160 = vmul.f32 %v2158, 1.442695
        %v2161 = vpow.pop %v2160
        %v2162 = vmul.f32 %v2159, 1.442695
        %v2163 = vpow.pop %v2162
        %v2164 = vsel %vm756, %v2161, 0.0
        %2165 = vadd.xlane.f32.xlu0 %v2164
        %v2166 = vpop.xlane.xlu0 %2165
        %v2167 = vsel %vm756, %v2163, 0.0
        %2168 = vadd.xlane.f32.xlu0 %v2167
        %v2169 = vpop.xlane.xlu0 %2168
        %v2170 = vrcp.pop %v2166
        %v2171 = vrcp.pop %v2169
        %v2172 = vmul.f32 %v2161, %v2170
        %v2173 = vmul.f32 %v2163, %v2171
        %2174 = vrot.lane.b32.xlu0 %v738, 40
        %v2175 = vpop.permute.xlu0 %2174
        %v2178 = vsel %vm756, %v2172, 0
        %2180 = vmatprep.subr.mxu0 0.0
        %2181 = vmatpush1.msra.mxu0 0.0
        %2182 = vmatprep.subr.mxu0 0.0
        %2183 = vmatpush1.msra.mxu0 0.0
        %2184 = vmatprep.subr.mxu0 0.0
        %2185 = vmatpush1.msra.mxu0 0.0
        %2186 = vmatprep.subr.mxu0 0.0
        %2187 = vmatpush1.msra.mxu0 0.0
        %2188 = vmatprep.subr.mxu0 0.0
        %2189 = vmatpush1.msra.mxu0 0.0
        %2190 = vmatprep.subr.mxu0 0.0
        %2191 = vmatpush1.msra.mxu0 0.0
        %2192 = vmatprep.subr.mxu0 0.0
        %2193 = vmatpush1.msra.mxu0 0.0
        %2194 = vmatprep.subr.mxu0 0.0
        %2195 = vmatpush1.msra.mxu0 0.0
        %2196 = vmatprep.subr.mxu0 0.0
        %2197 = vmatpush1.msra.mxu0 0.0
        %2198 = vmatprep.subr.mxu0 0.0
        %2199 = vmatpush1.msra.mxu0 0.0
        %2200 = vmatprep.subr.mxu0 0.0
        %2201 = vmatpush1.msra.mxu0 0.0
        %2202 = vmatprep.subr.mxu0 0.0
        %2203 = vmatpush1.msra.mxu0 0.0
        %2204 = vmatprep.subr.mxu0 0.0
        %2205 = vmatpush1.msra.mxu0 0.0
        %2206 = vmatprep.subr.mxu0 0.0
        %2207 = vmatpush1.msra.mxu0 0.0
        %2208 = vmatprep.subr.mxu0 0.0
        %2209 = vmatpush1.msra.mxu0 0.0
        %2210 = vmatprep.subr.mxu0 0.0
        %2211 = vmatpush1.msra.mxu0 %v2175
        %2212 = vmatprep.subr.mxu0 0.0
        %2213 = vmatpush2.msra.mxu0 0.0
        %2214 = vmatprep.subr.mxu0 0.0
        %2215 = vmatpush2.msra.mxu0 0.0
        %2216 = vmatprep.subr.mxu0 0.0
        %2217 = vmatpush2.msra.mxu0 0.0
        %2218 = vmatprep.subr.mxu0 0.0
        %2219 = vmatpush2.msra.mxu0 0.0
        %2220 = vmatprep.subr.mxu0 0.0
        %2221 = vmatpush2.msra.mxu0 0.0
        %2222 = vmatprep.subr.mxu0 0.0
        %2223 = vmatpush2.msra.mxu0 0.0
        %2224 = vmatprep.subr.mxu0 0.0
        %2225 = vmatpush2.msra.mxu0 0.0
        %2226 = vmatprep.subr.mxu0 0.0
        %2227 = vmatpush2.msra.mxu0 0.0
        %2228 = vmatprep.subr.mxu0 0.0
        %2229 = vmatpush2.msra.mxu0 0.0
        %2230 = vmatprep.subr.mxu0 0.0
        %2231 = vmatpush2.msra.mxu0 0.0
        %2232 = vmatprep.subr.mxu0 0.0
        %2233 = vmatpush2.msra.mxu0 0.0
        %2234 = vmatprep.subr.mxu0 0.0
        %2235 = vmatpush2.msra.mxu0 0.0
        %2236 = vmatprep.subr.mxu0 0.0
        %2237 = vmatpush2.msra.mxu0 0.0
        %2238 = vmatprep.subr.mxu0 0.0
        %2239 = vmatpush2.msra.mxu0 0.0
        %2240 = vmatprep.subr.mxu0 0.0
        %2241 = vmatpush2.msra.mxu0 0.0
        %2242 = vmatprep.subr.mxu0 0.0
        %2243 = vmatpush2.msra.mxu0 0.0
        %2244 = vmatprep.mubr.f32.mxu0 0.0
        %2245 = vmatmul.mubr.f32.gmra.mxu0 %v2178
        %v2246 = vpop.f32.mrf.mxu0
        %v2247 = vadd.f32 0.0, %v2246
        %v2248 = vpop.f32.mrf.mxu0
        %2249 = vdwg.mxu0
        %2250 = vrot.lane.b32.xlu0 %v743, 40
        %v2251 = vpop.permute.xlu0 %2250
        %v2254 = vsel %vm756, %v2173, 0
        %2256 = vmatprep.subr.mxu0 0.0
        %2257 = vmatpush1.msra.mxu0 0.0
        %2258 = vmatprep.subr.mxu0 0.0
        %2259 = vmatpush1.msra.mxu0 0.0
        %2260 = vmatprep.subr.mxu0 0.0
        %2261 = vmatpush1.msra.mxu0 0.0
        %2262 = vmatprep.subr.mxu0 0.0
        %2263 = vmatpush1.msra.mxu0 0.0
        %2264 = vmatprep.subr.mxu0 0.0
        %2265 = vmatpush1.msra.mxu0 0.0
        %2266 = vmatprep.subr.mxu0 0.0
        %2267 = vmatpush1.msra.mxu0 0.0
        %2268 = vmatprep.subr.mxu0 0.0
        %2269 = vmatpush1.msra.mxu0 0.0
        %2270 = vmatprep.subr.mxu0 0.0
        %2271 = vmatpush1.msra.mxu0 0.0
        %2272 = vmatprep.subr.mxu0 0.0
        %2273 = vmatpush1.msra.mxu0 0.0
        %2274 = vmatprep.subr.mxu0 0.0
        %2275 = vmatpush1.msra.mxu0 0.0
        %2276 = vmatprep.subr.mxu0 0.0
        %2277 = vmatpush1.msra.mxu0 0.0
        %2278 = vmatprep.subr.mxu0 0.0
        %2279 = vmatpush1.msra.mxu0 0.0
        %2280 = vmatprep.subr.mxu0 0.0
        %2281 = vmatpush1.msra.mxu0 0.0
        %2282 = vmatprep.subr.mxu0 0.0
        %2283 = vmatpush1.msra.mxu0 0.0
        %2284 = vmatprep.subr.mxu0 0.0
        %2285 = vmatpush1.msra.mxu0 0.0
        %2286 = vmatprep.subr.mxu0 0.0
        %2287 = vmatpush1.msra.mxu0 %v2251
        %2288 = vmatprep.subr.mxu0 0.0
        %2289 = vmatpush2.msra.mxu0 0.0
        %2290 = vmatprep.subr.mxu0 0.0
        %2291 = vmatpush2.msra.mxu0 0.0
        %2292 = vmatprep.subr.mxu0 0.0
        %2293 = vmatpush2.msra.mxu0 0.0
        %2294 = vmatprep.subr.mxu0 0.0
        %2295 = vmatpush2.msra.mxu0 0.0
        %2296 = vmatprep.subr.mxu0 0.0
        %2297 = vmatpush2.msra.mxu0 0.0
        %2298 = vmatprep.subr.mxu0 0.0
        %2299 = vmatpush2.msra.mxu0 0.0
        %2300 = vmatprep.subr.mxu0 0.0
        %2301 = vmatpush2.msra.mxu0 0.0
        %2302 = vmatprep.subr.mxu0 0.0
        %2303 = vmatpush2.msra.mxu0 0.0
        %2304 = vmatprep.subr.mxu0 0.0
        %2305 = vmatpush2.msra.mxu0 0.0
        %2306 = vmatprep.subr.mxu0 0.0
        %2307 = vmatpush2.msra.mxu0 0.0
        %2308 = vmatprep.subr.mxu0 0.0
        %2309 = vmatpush2.msra.mxu0 0.0
        %2310 = vmatprep.subr.mxu0 0.0
        %2311 = vmatpush2.msra.mxu0 0.0
        %2312 = vmatprep.subr.mxu0 0.0
        %2313 = vmatpush2.msra.mxu0 0.0
        %2314 = vmatprep.subr.mxu0 0.0
        %2315 = vmatpush2.msra.mxu0 0.0
        %2316 = vmatprep.subr.mxu0 0.0
        %2317 = vmatpush2.msra.mxu0 0.0
        %2318 = vmatprep.subr.mxu0 0.0
        %2319 = vmatpush2.msra.mxu0 0.0
        %2320 = vmatprep.mubr.f32.mxu0 0.0
        %2321 = vmatmul.mubr.f32.gmra.mxu0 %v2254
        %v2322 = vpop.f32.mrf.mxu0
        %v2323 = vadd.f32 0.0, %v2322
        %v2324 = vpop.f32.mrf.mxu0
        %2325 = vdwg.mxu0
        %s2326 = scalar_lea.vmem %s608, 24
        %v2327 = vld [vmem:[%s2326] sm:$0xff]
        %v2329 = vsel %vm756, %v2247, 0
        %v2332 = vsel %vm756, %v2323, 0
        %2334 = vmatprep.subr.mxu0 0.0
        %2335 = vmatpush1.msra.mxu0 0.0
        %2336 = vmatprep.subr.mxu0 0.0
        %2337 = vmatpush1.msra.mxu0 0.0
        %2338 = vmatprep.subr.mxu0 0.0
        %2339 = vmatpush1.msra.mxu0 0.0
        %2340 = vmatprep.subr.mxu0 0.0
        %2341 = vmatpush1.msra.mxu0 0.0
        %2342 = vmatprep.subr.mxu0 0.0
        %2343 = vmatpush1.msra.mxu0 0.0
        %2344 = vmatprep.subr.mxu0 0.0
        %2345 = vmatpush1.msra.mxu0 0.0
        %2346 = vmatprep.subr.mxu0 0.0
        %2347 = vmatpush1.msra.mxu0 0.0
        %2348 = vmatprep.subr.mxu0 0.0
        %2349 = vmatpush1.msra.mxu0 0.0
        %2350 = vmatprep.subr.mxu0 0.0
        %2351 = vmatpush1.msra.mxu0 0.0
        %2352 = vmatprep.subr.mxu0 0.0
        %2353 = vmatpush1.msra.mxu0 0.0
        %2354 = vmatprep.subr.mxu0 0.0
        %2355 = vmatpush1.msra.mxu0 0.0
        %2356 = vmatprep.subr.mxu0 0.0
        %2357 = vmatpush1.msra.mxu0 0.0
        %2358 = vmatprep.subr.mxu0 0.0
        %2359 = vmatpush1.msra.mxu0 0.0
        %2360 = vmatprep.subr.mxu0 0.0
        %2361 = vmatpush1.msra.mxu0 0.0
        %2362 = vmatprep.subr.mxu0 0.0
        %2363 = vmatpush1.msra.mxu0 0.0
        %2364 = vmatprep.subr.mxu0 0.0
        %2365 = vmatpush1.msra.mxu0 %v2327
        %2366 = vmatprep.subr.mxu0 0.0
        %2367 = vmatpush2.msra.mxu0 0.0
        %2368 = vmatprep.subr.mxu0 0.0
        %2369 = vmatpush2.msra.mxu0 0.0
        %2370 = vmatprep.subr.mxu0 0.0
        %2371 = vmatpush2.msra.mxu0 0.0
        %2372 = vmatprep.subr.mxu0 0.0
        %2373 = vmatpush2.msra.mxu0 0.0
        %2374 = vmatprep.subr.mxu0 0.0
        %2375 = vmatpush2.msra.mxu0 0.0
        %2376 = vmatprep.subr.mxu0 0.0
        %2377 = vmatpush2.msra.mxu0 0.0
        %2378 = vmatprep.subr.mxu0 0.0
        %2379 = vmatpush2.msra.mxu0 0.0
        %2380 = vmatprep.subr.mxu0 0.0
        %2381 = vmatpush2.msra.mxu0 0.0
        %2382 = vmatprep.subr.mxu0 0.0
        %2383 = vmatpush2.msra.mxu0 0.0
        %2384 = vmatprep.subr.mxu0 0.0
        %2385 = vmatpush2.msra.mxu0 0.0
        %2386 = vmatprep.subr.mxu0 0.0
        %2387 = vmatpush2.msra.mxu0 0.0
        %2388 = vmatprep.subr.mxu0 0.0
        %2389 = vmatpush2.msra.mxu0 0.0
        %2390 = vmatprep.subr.mxu0 0.0
        %2391 = vmatpush2.msra.mxu0 0.0
        %2392 = vmatprep.subr.mxu0 0.0
        %2393 = vmatpush2.msra.mxu0 0.0
        %2394 = vmatprep.subr.mxu0 0.0
        %2395 = vmatpush2.msra.mxu0 0.0
        %2396 = vmatprep.subr.mxu0 0.0
        %2397 = vmatpush2.msra.mxu0 0.0
        %2398 = vmatprep.mubr.f32.mxu0 0.0
        %2399 = vmatmul.mubr.f32.gmra.mxu0 %v2329
        %v2400 = vpop.f32.mrf.mxu0
        %v2401 = vadd.f32 0.0, %v2400
        %v2402 = vpop.f32.mrf.mxu0
        %2403 = vmatprep.mubr.f32.mxu0 0.0
        %2404 = vmatmul.mubr.f32.gmra.mxu0 %v2332
        %v2405 = vpop.f32.mrf.mxu0
        %v2406 = vadd.f32 0.0, %v2405
        %v2407 = vpop.f32.mrf.mxu0
        %2408 = vdwg.mxu0
        %v2409 = vadd.f32 %v1994, %v2401
        %v2410 = vadd.f32 %v1995, %v2406
        %v2411 = vadd.f32 %v651, %v2409
        %v2412 = vadd.f32 %v652, %v2410
        %v2413 = vld [vmem:[%s631] sm:$0x1]
        %v2414 = vld [vmem:[%s634] sm:$0x1]
        %v2415 = vsel %vm664, %v2411, 0.0
        %2416 = vadd.xlane.f32.xlu0 %v2415
        %v2417 = vpop.xlane.xlu0 %2416
        %v2418 = vsel %vm664, %v2412, 0.0
        %2419 = vadd.xlane.f32.xlu0 %v2418
        %v2420 = vpop.xlane.xlu0 %2419
        %v2421 = vrcp.pop 32.0
        %v2422 = vmul.f32 %v2417, %v2421
        %v2423 = vmul.f32 %v2420, %v2421
        %v2424 = vsub.f32 %v2411, %v2422
        %v2425 = vsub.f32 %v2412, %v2423
        %v2426 = vmul.f32 %v2424, %v2424
        %v2427 = vmul.f32 %v2425, %v2425
        %v2428 = vsel %vm664, %v2426, 0.0
        %2429 = vadd.xlane.f32.xlu0 %v2428
        %v2430 = vpop.xlane.xlu0 %2429
        %v2431 = vsel %vm664, %v2427, 0.0
        %2432 = vadd.xlane.f32.xlu0 %v2431
        %v2433 = vpop.xlane.xlu0 %2432
        %v2434 = vmul.f32 %v2430, %v2421
        %v2435 = vmul.f32 %v2433, %v2421
        %v2436 = vadd.f32 %v2434, 1e-05
        %v2437 = vadd.f32 %v2435, 1e-05
        %v2438 = vrsqrt.pop %v2436
        %v2439 = vrsqrt.pop %v2437
        %v2440 = vmul.f32 %v2424, %v2438
        %v2441 = vmul.f32 %v2425, %v2439
        %v2443 = vlaneseq
        %v2444 = vshrl.u32 %v2443, 7
        %v2445 = vsub.s32 0, %v2444
        %v2446 = vrot.slane %v2413, %v2445
        %v2448 = vmul.f32 %v2440, %v2446
        %v2449 = vmul.f32 %v2441, %v2446
        %v2451 = vlaneseq
        %v2452 = vshrl.u32 %v2451, 7
        %v2453 = vsub.s32 0, %v2452
        %v2454 = vrot.slane %v2414, %v2453
        %v2456 = vadd.f32 %v2448, %v2454
        %v2457 = vadd.f32 %v2449, %v2454
        %v2458 = vld [vmem:[%s616] sm:$0xff]
        %v2459 = vld [vmem:[%s616 + $0x8] sm:$0xff]
        %v2460 = vld [vmem:[%s616 + $0x10] sm:$0xff]
        %v2461 = vld [vmem:[%s616 + $0x18] sm:$0xff]
        %v2462 = vld [vmem:[%s616 + $0x80] sm:$0xff]
        %v2463 = vld [vmem:[%s616 + $0x88] sm:$0xff]
        %v2464 = vld [vmem:[%s616 + $0x90] sm:$0xff]
        %v2465 = vld [vmem:[%s616 + $0x98] sm:$0xff]
        %v2466 = vld [vmem:[%s616 + $0x100] sm:$0xff]
        %v2467 = vld [vmem:[%s616 + $0x108] sm:$0xff]
        %v2468 = vld [vmem:[%s616 + $0x110] sm:$0xff]
        %v2469 = vld [vmem:[%s616 + $0x118] sm:$0xff]
        %v2470 = vld [vmem:[%s616 + $0x180] sm:$0xff]
        %v2471 = vld [vmem:[%s616 + $0x188] sm:$0xff]
        %v2472 = vld [vmem:[%s616 + $0x190] sm:$0xff]
        %v2473 = vld [vmem:[%s616 + $0x198] sm:$0xff]
        %v2474 = vld [vmem:[%s620] sm:$0xf]
        %v2476 = vlaneseq
        %v2477 = vshrl.u32 %v2476, 7
        %v2478 = vsub.s32 0, %v2477
        %v2479 = vrot.slane %v2474, %v2478
        %v2480 = vlaneseq
        %v2481 = vshrl.u32 %v2480, 7
        %v2482 = vsub.s32 1, %v2481
        %v2483 = vrot.slane %v2474, %v2482
        %v2484 = vlaneseq
        %v2485 = vshrl.u32 %v2484, 7
        %v2486 = vsub.s32 2, %v2485
        %v2487 = vrot.slane %v2474, %v2486
        %v2488 = vlaneseq
        %v2489 = vshrl.u32 %v2488, 7
        %v2490 = vsub.s32 3, %v2489
        %v2491 = vrot.slane %v2474, %v2490
        %v2497 = vsel %vm664, %v2456, 0
        %v2500 = vsel %vm664, %v2457, 0
        %2502 = vmatprep.subr.mxu0 0.0
        %2503 = vmatpush1.msra.mxu0 0.0
        %2504 = vmatprep.subr.mxu0 0.0
        %2505 = vmatpush1.msra.mxu0 0.0
        %2506 = vmatprep.subr.mxu0 0.0
        %2507 = vmatpush1.msra.mxu0 0.0
        %2508 = vmatprep.subr.mxu0 0.0
        %2509 = vmatpush1.msra.mxu0 0.0
        %2510 = vmatprep.subr.mxu0 0.0
        %2511 = vmatpush1.msra.mxu0 0.0
        %2512 = vmatprep.subr.mxu0 0.0
        %2513 = vmatpush1.msra.mxu0 0.0
        %2514 = vmatprep.subr.mxu0 0.0
        %2515 = vmatpush1.msra.mxu0 0.0
        %2516 = vmatprep.subr.mxu0 0.0
        %2517 = vmatpush1.msra.mxu0 0.0
        %2518 = vmatprep.subr.mxu0 0.0
        %2519 = vmatpush1.msra.mxu0 0.0
        %2520 = vmatprep.subr.mxu0 0.0
        %2521 = vmatpush1.msra.mxu0 0.0
        %2522 = vmatprep.subr.mxu0 0.0
        %2523 = vmatpush1.msra.mxu0 0.0
        %2524 = vmatprep.subr.mxu0 0.0
        %2525 = vmatpush1.msra.mxu0 0.0
        %2526 = vmatprep.subr.mxu0 %v2471
        %2527 = vmatpush1.msra.mxu0 %v2470
        %2528 = vmatprep.subr.mxu0 %v2467
        %2529 = vmatpush1.msra.mxu0 %v2466
        %2530 = vmatprep.subr.mxu0 %v2463
        %2531 = vmatpush1.msra.mxu0 %v2462
        %2532 = vmatprep.subr.mxu0 %v2459
        %2533 = vmatpush1.msra.mxu0 %v2458
        %2534 = vmatprep.subr.mxu0 0.0
        %2535 = vmatpush2.msra.mxu0 0.0
        %2536 = vmatprep.subr.mxu0 0.0
        %2537 = vmatpush2.msra.mxu0 0.0
        %2538 = vmatprep.subr.mxu0 0.0
        %2539 = vmatpush2.msra.mxu0 0.0
        %2540 = vmatprep.subr.mxu0 0.0
        %2541 = vmatpush2.msra.mxu0 0.0
        %2542 = vmatprep.subr.mxu0 0.0
        %2543 = vmatpush2.msra.mxu0 0.0
        %2544 = vmatprep.subr.mxu0 0.0
        %2545 = vmatpush2.msra.mxu0 0.0
        %2546 = vmatprep.subr.mxu0 0.0
        %2547 = vmatpush2.msra.mxu0 0.0
        %2548 = vmatprep.subr.mxu0 0.0
        %2549 = vmatpush2.msra.mxu0 0.0
        %2550 = vmatprep.subr.mxu0 0.0
        %2551 = vmatpush2.msra.mxu0 0.0
        %2552 = vmatprep.subr.mxu0 0.0
        %2553 = vmatpush2.msra.mxu0 0.0
        %2554 = vmatprep.subr.mxu0 0.0
        %2555 = vmatpush2.msra.mxu0 0.0
        %2556 = vmatprep.subr.mxu0 0.0
        %2557 = vmatpush2.msra.mxu0 0.0
        %2558 = vmatprep.subr.mxu0 0.0
        %2559 = vmatpush2.msra.mxu0 0.0
        %2560 = vmatprep.subr.mxu0 0.0
        %2561 = vmatpush2.msra.mxu0 0.0
        %2562 = vmatprep.subr.mxu0 0.0
        %2563 = vmatpush2.msra.mxu0 0.0
        %2564 = vmatprep.subr.mxu0 0.0
        %2565 = vmatpush2.msra.mxu0 0.0
        %2566 = vmatprep.mubr.f32.mxu0 0.0
        %2567 = vmatmul.mubr.f32.gmra.mxu0 %v2497
        %v2568 = vpop.f32.mrf.mxu0
        %v2569 = vadd.f32 %v2479, %v2568
        %v2570 = vpop.f32.mrf.mxu0
        %v2571 = vadd.f32 %v2483, %v2570
        %2572 = vmatprep.mubr.f32.mxu0 0.0
        %2573 = vmatmul.mubr.f32.gmra.mxu0 %v2500
        %v2574 = vpop.f32.mrf.mxu0
        %v2575 = vadd.f32 %v2479, %v2574
        %v2576 = vpop.f32.mrf.mxu0
        %v2577 = vadd.f32 %v2483, %v2576
        %2578 = vdwg.mxu0
        %2579 = vmatprep.subr.mxu0 0.0
        %2580 = vmatpush1.msra.mxu0 0.0
        %2581 = vmatprep.subr.mxu0 0.0
        %2582 = vmatpush1.msra.mxu0 0.0
        %2583 = vmatprep.subr.mxu0 0.0
        %2584 = vmatpush1.msra.mxu0 0.0
        %2585 = vmatprep.subr.mxu0 0.0
        %2586 = vmatpush1.msra.mxu0 0.0
        %2587 = vmatprep.subr.mxu0 0.0
        %2588 = vmatpush1.msra.mxu0 0.0
        %2589 = vmatprep.subr.mxu0 0.0
        %2590 = vmatpush1.msra.mxu0 0.0
        %2591 = vmatprep.subr.mxu0 0.0
        %2592 = vmatpush1.msra.mxu0 0.0
        %2593 = vmatprep.subr.mxu0 0.0
        %2594 = vmatpush1.msra.mxu0 0.0
        %2595 = vmatprep.subr.mxu0 0.0
        %2596 = vmatpush1.msra.mxu0 0.0
        %2597 = vmatprep.subr.mxu0 0.0
        %2598 = vmatpush1.msra.mxu0 0.0
        %2599 = vmatprep.subr.mxu0 0.0
        %2600 = vmatpush1.msra.mxu0 0.0
        %2601 = vmatprep.subr.mxu0 0.0
        %2602 = vmatpush1.msra.mxu0 0.0
        %2603 = vmatprep.subr.mxu0 %v2473
        %2604 = vmatpush1.msra.mxu0 %v2472
        %2605 = vmatprep.subr.mxu0 %v2469
        %2606 = vmatpush1.msra.mxu0 %v2468
        %2607 = vmatprep.subr.mxu0 %v2465
        %2608 = vmatpush1.msra.mxu0 %v2464
        %2609 = vmatprep.subr.mxu0 %v2461
        %2610 = vmatpush1.msra.mxu0 %v2460
        %2611 = vmatprep.subr.mxu0 0.0
        %2612 = vmatpush2.msra.mxu0 0.0
        %2613 = vmatprep.subr.mxu0 0.0
        %2614 = vmatpush2.msra.mxu0 0.0
        %2615 = vmatprep.subr.mxu0 0.0
        %2616 = vmatpush2.msra.mxu0 0.0
        %2617 = vmatprep.subr.mxu0 0.0
        %2618 = vmatpush2.msra.mxu0 0.0
        %2619 = vmatprep.subr.mxu0 0.0
        %2620 = vmatpush2.msra.mxu0 0.0
        %2621 = vmatprep.subr.mxu0 0.0
        %2622 = vmatpush2.msra.mxu0 0.0
        %2623 = vmatprep.subr.mxu0 0.0
        %2624 = vmatpush2.msra.mxu0 0.0
        %2625 = vmatprep.subr.mxu0 0.0
        %2626 = vmatpush2.msra.mxu0 0.0
        %2627 = vmatprep.subr.mxu0 0.0
        %2628 = vmatpush2.msra.mxu0 0.0
        %2629 = vmatprep.subr.mxu0 0.0
        %2630 = vmatpush2.msra.mxu0 0.0
        %2631 = vmatprep.subr.mxu0 0.0
        %2632 = vmatpush2.msra.mxu0 0.0
        %2633 = vmatprep.subr.mxu0 0.0
        %2634 = vmatpush2.msra.mxu0 0.0
        %2635 = vmatprep.subr.mxu0 0.0
        %2636 = vmatpush2.msra.mxu0 0.0
        %2637 = vmatprep.subr.mxu0 0.0
        %2638 = vmatpush2.msra.mxu0 0.0
        %2639 = vmatprep.subr.mxu0 0.0
        %2640 = vmatpush2.msra.mxu0 0.0
        %2641 = vmatprep.subr.mxu0 0.0
        %2642 = vmatpush2.msra.mxu0 0.0
        %2643 = vmatprep.mubr.f32.mxu0 0.0
        %2644 = vmatmul.mubr.f32.gmra.mxu0 %v2497
        %v2645 = vpop.f32.mrf.mxu0
        %v2646 = vadd.f32 %v2487, %v2645
        %v2647 = vpop.f32.mrf.mxu0
        %v2648 = vadd.f32 %v2491, %v2647
        %2649 = vmatprep.mubr.f32.mxu0 0.0
        %2650 = vmatmul.mubr.f32.gmra.mxu0 %v2500
        %v2651 = vpop.f32.mrf.mxu0
        %v2652 = vadd.f32 %v2487, %v2651
        %v2653 = vpop.f32.mrf.mxu0
        %v2654 = vadd.f32 %v2491, %v2653
        %2655 = vdwg.mxu0
        %v2656 = vmax.f32 %v2569, 0.0
        %v2657 = vmax.f32 %v2571, 0.0
        %v2658 = vmax.f32 %v2646, 0.0
        %v2659 = vmax.f32 %v2648, 0.0
        %v2660 = vmax.f32 %v2575, 0.0
        %v2661 = vmax.f32 %v2577, 0.0
        %v2662 = vmax.f32 %v2652, 0.0
        %v2663 = vmax.f32 %v2654, 0.0
        %v2664 = vld [vmem:[%s625] sm:$0xff]
        %v2665 = vld [vmem:[%s625 + $0x8] sm:$0xff]
        %v2666 = vld [vmem:[%s625 + $0x10] sm:$0xff]
        %v2667 = vld [vmem:[%s625 + $0x18] sm:$0xff]
        %v2668 = vld [vmem:[%s625 + $0x20] sm:$0xff]
        %v2669 = vld [vmem:[%s625 + $0x28] sm:$0xff]
        %v2670 = vld [vmem:[%s625 + $0x30] sm:$0xff]
        %v2671 = vld [vmem:[%s625 + $0x38] sm:$0xff]
        %v2672 = vld [vmem:[%s625 + $0x40] sm:$0xff]
        %v2673 = vld [vmem:[%s625 + $0x48] sm:$0xff]
        %v2674 = vld [vmem:[%s625 + $0x50] sm:$0xff]
        %v2675 = vld [vmem:[%s625 + $0x58] sm:$0xff]
        %v2676 = vld [vmem:[%s625 + $0x60] sm:$0xff]
        %v2677 = vld [vmem:[%s625 + $0x68] sm:$0xff]
        %v2678 = vld [vmem:[%s625 + $0x70] sm:$0xff]
        %v2679 = vld [vmem:[%s625 + $0x78] sm:$0xff]
        %v2680 = vld [vmem:[%s625 + $0x80] sm:$0xff]
        %v2681 = vld [vmem:[%s625 + $0x88] sm:$0xff]
        %v2682 = vld [vmem:[%s625 + $0x90] sm:$0xff]
        %v2683 = vld [vmem:[%s625 + $0x98] sm:$0xff]
        %v2684 = vld [vmem:[%s625 + $0xa0] sm:$0xff]
        %v2685 = vld [vmem:[%s625 + $0xa8] sm:$0xff]
        %v2686 = vld [vmem:[%s625 + $0xb0] sm:$0xff]
        %v2687 = vld [vmem:[%s625 + $0xb8] sm:$0xff]
        %v2688 = vld [vmem:[%s625 + $0xc0] sm:$0xff]
        %v2689 = vld [vmem:[%s625 + $0xc8] sm:$0xff]
        %v2690 = vld [vmem:[%s625 + $0xd0] sm:$0xff]
        %v2691 = vld [vmem:[%s625 + $0xd8] sm:$0xff]
        %v2692 = vld [vmem:[%s625 + $0xe0] sm:$0xff]
        %v2693 = vld [vmem:[%s625 + $0xe8] sm:$0xff]
        %v2694 = vld [vmem:[%s625 + $0xf0] sm:$0xff]
        %v2695 = vld [vmem:[%s625 + $0xf8] sm:$0xff]
        %v2696 = vld [vmem:[%s625 + $0x100] sm:$0xff]
        %v2697 = vld [vmem:[%s625 + $0x108] sm:$0xff]
        %v2698 = vld [vmem:[%s625 + $0x110] sm:$0xff]
        %v2699 = vld [vmem:[%s625 + $0x118] sm:$0xff]
        %v2700 = vld [vmem:[%s625 + $0x120] sm:$0xff]
        %v2701 = vld [vmem:[%s625 + $0x128] sm:$0xff]
        %v2702 = vld [vmem:[%s625 + $0x130] sm:$0xff]
        %v2703 = vld [vmem:[%s625 + $0x138] sm:$0xff]
        %v2704 = vld [vmem:[%s625 + $0x140] sm:$0xff]
        %v2705 = vld [vmem:[%s625 + $0x148] sm:$0xff]
        %v2706 = vld [vmem:[%s625 + $0x150] sm:$0xff]
        %v2707 = vld [vmem:[%s625 + $0x158] sm:$0xff]
        %v2708 = vld [vmem:[%s625 + $0x160] sm:$0xff]
        %v2709 = vld [vmem:[%s625 + $0x168] sm:$0xff]
        %v2710 = vld [vmem:[%s625 + $0x170] sm:$0xff]
        %v2711 = vld [vmem:[%s625 + $0x178] sm:$0xff]
        %v2712 = vld [vmem:[%s625 + $0x180] sm:$0xff]
        %v2713 = vld [vmem:[%s625 + $0x188] sm:$0xff]
        %v2714 = vld [vmem:[%s625 + $0x190] sm:$0xff]
        %v2715 = vld [vmem:[%s625 + $0x198] sm:$0xff]
        %v2716 = vld [vmem:[%s625 + $0x1a0] sm:$0xff]
        %v2717 = vld [vmem:[%s625 + $0x1a8] sm:$0xff]
        %v2718 = vld [vmem:[%s625 + $0x1b0] sm:$0xff]
        %v2719 = vld [vmem:[%s625 + $0x1b8] sm:$0xff]
        %v2720 = vld [vmem:[%s625 + $0x1c0] sm:$0xff]
        %v2721 = vld [vmem:[%s625 + $0x1c8] sm:$0xff]
        %v2722 = vld [vmem:[%s625 + $0x1d0] sm:$0xff]
        %v2723 = vld [vmem:[%s625 + $0x1d8] sm:$0xff]
        %v2724 = vld [vmem:[%s625 + $0x1e0] sm:$0xff]
        %v2725 = vld [vmem:[%s625 + $0x1e8] sm:$0xff]
        %v2726 = vld [vmem:[%s625 + $0x1f0] sm:$0xff]
        %v2727 = vld [vmem:[%s625 + $0x1f8] sm:$0xff]
        %v2728 = vld [vmem:[%s616 + $0x20] sm:$0xff]
        %v2729 = vld [vmem:[%s616 + $0x28] sm:$0xff]
        %v2730 = vld [vmem:[%s616 + $0x30] sm:$0xff]
        %v2731 = vld [vmem:[%s616 + $0x38] sm:$0xff]
        %v2732 = vld [vmem:[%s616 + $0xa0] sm:$0xff]
        %v2733 = vld [vmem:[%s616 + $0xa8] sm:$0xff]
        %v2734 = vld [vmem:[%s616 + $0xb0] sm:$0xff]
        %v2735 = vld [vmem:[%s616 + $0xb8] sm:$0xff]
        %v2736 = vld [vmem:[%s616 + $0x120] sm:$0xff]
        %v2737 = vld [vmem:[%s616 + $0x128] sm:$0xff]
        %v2738 = vld [vmem:[%s616 + $0x130] sm:$0xff]
        %v2739 = vld [vmem:[%s616 + $0x138] sm:$0xff]
        %v2740 = vld [vmem:[%s616 + $0x1a0] sm:$0xff]
        %v2741 = vld [vmem:[%s616 + $0x1a8] sm:$0xff]
        %v2742 = vld [vmem:[%s616 + $0x1b0] sm:$0xff]
        %v2743 = vld [vmem:[%s616 + $0x1b8] sm:$0xff]
        %v2744 = vld [vmem:[%s620 + $0x4] sm:$0xf]
        %v2746 = vlaneseq
        %v2747 = vshrl.u32 %v2746, 7
        %v2748 = vsub.s32 0, %v2747
        %v2749 = vrot.slane %v2744, %v2748
        %v2750 = vlaneseq
        %v2751 = vshrl.u32 %v2750, 7
        %v2752 = vsub.s32 1, %v2751
        %v2753 = vrot.slane %v2744, %v2752
        %v2754 = vlaneseq
        %v2755 = vshrl.u32 %v2754, 7
        %v2756 = vsub.s32 2, %v2755
        %v2757 = vrot.slane %v2744, %v2756
        %v2758 = vlaneseq
        %v2759 = vshrl.u32 %v2758, 7
        %v2760 = vsub.s32 3, %v2759
        %v2761 = vrot.slane %v2744, %v2760
        %2766 = vmatprep.subr.mxu0 0.0
        %2767 = vmatpush1.msra.mxu0 0.0
        %2768 = vmatprep.subr.mxu0 0.0
        %2769 = vmatpush1.msra.mxu0 0.0
        %2770 = vmatprep.subr.mxu0 0.0
        %2771 = vmatpush1.msra.mxu0 0.0
        %2772 = vmatprep.subr.mxu0 0.0
        %2773 = vmatpush1.msra.mxu0 0.0
        %2774 = vmatprep.subr.mxu0 0.0
        %2775 = vmatpush1.msra.mxu0 0.0
        %2776 = vmatprep.subr.mxu0 0.0
        %2777 = vmatpush1.msra.mxu0 0.0
        %2778 = vmatprep.subr.mxu0 0.0
        %2779 = vmatpush1.msra.mxu0 0.0
        %2780 = vmatprep.subr.mxu0 0.0
        %2781 = vmatpush1.msra.mxu0 0.0
        %2782 = vmatprep.subr.mxu0 0.0
        %2783 = vmatpush1.msra.mxu0 0.0
        %2784 = vmatprep.subr.mxu0 0.0
        %2785 = vmatpush1.msra.mxu0 0.0
        %2786 = vmatprep.subr.mxu0 0.0
        %2787 = vmatpush1.msra.mxu0 0.0
        %2788 = vmatprep.subr.mxu0 0.0
        %2789 = vmatpush1.msra.mxu0 0.0
        %2790 = vmatprep.subr.mxu0 %v2741
        %2791 = vmatpush1.msra.mxu0 %v2740
        %2792 = vmatprep.subr.mxu0 %v2737
        %2793 = vmatpush1.msra.mxu0 %v2736
        %2794 = vmatprep.subr.mxu0 %v2733
        %2795 = vmatpush1.msra.mxu0 %v2732
        %2796 = vmatprep.subr.mxu0 %v2729
        %2797 = vmatpush1.msra.mxu0 %v2728
        %2798 = vmatprep.subr.mxu0 0.0
        %2799 = vmatpush2.msra.mxu0 0.0
        %2800 = vmatprep.subr.mxu0 0.0
        %2801 = vmatpush2.msra.mxu0 0.0
        %2802 = vmatprep.subr.mxu0 0.0
        %2803 = vmatpush2.msra.mxu0 0.0
        %2804 = vmatprep.subr.mxu0 0.0
        %2805 = vmatpush2.msra.mxu0 0.0
        %2806 = vmatprep.subr.mxu0 0.0
        %2807 = vmatpush2.msra.mxu0 0.0
        %2808 = vmatprep.subr.mxu0 0.0
        %2809 = vmatpush2.msra.mxu0 0.0
        %2810 = vmatprep.subr.mxu0 0.0
        %2811 = vmatpush2.msra.mxu0 0.0
        %2812 = vmatprep.subr.mxu0 0.0
        %2813 = vmatpush2.msra.mxu0 0.0
        %2814 = vmatprep.subr.mxu0 0.0
        %2815 = vmatpush2.msra.mxu0 0.0
        %2816 = vmatprep.subr.mxu0 0.0
        %2817 = vmatpush2.msra.mxu0 0.0
        %2818 = vmatprep.subr.mxu0 0.0
        %2819 = vmatpush2.msra.mxu0 0.0
        %2820 = vmatprep.subr.mxu0 0.0
        %2821 = vmatpush2.msra.mxu0 0.0
        %2822 = vmatprep.subr.mxu0 0.0
        %2823 = vmatpush2.msra.mxu0 0.0
        %2824 = vmatprep.subr.mxu0 0.0
        %2825 = vmatpush2.msra.mxu0 0.0
        %2826 = vmatprep.subr.mxu0 0.0
        %2827 = vmatpush2.msra.mxu0 0.0
        %2828 = vmatprep.subr.mxu0 0.0
        %2829 = vmatpush2.msra.mxu0 0.0
        %2830 = vmatprep.mubr.f32.mxu0 0.0
        %2831 = vmatmul.mubr.f32.gmra.mxu0 %v2497
        %v2832 = vpop.f32.mrf.mxu0
        %v2833 = vadd.f32 %v2749, %v2832
        %v2834 = vpop.f32.mrf.mxu0
        %v2835 = vadd.f32 %v2753, %v2834
        %2836 = vmatprep.mubr.f32.mxu0 0.0
        %2837 = vmatmul.mubr.f32.gmra.mxu0 %v2500
        %v2838 = vpop.f32.mrf.mxu0
        %v2839 = vadd.f32 %v2749, %v2838
        %v2840 = vpop.f32.mrf.mxu0
        %v2841 = vadd.f32 %v2753, %v2840
        %2842 = vdwg.mxu0
        %2843 = vmatprep.subr.mxu0 0.0
        %2844 = vmatpush1.msra.mxu0 0.0
        %2845 = vmatprep.subr.mxu0 0.0
        %2846 = vmatpush1.msra.mxu0 0.0
        %2847 = vmatprep.subr.mxu0 0.0
        %2848 = vmatpush1.msra.mxu0 0.0
        %2849 = vmatprep.subr.mxu0 0.0
        %2850 = vmatpush1.msra.mxu0 0.0
        %2851 = vmatprep.subr.mxu0 0.0
        %2852 = vmatpush1.msra.mxu0 0.0
        %2853 = vmatprep.subr.mxu0 0.0
        %2854 = vmatpush1.msra.mxu0 0.0
        %2855 = vmatprep.subr.mxu0 0.0
        %2856 = vmatpush1.msra.mxu0 0.0
        %2857 = vmatprep.subr.mxu0 0.0
        %2858 = vmatpush1.msra.mxu0 0.0
        %2859 = vmatprep.subr.mxu0 0.0
        %2860 = vmatpush1.msra.mxu0 0.0
        %2861 = vmatprep.subr.mxu0 0.0
        %2862 = vmatpush1.msra.mxu0 0.0
        %2863 = vmatprep.subr.mxu0 0.0
        %2864 = vmatpush1.msra.mxu0 0.0
        %2865 = vmatprep.subr.mxu0 0.0
        %2866 = vmatpush1.msra.mxu0 0.0
        %2867 = vmatprep.subr.mxu0 %v2743
        %2868 = vmatpush1.msra.mxu0 %v2742
        %2869 = vmatprep.subr.mxu0 %v2739
        %2870 = vmatpush1.msra.mxu0 %v2738
        %2871 = vmatprep.subr.mxu0 %v2735
        %2872 = vmatpush1.msra.mxu0 %v2734
        %2873 = vmatprep.subr.mxu0 %v2731
        %2874 = vmatpush1.msra.mxu0 %v2730
        %2875 = vmatprep.subr.mxu0 0.0
        %2876 = vmatpush2.msra.mxu0 0.0
        %2877 = vmatprep.subr.mxu0 0.0
        %2878 = vmatpush2.msra.mxu0 0.0
        %2879 = vmatprep.subr.mxu0 0.0
        %2880 = vmatpush2.msra.mxu0 0.0
        %2881 = vmatprep.subr.mxu0 0.0
        %2882 = vmatpush2.msra.mxu0 0.0
        %2883 = vmatprep.subr.mxu0 0.0
        %2884 = vmatpush2.msra.mxu0 0.0
        %2885 = vmatprep.subr.mxu0 0.0
        %2886 = vmatpush2.msra.mxu0 0.0
        %2887 = vmatprep.subr.mxu0 0.0
        %2888 = vmatpush2.msra.mxu0 0.0
        %2889 = vmatprep.subr.mxu0 0.0
        %2890 = vmatpush2.msra.mxu0 0.0
        %2891 = vmatprep.subr.mxu0 0.0
        %2892 = vmatpush2.msra.mxu0 0.0
        %2893 = vmatprep.subr.mxu0 0.0
        %2894 = vmatpush2.msra.mxu0 0.0
        %2895 = vmatprep.subr.mxu0 0.0
        %2896 = vmatpush2.msra.mxu0 0.0
        %2897 = vmatprep.subr.mxu0 0.0
        %2898 = vmatpush2.msra.mxu0 0.0
        %2899 = vmatprep.subr.mxu0 0.0
        %2900 = vmatpush2.msra.mxu0 0.0
        %2901 = vmatprep.subr.mxu0 0.0
        %2902 = vmatpush2.msra.mxu0 0.0
        %2903 = vmatprep.subr.mxu0 0.0
        %2904 = vmatpush2.msra.mxu0 0.0
        %2905 = vmatprep.subr.mxu0 0.0
        %2906 = vmatpush2.msra.mxu0 0.0
        %2907 = vmatprep.mubr.f32.mxu0 0.0
        %2908 = vmatmul.mubr.f32.gmra.mxu0 %v2497
        %v2909 = vpop.f32.mrf.mxu0
        %v2910 = vadd.f32 %v2757, %v2909
        %v2911 = vpop.f32.mrf.mxu0
        %v2912 = vadd.f32 %v2761, %v2911
        %2913 = vmatprep.mubr.f32.mxu0 0.0
        %2914 = vmatmul.mubr.f32.gmra.mxu0 %v2500
        %v2915 = vpop.f32.mrf.mxu0
        %v2916 = vadd.f32 %v2757, %v2915
        %v2917 = vpop.f32.mrf.mxu0
        %v2918 = vadd.f32 %v2761, %v2917
        %2919 = vdwg.mxu0
        %v2920 = vmax.f32 %v2833, 0.0
        %v2921 = vmax.f32 %v2835, 0.0
        %v2922 = vmax.f32 %v2910, 0.0
        %v2923 = vmax.f32 %v2912, 0.0
        %v2924 = vmax.f32 %v2839, 0.0
        %v2925 = vmax.f32 %v2841, 0.0
        %v2926 = vmax.f32 %v2916, 0.0
        %v2927 = vmax.f32 %v2918, 0.0
        %v2928 = vld [vmem:[%s625 + $0x200] sm:$0xff]
        %v2929 = vld [vmem:[%s625 + $0x208] sm:$0xff]
        %v2930 = vld [vmem:[%s625 + $0x210] sm:$0xff]
        %v2931 = vld [vmem:[%s625 + $0x218] sm:$0xff]
        %v2932 = vld [vmem:[%s625 + $0x220] sm:$0xff]
        %v2933 = vld [vmem:[%s625 + $0x228] sm:$0xff]
        %v2934 = vld [vmem:[%s625 + $0x230] sm:$0xff]
        %v2935 = vld [vmem:[%s625 + $0x238] sm:$0xff]
        %v2936 = vld [vmem:[%s625 + $0x240] sm:$0xff]
        %v2937 = vld [vmem:[%s625 + $0x248] sm:$0xff]
        %v2938 = vld [vmem:[%s625 + $0x250] sm:$0xff]
        %v2939 = vld [vmem:[%s625 + $0x258] sm:$0xff]
        %v2940 = vld [vmem:[%s625 + $0x260] sm:$0xff]
        %v2941 = vld [vmem:[%s625 + $0x268] sm:$0xff]
        %v2942 = vld [vmem:[%s625 + $0x270] sm:$0xff]
        %v2943 = vld [vmem:[%s625 + $0x278] sm:$0xff]
        %v2944 = vld [vmem:[%s625 + $0x280] sm:$0xff]
        %v2945 = vld [vmem:[%s625 + $0x288] sm:$0xff]
        %v2946 = vld [vmem:[%s625 + $0x290] sm:$0xff]
        %v2947 = vld [vmem:[%s625 + $0x298] sm:$0xff]
        %v2948 = vld [vmem:[%s625 + $0x2a0] sm:$0xff]
        %v2949 = vld [vmem:[%s625 + $0x2a8] sm:$0xff]
        %v2950 = vld [vmem:[%s625 + $0x2b0] sm:$0xff]
        %v2951 = vld [vmem:[%s625 + $0x2b8] sm:$0xff]
        %v2952 = vld [vmem:[%s625 + $0x2c0] sm:$0xff]
        %v2953 = vld [vmem:[%s625 + $0x2c8] sm:$0xff]
        %v2954 = vld [vmem:[%s625 + $0x2d0] sm:$0xff]
        %v2955 = vld [vmem:[%s625 + $0x2d8] sm:$0xff]
        %v2956 = vld [vmem:[%s625 + $0x2e0] sm:$0xff]
        %v2957 = vld [vmem:[%s625 + $0x2e8] sm:$0xff]
        %v2958 = vld [vmem:[%s625 + $0x2f0] sm:$0xff]
        %v2959 = vld [vmem:[%s625 + $0x2f8] sm:$0xff]
        %v2960 = vld [vmem:[%s625 + $0x300] sm:$0xff]
        %v2961 = vld [vmem:[%s625 + $0x308] sm:$0xff]
        %v2962 = vld [vmem:[%s625 + $0x310] sm:$0xff]
        %v2963 = vld [vmem:[%s625 + $0x318] sm:$0xff]
        %v2964 = vld [vmem:[%s625 + $0x320] sm:$0xff]
        %v2965 = vld [vmem:[%s625 + $0x328] sm:$0xff]
        %v2966 = vld [vmem:[%s625 + $0x330] sm:$0xff]
        %v2967 = vld [vmem:[%s625 + $0x338] sm:$0xff]
        %v2968 = vld [vmem:[%s625 + $0x340] sm:$0xff]
        %v2969 = vld [vmem:[%s625 + $0x348] sm:$0xff]
        %v2970 = vld [vmem:[%s625 + $0x350] sm:$0xff]
        %v2971 = vld [vmem:[%s625 + $0x358] sm:$0xff]
        %v2972 = vld [vmem:[%s625 + $0x360] sm:$0xff]
        %v2973 = vld [vmem:[%s625 + $0x368] sm:$0xff]
        %v2974 = vld [vmem:[%s625 + $0x370] sm:$0xff]
        %v2975 = vld [vmem:[%s625 + $0x378] sm:$0xff]
        %v2976 = vld [vmem:[%s625 + $0x380] sm:$0xff]
        %v2977 = vld [vmem:[%s625 + $0x388] sm:$0xff]
        %v2978 = vld [vmem:[%s625 + $0x390] sm:$0xff]
        %v2979 = vld [vmem:[%s625 + $0x398] sm:$0xff]
        %v2980 = vld [vmem:[%s625 + $0x3a0] sm:$0xff]
        %v2981 = vld [vmem:[%s625 + $0x3a8] sm:$0xff]
        %v2982 = vld [vmem:[%s625 + $0x3b0] sm:$0xff]
        %v2983 = vld [vmem:[%s625 + $0x3b8] sm:$0xff]
        %v2984 = vld [vmem:[%s625 + $0x3c0] sm:$0xff]
        %v2985 = vld [vmem:[%s625 + $0x3c8] sm:$0xff]
        %v2986 = vld [vmem:[%s625 + $0x3d0] sm:$0xff]
        %v2987 = vld [vmem:[%s625 + $0x3d8] sm:$0xff]
        %v2988 = vld [vmem:[%s625 + $0x3e0] sm:$0xff]
        %v2989 = vld [vmem:[%s625 + $0x3e8] sm:$0xff]
        %v2990 = vld [vmem:[%s625 + $0x3f0] sm:$0xff]
        %v2991 = vld [vmem:[%s625 + $0x3f8] sm:$0xff]
        %2992 = vmatprep.subr.mxu0 0.0
        %2993 = vmatpush1.msra.mxu0 %v2943
        %2994 = vmatprep.subr.mxu0 0.0
        %2995 = vmatpush1.msra.mxu0 %v2942
        %2996 = vmatprep.subr.mxu0 0.0
        %2997 = vmatpush1.msra.mxu0 %v2941
        %2998 = vmatprep.subr.mxu0 0.0
        %2999 = vmatpush1.msra.mxu0 %v2940
        %3000 = vmatprep.subr.mxu0 0.0
        %3001 = vmatpush1.msra.mxu0 %v2939
        %3002 = vmatprep.subr.mxu0 0.0
        %3003 = vmatpush1.msra.mxu0 %v2938
        %3004 = vmatprep.subr.mxu0 0.0
        %3005 = vmatpush1.msra.mxu0 %v2937
        %3006 = vmatprep.subr.mxu0 0.0
        %3007 = vmatpush1.msra.mxu0 %v2936
        %3008 = vmatprep.subr.mxu0 0.0
        %3009 = vmatpush1.msra.mxu0 %v2935
        %3010 = vmatprep.subr.mxu0 0.0
        %3011 = vmatpush1.msra.mxu0 %v2934
        %3012 = vmatprep.subr.mxu0 0.0
        %3013 = vmatpush1.msra.mxu0 %v2933
        %3014 = vmatprep.subr.mxu0 0.0
        %3015 = vmatpush1.msra.mxu0 %v2932
        %3016 = vmatprep.subr.mxu0 0.0
        %3017 = vmatpush1.msra.mxu0 %v2931
        %3018 = vmatprep.subr.mxu0 0.0
        %3019 = vmatpush1.msra.mxu0 %v2930
        %3020 = vmatprep.subr.mxu0 0.0
        %3021 = vmatpush1.msra.mxu0 %v2929
        %3022 = vmatprep.subr.mxu0 0.0
        %3023 = vmatpush1.msra.mxu0 %v2928
        %3024 = vmatprep.subr.mxu0 0.0
        %3025 = vmatpush2.msra.mxu0 %v2959
        %3026 = vmatprep.subr.mxu0 0.0
        %3027 = vmatpush2.msra.mxu0 %v2958
        %3028 = vmatprep.subr.mxu0 0.0
        %3029 = vmatpush2.msra.mxu0 %v2957
        %3030 = vmatprep.subr.mxu0 0.0
        %3031 = vmatpush2.msra.mxu0 %v2956
        %3032 = vmatprep.subr.mxu0 0.0
        %3033 = vmatpush2.msra.mxu0 %v2955
        %3034 = vmatprep.subr.mxu0 0.0
        %3035 = vmatpush2.msra.mxu0 %v2954
        %3036 = vmatprep.subr.mxu0 0.0
        %3037 = vmatpush2.msra.mxu0 %v2953
        %3038 = vmatprep.subr.mxu0 0.0
        %3039 = vmatpush2.msra.mxu0 %v2952
        %3040 = vmatprep.subr.mxu0 0.0
        %3041 = vmatpush2.msra.mxu0 %v2951
        %3042 = vmatprep.subr.mxu0 0.0
        %3043 = vmatpush2.msra.mxu0 %v2950
        %3044 = vmatprep.subr.mxu0 0.0
        %3045 = vmatpush2.msra.mxu0 %v2949
        %3046 = vmatprep.subr.mxu0 0.0
        %3047 = vmatpush2.msra.mxu0 %v2948
        %3048 = vmatprep.subr.mxu0 0.0
        %3049 = vmatpush2.msra.mxu0 %v2947
        %3050 = vmatprep.subr.mxu0 0.0
        %3051 = vmatpush2.msra.mxu0 %v2946
        %3052 = vmatprep.subr.mxu0 0.0
        %3053 = vmatpush2.msra.mxu0 %v2945
        %3054 = vmatprep.subr.mxu0 0.0
        %3055 = vmatpush2.msra.mxu0 %v2944
        %3056 = vmatprep.mubr.f32.mxu0 %v2921
        %3057 = vmatmul.mubr.f32.gmra.mxu0 %v2920
        %v3058 = vpop.f32.mrf.mxu0
        %v3059 = vadd.f32 0.0, %v3058
        %v3060 = vpop.f32.mrf.mxu0
        %3061 = vmatprep.mubr.f32.mxu0 %v2925
        %3062 = vmatmul.mubr.f32.gmra.mxu0 %v2924
        %v3063 = vpop.f32.mrf.mxu0
        %v3064 = vadd.f32 0.0, %v3063
        %v3065 = vpop.f32.mrf.mxu0
        %3066 = vdwg.mxu0
        %3067 = vmatprep.subr.mxu0 0.0
        %3068 = vmatpush1.msra.mxu0 %v2975
        %3069 = vmatprep.subr.mxu0 0.0
        %3070 = vmatpush1.msra.mxu0 %v2974
        %3071 = vmatprep.subr.mxu0 0.0
        %3072 = vmatpush1.msra.mxu0 %v2973
        %3073 = vmatprep.subr.mxu0 0.0
        %3074 = vmatpush1.msra.mxu0 %v2972
        %3075 = vmatprep.subr.mxu0 0.0
        %3076 = vmatpush1.msra.mxu0 %v2971
        %3077 = vmatprep.subr.mxu0 0.0
        %3078 = vmatpush1.msra.mxu0 %v2970
        %3079 = vmatprep.subr.mxu0 0.0
        %3080 = vmatpush1.msra.mxu0 %v2969
        %3081 = vmatprep.subr.mxu0 0.0
        %3082 = vmatpush1.msra.mxu0 %v2968
        %3083 = vmatprep.subr.mxu0 0.0
        %3084 = vmatpush1.msra.mxu0 %v2967
        %3085 = vmatprep.subr.mxu0 0.0
        %3086 = vmatpush1.msra.mxu0 %v2966
        %3087 = vmatprep.subr.mxu0 0.0
        %3088 = vmatpush1.msra.mxu0 %v2965
        %3089 = vmatprep.subr.mxu0 0.0
        %3090 = vmatpush1.msra.mxu0 %v2964
        %3091 = vmatprep.subr.mxu0 0.0
        %3092 = vmatpush1.msra.mxu0 %v2963
        %3093 = vmatprep.subr.mxu0 0.0
        %3094 = vmatpush1.msra.mxu0 %v2962
        %3095 = vmatprep.subr.mxu0 0.0
        %3096 = vmatpush1.msra.mxu0 %v2961
        %3097 = vmatprep.subr.mxu0 0.0
        %3098 = vmatpush1.msra.mxu0 %v2960
        %3099 = vmatprep.subr.mxu0 0.0
        %3100 = vmatpush2.msra.mxu0 %v2991
        %3101 = vmatprep.subr.mxu0 0.0
        %3102 = vmatpush2.msra.mxu0 %v2990
        %3103 = vmatprep.subr.mxu0 0.0
        %3104 = vmatpush2.msra.mxu0 %v2989
        %3105 = vmatprep.subr.mxu0 0.0
        %3106 = vmatpush2.msra.mxu0 %v2988
        %3107 = vmatprep.subr.mxu0 0.0
        %3108 = vmatpush2.msra.mxu0 %v2987
        %3109 = vmatprep.subr.mxu0 0.0
        %3110 = vmatpush2.msra.mxu0 %v2986
        %3111 = vmatprep.subr.mxu0 0.0
        %3112 = vmatpush2.msra.mxu0 %v2985
        %3113 = vmatprep.subr.mxu0 0.0
        %3114 = vmatpush2.msra.mxu0 %v2984
        %3115 = vmatprep.subr.mxu0 0.0
        %3116 = vmatpush2.msra.mxu0 %v2983
        %3117 = vmatprep.subr.mxu0 0.0
        %3118 = vmatpush2.msra.mxu0 %v2982
        %3119 = vmatprep.subr.mxu0 0.0
        %3120 = vmatpush2.msra.mxu0 %v2981
        %3121 = vmatprep.subr.mxu0 0.0
        %3122 = vmatpush2.msra.mxu0 %v2980
        %3123 = vmatprep.subr.mxu0 0.0
        %3124 = vmatpush2.msra.mxu0 %v2979
        %3125 = vmatprep.subr.mxu0 0.0
        %3126 = vmatpush2.msra.mxu0 %v2978
        %3127 = vmatprep.subr.mxu0 0.0
        %3128 = vmatpush2.msra.mxu0 %v2977
        %3129 = vmatprep.subr.mxu0 0.0
        %3130 = vmatpush2.msra.mxu0 %v2976
        %3131 = vmatprep.mubr.f32.mxu0 %v2923
        %3132 = vmatmul.mubr.f32.gmra.mxu0 %v2922
        %v3133 = vpop.f32.mrf.mxu0
        %v3134 = vadd.f32 %v3059, %v3133
        %v3135 = vpop.f32.mrf.mxu0
        %3136 = vmatprep.mubr.f32.mxu0 %v2927
        %3137 = vmatmul.mubr.f32.gmra.mxu0 %v2926
        %v3138 = vpop.f32.mrf.mxu0
        %v3139 = vadd.f32 %v3064, %v3138
        %v3140 = vpop.f32.mrf.mxu0
        %3141 = vdwg.mxu0
        %3142 = vmatprep.subr.mxu0 0.0
        %3143 = vmatpush1.msra.mxu0 %v2679
        %3144 = vmatprep.subr.mxu0 0.0
        %3145 = vmatpush1.msra.mxu0 %v2678
        %3146 = vmatprep.subr.mxu0 0.0
        %3147 = vmatpush1.msra.mxu0 %v2677
        %3148 = vmatprep.subr.mxu0 0.0
        %3149 = vmatpush1.msra.mxu0 %v2676
        %3150 = vmatprep.subr.mxu0 0.0
        %3151 = vmatpush1.msra.mxu0 %v2675
        %3152 = vmatprep.subr.mxu0 0.0
        %3153 = vmatpush1.msra.mxu0 %v2674
        %3154 = vmatprep.subr.mxu0 0.0
        %3155 = vmatpush1.msra.mxu0 %v2673
        %3156 = vmatprep.subr.mxu0 0.0
        %3157 = vmatpush1.msra.mxu0 %v2672
        %3158 = vmatprep.subr.mxu0 0.0
        %3159 = vmatpush1.msra.mxu0 %v2671
        %3160 = vmatprep.subr.mxu0 0.0
        %3161 = vmatpush1.msra.mxu0 %v2670
        %3162 = vmatprep.subr.mxu0 0.0
        %3163 = vmatpush1.msra.mxu0 %v2669
        %3164 = vmatprep.subr.mxu0 0.0
        %3165 = vmatpush1.msra.mxu0 %v2668
        %3166 = vmatprep.subr.mxu0 0.0
        %3167 = vmatpush1.msra.mxu0 %v2667
        %3168 = vmatprep.subr.mxu0 0.0
        %3169 = vmatpush1.msra.mxu0 %v2666
        %3170 = vmatprep.subr.mxu0 0.0
        %3171 = vmatpush1.msra.mxu0 %v2665
        %3172 = vmatprep.subr.mxu0 0.0
        %3173 = vmatpush1.msra.mxu0 %v2664
        %3174 = vmatprep.subr.mxu0 0.0
        %3175 = vmatpush2.msra.mxu0 %v2695
        %3176 = vmatprep.subr.mxu0 0.0
        %3177 = vmatpush2.msra.mxu0 %v2694
        %3178 = vmatprep.subr.mxu0 0.0
        %3179 = vmatpush2.msra.mxu0 %v2693
        %3180 = vmatprep.subr.mxu0 0.0
        %3181 = vmatpush2.msra.mxu0 %v2692
        %3182 = vmatprep.subr.mxu0 0.0
        %3183 = vmatpush2.msra.mxu0 %v2691
        %3184 = vmatprep.subr.mxu0 0.0
        %3185 = vmatpush2.msra.mxu0 %v2690
        %3186 = vmatprep.subr.mxu0 0.0
        %3187 = vmatpush2.msra.mxu0 %v2689
        %3188 = vmatprep.subr.mxu0 0.0
        %3189 = vmatpush2.msra.mxu0 %v2688
        %3190 = vmatprep.subr.mxu0 0.0
        %3191 = vmatpush2.msra.mxu0 %v2687
        %3192 = vmatprep.subr.mxu0 0.0
        %3193 = vmatpush2.msra.mxu0 %v2686
        %3194 = vmatprep.subr.mxu0 0.0
        %3195 = vmatpush2.msra.mxu0 %v2685
        %3196 = vmatprep.subr.mxu0 0.0
        %3197 = vmatpush2.msra.mxu0 %v2684
        %3198 = vmatprep.subr.mxu0 0.0
        %3199 = vmatpush2.msra.mxu0 %v2683
        %3200 = vmatprep.subr.mxu0 0.0
        %3201 = vmatpush2.msra.mxu0 %v2682
        %3202 = vmatprep.subr.mxu0 0.0
        %3203 = vmatpush2.msra.mxu0 %v2681
        %3204 = vmatprep.subr.mxu0 0.0
        %3205 = vmatpush2.msra.mxu0 %v2680
        %3206 = vmatprep.mubr.f32.mxu0 %v2657
        %3207 = vmatmul.mubr.f32.gmra.mxu0 %v2656
        %v3208 = vpop.f32.mrf.mxu0
        %v3209 = vadd.f32 %v3134, %v3208
        %v3210 = vpop.f32.mrf.mxu0
        %3211 = vmatprep.mubr.f32.mxu0 %v2661
        %3212 = vmatmul.mubr.f32.gmra.mxu0 %v2660
        %v3213 = vpop.f32.mrf.mxu0
        %v3214 = vadd.f32 %v3139, %v3213
        %v3215 = vpop.f32.mrf.mxu0
        %3216 = vdwg.mxu0
        %3217 = vmatprep.subr.mxu0 0.0
        %3218 = vmatpush1.msra.mxu0 %v2711
        %3219 = vmatprep.subr.mxu0 0.0
        %3220 = vmatpush1.msra.mxu0 %v2710
        %3221 = vmatprep.subr.mxu0 0.0
        %3222 = vmatpush1.msra.mxu0 %v2709
        %3223 = vmatprep.subr.mxu0 0.0
        %3224 = vmatpush1.msra.mxu0 %v2708
        %3225 = vmatprep.subr.mxu0 0.0
        %3226 = vmatpush1.msra.mxu0 %v2707
        %3227 = vmatprep.subr.mxu0 0.0
        %3228 = vmatpush1.msra.mxu0 %v2706
        %3229 = vmatprep.subr.mxu0 0.0
        %3230 = vmatpush1.msra.mxu0 %v2705
        %3231 = vmatprep.subr.mxu0 0.0
        %3232 = vmatpush1.msra.mxu0 %v2704
        %3233 = vmatprep.subr.mxu0 0.0
        %3234 = vmatpush1.msra.mxu0 %v2703
        %3235 = vmatprep.subr.mxu0 0.0
        %3236 = vmatpush1.msra.mxu0 %v2702
        %3237 = vmatprep.subr.mxu0 0.0
        %3238 = vmatpush1.msra.mxu0 %v2701
        %3239 = vmatprep.subr.mxu0 0.0
        %3240 = vmatpush1.msra.mxu0 %v2700
        %3241 = vmatprep.subr.mxu0 0.0
        %3242 = vmatpush1.msra.mxu0 %v2699
        %3243 = vmatprep.subr.mxu0 0.0
        %3244 = vmatpush1.msra.mxu0 %v2698
        %3245 = vmatprep.subr.mxu0 0.0
        %3246 = vmatpush1.msra.mxu0 %v2697
        %3247 = vmatprep.subr.mxu0 0.0
        %3248 = vmatpush1.msra.mxu0 %v2696
        %3249 = vmatprep.subr.mxu0 0.0
        %3250 = vmatpush2.msra.mxu0 %v2727
        %3251 = vmatprep.subr.mxu0 0.0
        %3252 = vmatpush2.msra.mxu0 %v2726
        %3253 = vmatprep.subr.mxu0 0.0
        %3254 = vmatpush2.msra.mxu0 %v2725
        %3255 = vmatprep.subr.mxu0 0.0
        %3256 = vmatpush2.msra.mxu0 %v2724
        %3257 = vmatprep.subr.mxu0 0.0
        %3258 = vmatpush2.msra.mxu0 %v2723
        %3259 = vmatprep.subr.mxu0 0.0
        %3260 = vmatpush2.msra.mxu0 %v2722
        %3261 = vmatprep.subr.mxu0 0.0
        %3262 = vmatpush2.msra.mxu0 %v2721
        %3263 = vmatprep.subr.mxu0 0.0
        %3264 = vmatpush2.msra.mxu0 %v2720
        %3265 = vmatprep.subr.mxu0 0.0
        %3266 = vmatpush2.msra.mxu0 %v2719
        %3267 = vmatprep.subr.mxu0 0.0
        %3268 = vmatpush2.msra.mxu0 %v2718
        %3269 = vmatprep.subr.mxu0 0.0
        %3270 = vmatpush2.msra.mxu0 %v2717
        %3271 = vmatprep.subr.mxu0 0.0
        %3272 = vmatpush2.msra.mxu0 %v2716
        %3273 = vmatprep.subr.mxu0 0.0
        %3274 = vmatpush2.msra.mxu0 %v2715
        %3275 = vmatprep.subr.mxu0 0.0
        %3276 = vmatpush2.msra.mxu0 %v2714
        %3277 = vmatprep.subr.mxu0 0.0
        %3278 = vmatpush2.msra.mxu0 %v2713
        %3279 = vmatprep.subr.mxu0 0.0
        %3280 = vmatpush2.msra.mxu0 %v2712
        %3281 = vmatprep.mubr.f32.mxu0 %v2659
        %3282 = vmatmul.mubr.f32.gmra.mxu0 %v2658
        %v3283 = vpop.f32.mrf.mxu0
        %v3284 = vadd.f32 %v3209, %v3283
        %v3285 = vpop.f32.mrf.mxu0
        %3286 = vmatprep.mubr.f32.mxu0 %v2663
        %3287 = vmatmul.mubr.f32.gmra.mxu0 %v2662
        %v3288 = vpop.f32.mrf.mxu0
        %v3289 = vadd.f32 %v3214, %v3288
        %v3290 = vpop.f32.mrf.mxu0
        %3291 = vdwg.mxu0
        %v3292 = vld [vmem:[%s616 + $0x40] sm:$0xff]
        %v3293 = vld [vmem:[%s616 + $0x48] sm:$0xff]
        %v3294 = vld [vmem:[%s616 + $0x50] sm:$0xff]
        %v3295 = vld [vmem:[%s616 + $0x58] sm:$0xff]
        %v3296 = vld [vmem:[%s616 + $0xc0] sm:$0xff]
        %v3297 = vld [vmem:[%s616 + $0xc8] sm:$0xff]
        %v3298 = vld [vmem:[%s616 + $0xd0] sm:$0xff]
        %v3299 = vld [vmem:[%s616 + $0xd8] sm:$0xff]
        %v3300 = vld [vmem:[%s616 + $0x140] sm:$0xff]
        %v3301 = vld [vmem:[%s616 + $0x148] sm:$0xff]
        %v3302 = vld [vmem:[%s616 + $0x150] sm:$0xff]
        %v3303 = vld [vmem:[%s616 + $0x158] sm:$0xff]
        %v3304 = vld [vmem:[%s616 + $0x1c0] sm:$0xff]
        %v3305 = vld [vmem:[%s616 + $0x1c8] sm:$0xff]
        %v3306 = vld [vmem:[%s616 + $0x1d0] sm:$0xff]
        %v3307 = vld [vmem:[%s616 + $0x1d8] sm:$0xff]
        %v3308 = vld [vmem:[%s620 + $0x8] sm:$0xf]
        %v3310 = vlaneseq
        %v3311 = vshrl.u32 %v3310, 7
        %v3312 = vsub.s32 0, %v3311
        %v3313 = vrot.slane %v3308, %v3312
        %v3314 = vlaneseq
        %v3315 = vshrl.u32 %v3314, 7
        %v3316 = vsub.s32 1, %v3315
        %v3317 = vrot.slane %v3308, %v3316
        %v3318 = vlaneseq
        %v3319 = vshrl.u32 %v3318, 7
        %v3320 = vsub.s32 2, %v3319
        %v3321 = vrot.slane %v3308, %v3320
        %v3322 = vlaneseq
        %v3323 = vshrl.u32 %v3322, 7
        %v3324 = vsub.s32 3, %v3323
        %v3325 = vrot.slane %v3308, %v3324
        %3330 = vmatprep.subr.mxu0 0.0
        %3331 = vmatpush1.msra.mxu0 0.0
        %3332 = vmatprep.subr.mxu0 0.0
        %3333 = vmatpush1.msra.mxu0 0.0
        %3334 = vmatprep.subr.mxu0 0.0
        %3335 = vmatpush1.msra.mxu0 0.0
        %3336 = vmatprep.subr.mxu0 0.0
        %3337 = vmatpush1.msra.mxu0 0.0
        %3338 = vmatprep.subr.mxu0 0.0
        %3339 = vmatpush1.msra.mxu0 0.0
        %3340 = vmatprep.subr.mxu0 0.0
        %3341 = vmatpush1.msra.mxu0 0.0
        %3342 = vmatprep.subr.mxu0 0.0
        %3343 = vmatpush1.msra.mxu0 0.0
        %3344 = vmatprep.subr.mxu0 0.0
        %3345 = vmatpush1.msra.mxu0 0.0
        %3346 = vmatprep.subr.mxu0 0.0
        %3347 = vmatpush1.msra.mxu0 0.0
        %3348 = vmatprep.subr.mxu0 0.0
        %3349 = vmatpush1.msra.mxu0 0.0
        %3350 = vmatprep.subr.mxu0 0.0
        %3351 = vmatpush1.msra.mxu0 0.0
        %3352 = vmatprep.subr.mxu0 0.0
        %3353 = vmatpush1.msra.mxu0 0.0
        %3354 = vmatprep.subr.mxu0 %v3305
        %3355 = vmatpush1.msra.mxu0 %v3304
        %3356 = vmatprep.subr.mxu0 %v3301
        %3357 = vmatpush1.msra.mxu0 %v3300
        %3358 = vmatprep.subr.mxu0 %v3297
        %3359 = vmatpush1.msra.mxu0 %v3296
        %3360 = vmatprep.subr.mxu0 %v3293
        %3361 = vmatpush1.msra.mxu0 %v3292
        %3362 = vmatprep.subr.mxu0 0.0
        %3363 = vmatpush2.msra.mxu0 0.0
        %3364 = vmatprep.subr.mxu0 0.0
        %3365 = vmatpush2.msra.mxu0 0.0
        %3366 = vmatprep.subr.mxu0 0.0
        %3367 = vmatpush2.msra.mxu0 0.0
        %3368 = vmatprep.subr.mxu0 0.0
        %3369 = vmatpush2.msra.mxu0 0.0
        %3370 = vmatprep.subr.mxu0 0.0
        %3371 = vmatpush2.msra.mxu0 0.0
        %3372 = vmatprep.subr.mxu0 0.0
        %3373 = vmatpush2.msra.mxu0 0.0
        %3374 = vmatprep.subr.mxu0 0.0
        %3375 = vmatpush2.msra.mxu0 0.0
        %3376 = vmatprep.subr.mxu0 0.0
        %3377 = vmatpush2.msra.mxu0 0.0
        %3378 = vmatprep.subr.mxu0 0.0
        %3379 = vmatpush2.msra.mxu0 0.0
        %3380 = vmatprep.subr.mxu0 0.0
        %3381 = vmatpush2.msra.mxu0 0.0
        %3382 = vmatprep.subr.mxu0 0.0
        %3383 = vmatpush2.msra.mxu0 0.0
        %3384 = vmatprep.subr.mxu0 0.0
        %3385 = vmatpush2.msra.mxu0 0.0
        %3386 = vmatprep.subr.mxu0 0.0
        %3387 = vmatpush2.msra.mxu0 0.0
        %3388 = vmatprep.subr.mxu0 0.0
        %3389 = vmatpush2.msra.mxu0 0.0
        %3390 = vmatprep.subr.mxu0 0.0
        %3391 = vmatpush2.msra.mxu0 0.0
        %3392 = vmatprep.subr.mxu0 0.0
        %3393 = vmatpush2.msra.mxu0 0.0
        %3394 = vmatprep.mubr.f32.mxu0 0.0
        %3395 = vmatmul.mubr.f32.gmra.mxu0 %v2497
        %v3396 = vpop.f32.mrf.mxu0
        %v3397 = vadd.f32 %v3313, %v3396
        %v3398 = vpop.f32.mrf.mxu0
        %v3399 = vadd.f32 %v3317, %v3398
        %3400 = vmatprep.mubr.f32.mxu0 0.0
        %3401 = vmatmul.mubr.f32.gmra.mxu0 %v2500
        %v3402 = vpop.f32.mrf.mxu0
        %v3403 = vadd.f32 %v3313, %v3402
        %v3404 = vpop.f32.mrf.mxu0
        %v3405 = vadd.f32 %v3317, %v3404
        %3406 = vdwg.mxu0
        %3407 = vmatprep.subr.mxu0 0.0
        %3408 = vmatpush1.msra.mxu0 0.0
        %3409 = vmatprep.subr.mxu0 0.0
        %3410 = vmatpush1.msra.mxu0 0.0
        %3411 = vmatprep.subr.mxu0 0.0
        %3412 = vmatpush1.msra.mxu0 0.0
        %3413 = vmatprep.subr.mxu0 0.0
        %3414 = vmatpush1.msra.mxu0 0.0
        %3415 = vmatprep.subr.mxu0 0.0
        %3416 = vmatpush1.msra.mxu0 0.0
        %3417 = vmatprep.subr.mxu0 0.0
        %3418 = vmatpush1.msra.mxu0 0.0
        %3419 = vmatprep.subr.mxu0 0.0
        %3420 = vmatpush1.msra.mxu0 0.0
        %3421 = vmatprep.subr.mxu0 0.0
        %3422 = vmatpush1.msra.mxu0 0.0
        %3423 = vmatprep.subr.mxu0 0.0
        %3424 = vmatpush1.msra.mxu0 0.0
        %3425 = vmatprep.subr.mxu0 0.0
        %3426 = vmatpush1.msra.mxu0 0.0
        %3427 = vmatprep.subr.mxu0 0.0
        %3428 = vmatpush1.msra.mxu0 0.0
        %3429 = vmatprep.subr.mxu0 0.0
        %3430 = vmatpush1.msra.mxu0 0.0
        %3431 = vmatprep.subr.mxu0 %v3307
        %3432 = vmatpush1.msra.mxu0 %v3306
        %3433 = vmatprep.subr.mxu0 %v3303
        %3434 = vmatpush1.msra.mxu0 %v3302
        %3435 = vmatprep.subr.mxu0 %v3299
        %3436 = vmatpush1.msra.mxu0 %v3298
        %3437 = vmatprep.subr.mxu0 %v3295
        %3438 = vmatpush1.msra.mxu0 %v3294
        %3439 = vmatprep.subr.mxu0 0.0
        %3440 = vmatpush2.msra.mxu0 0.0
        %3441 = vmatprep.subr.mxu0 0.0
        %3442 = vmatpush2.msra.mxu0 0.0
        %3443 = vmatprep.subr.mxu0 0.0
        %3444 = vmatpush2.msra.mxu0 0.0
        %3445 = vmatprep.subr.mxu0 0.0
        %3446 = vmatpush2.msra.mxu0 0.0
        %3447 = vmatprep.subr.mxu0 0.0
        %3448 = vmatpush2.msra.mxu0 0.0
        %3449 = vmatprep.subr.mxu0 0.0
        %3450 = vmatpush2.msra.mxu0 0.0
        %3451 = vmatprep.subr.mxu0 0.0
        %3452 = vmatpush2.msra.mxu0 0.0
        %3453 = vmatprep.subr.mxu0 0.0
        %3454 = vmatpush2.msra.mxu0 0.0
        %3455 = vmatprep.subr.mxu0 0.0
        %3456 = vmatpush2.msra.mxu0 0.0
        %3457 = vmatprep.subr.mxu0 0.0
        %3458 = vmatpush2.msra.mxu0 0.0
        %3459 = vmatprep.subr.mxu0 0.0
        %3460 = vmatpush2.msra.mxu0 0.0
        %3461 = vmatprep.subr.mxu0 0.0
        %3462 = vmatpush2.msra.mxu0 0.0
        %3463 = vmatprep.subr.mxu0 0.0
        %3464 = vmatpush2.msra.mxu0 0.0
        %3465 = vmatprep.subr.mxu0 0.0
        %3466 = vmatpush2.msra.mxu0 0.0
        %3467 = vmatprep.subr.mxu0 0.0
        %3468 = vmatpush2.msra.mxu0 0.0
        %3469 = vmatprep.subr.mxu0 0.0
        %3470 = vmatpush2.msra.mxu0 0.0
        %3471 = vmatprep.mubr.f32.mxu0 0.0
        %3472 = vmatmul.mubr.f32.gmra.mxu0 %v2497
        %v3473 = vpop.f32.mrf.mxu0
        %v3474 = vadd.f32 %v3321, %v3473
        %v3475 = vpop.f32.mrf.mxu0
        %v3476 = vadd.f32 %v3325, %v3475
        %3477 = vmatprep.mubr.f32.mxu0 0.0
        %3478 = vmatmul.mubr.f32.gmra.mxu0 %v2500
        %v3479 = vpop.f32.mrf.mxu0
        %v3480 = vadd.f32 %v3321, %v3479
        %v3481 = vpop.f32.mrf.mxu0
        %v3482 = vadd.f32 %v3325, %v3481
        %3483 = vdwg.mxu0
        %v3484 = vmax.f32 %v3397, 0.0
        %v3485 = vmax.f32 %v3399, 0.0
        %v3486 = vmax.f32 %v3474, 0.0
        %v3487 = vmax.f32 %v3476, 0.0
        %v3488 = vmax.f32 %v3403, 0.0
        %v3489 = vmax.f32 %v3405, 0.0
        %v3490 = vmax.f32 %v3480, 0.0
        %v3491 = vmax.f32 %v3482, 0.0
        %v3492 = vld [vmem:[%s625 + $0x400] sm:$0xff]
        %v3493 = vld [vmem:[%s625 + $0x408] sm:$0xff]
        %v3494 = vld [vmem:[%s625 + $0x410] sm:$0xff]
        %v3495 = vld [vmem:[%s625 + $0x418] sm:$0xff]
        %v3496 = vld [vmem:[%s625 + $0x420] sm:$0xff]
        %v3497 = vld [vmem:[%s625 + $0x428] sm:$0xff]
        %v3498 = vld [vmem:[%s625 + $0x430] sm:$0xff]
        %v3499 = vld [vmem:[%s625 + $0x438] sm:$0xff]
        %v3500 = vld [vmem:[%s625 + $0x440] sm:$0xff]
        %v3501 = vld [vmem:[%s625 + $0x448] sm:$0xff]
        %v3502 = vld [vmem:[%s625 + $0x450] sm:$0xff]
        %v3503 = vld [vmem:[%s625 + $0x458] sm:$0xff]
        %v3504 = vld [vmem:[%s625 + $0x460] sm:$0xff]
        %v3505 = vld [vmem:[%s625 + $0x468] sm:$0xff]
        %v3506 = vld [vmem:[%s625 + $0x470] sm:$0xff]
        %v3507 = vld [vmem:[%s625 + $0x478] sm:$0xff]
        %v3508 = vld [vmem:[%s625 + $0x480] sm:$0xff]
        %v3509 = vld [vmem:[%s625 + $0x488] sm:$0xff]
        %v3510 = vld [vmem:[%s625 + $0x490] sm:$0xff]
        %v3511 = vld [vmem:[%s625 + $0x498] sm:$0xff]
        %v3512 = vld [vmem:[%s625 + $0x4a0] sm:$0xff]
        %v3513 = vld [vmem:[%s625 + $0x4a8] sm:$0xff]
        %v3514 = vld [vmem:[%s625 + $0x4b0] sm:$0xff]
        %v3515 = vld [vmem:[%s625 + $0x4b8] sm:$0xff]
        %v3516 = vld [vmem:[%s625 + $0x4c0] sm:$0xff]
        %v3517 = vld [vmem:[%s625 + $0x4c8] sm:$0xff]
        %v3518 = vld [vmem:[%s625 + $0x4d0] sm:$0xff]
        %v3519 = vld [vmem:[%s625 + $0x4d8] sm:$0xff]
        %v3520 = vld [vmem:[%s625 + $0x4e0] sm:$0xff]
        %v3521 = vld [vmem:[%s625 + $0x4e8] sm:$0xff]
        %v3522 = vld [vmem:[%s625 + $0x4f0] sm:$0xff]
        %v3523 = vld [vmem:[%s625 + $0x4f8] sm:$0xff]
        %v3524 = vld [vmem:[%s625 + $0x500] sm:$0xff]
        %v3525 = vld [vmem:[%s625 + $0x508] sm:$0xff]
        %v3526 = vld [vmem:[%s625 + $0x510] sm:$0xff]
        %v3527 = vld [vmem:[%s625 + $0x518] sm:$0xff]
        %v3528 = vld [vmem:[%s625 + $0x520] sm:$0xff]
        %v3529 = vld [vmem:[%s625 + $0x528] sm:$0xff]
        %v3530 = vld [vmem:[%s625 + $0x530] sm:$0xff]
        %v3531 = vld [vmem:[%s625 + $0x538] sm:$0xff]
        %v3532 = vld [vmem:[%s625 + $0x540] sm:$0xff]
        %v3533 = vld [vmem:[%s625 + $0x548] sm:$0xff]
        %v3534 = vld [vmem:[%s625 + $0x550] sm:$0xff]
        %v3535 = vld [vmem:[%s625 + $0x558] sm:$0xff]
        %v3536 = vld [vmem:[%s625 + $0x560] sm:$0xff]
        %v3537 = vld [vmem:[%s625 + $0x568] sm:$0xff]
        %v3538 = vld [vmem:[%s625 + $0x570] sm:$0xff]
        %v3539 = vld [vmem:[%s625 + $0x578] sm:$0xff]
        %v3540 = vld [vmem:[%s625 + $0x580] sm:$0xff]
        %v3541 = vld [vmem:[%s625 + $0x588] sm:$0xff]
        %v3542 = vld [vmem:[%s625 + $0x590] sm:$0xff]
        %v3543 = vld [vmem:[%s625 + $0x598] sm:$0xff]
        %v3544 = vld [vmem:[%s625 + $0x5a0] sm:$0xff]
        %v3545 = vld [vmem:[%s625 + $0x5a8] sm:$0xff]
        %v3546 = vld [vmem:[%s625 + $0x5b0] sm:$0xff]
        %v3547 = vld [vmem:[%s625 + $0x5b8] sm:$0xff]
        %v3548 = vld [vmem:[%s625 + $0x5c0] sm:$0xff]
        %v3549 = vld [vmem:[%s625 + $0x5c8] sm:$0xff]
        %v3550 = vld [vmem:[%s625 + $0x5d0] sm:$0xff]
        %v3551 = vld [vmem:[%s625 + $0x5d8] sm:$0xff]
        %v3552 = vld [vmem:[%s625 + $0x5e0] sm:$0xff]
        %v3553 = vld [vmem:[%s625 + $0x5e8] sm:$0xff]
        %v3554 = vld [vmem:[%s625 + $0x5f0] sm:$0xff]
        %v3555 = vld [vmem:[%s625 + $0x5f8] sm:$0xff]
        %3556 = vmatprep.subr.mxu0 0.0
        %3557 = vmatpush1.msra.mxu0 %v3507
        %3558 = vmatprep.subr.mxu0 0.0
        %3559 = vmatpush1.msra.mxu0 %v3506
        %3560 = vmatprep.subr.mxu0 0.0
        %3561 = vmatpush1.msra.mxu0 %v3505
        %3562 = vmatprep.subr.mxu0 0.0
        %3563 = vmatpush1.msra.mxu0 %v3504
        %3564 = vmatprep.subr.mxu0 0.0
        %3565 = vmatpush1.msra.mxu0 %v3503
        %3566 = vmatprep.subr.mxu0 0.0
        %3567 = vmatpush1.msra.mxu0 %v3502
        %3568 = vmatprep.subr.mxu0 0.0
        %3569 = vmatpush1.msra.mxu0 %v3501
        %3570 = vmatprep.subr.mxu0 0.0
        %3571 = vmatpush1.msra.mxu0 %v3500
        %3572 = vmatprep.subr.mxu0 0.0
        %3573 = vmatpush1.msra.mxu0 %v3499
        %3574 = vmatprep.subr.mxu0 0.0
        %3575 = vmatpush1.msra.mxu0 %v3498
        %3576 = vmatprep.subr.mxu0 0.0
        %3577 = vmatpush1.msra.mxu0 %v3497
        %3578 = vmatprep.subr.mxu0 0.0
        %3579 = vmatpush1.msra.mxu0 %v3496
        %3580 = vmatprep.subr.mxu0 0.0
        %3581 = vmatpush1.msra.mxu0 %v3495
        %3582 = vmatprep.subr.mxu0 0.0
        %3583 = vmatpush1.msra.mxu0 %v3494
        %3584 = vmatprep.subr.mxu0 0.0
        %3585 = vmatpush1.msra.mxu0 %v3493
        %3586 = vmatprep.subr.mxu0 0.0
        %3587 = vmatpush1.msra.mxu0 %v3492
        %3588 = vmatprep.subr.mxu0 0.0
        %3589 = vmatpush2.msra.mxu0 %v3523
        %3590 = vmatprep.subr.mxu0 0.0
        %3591 = vmatpush2.msra.mxu0 %v3522
        %3592 = vmatprep.subr.mxu0 0.0
        %3593 = vmatpush2.msra.mxu0 %v3521
        %3594 = vmatprep.subr.mxu0 0.0
        %3595 = vmatpush2.msra.mxu0 %v3520
        %3596 = vmatprep.subr.mxu0 0.0
        %3597 = vmatpush2.msra.mxu0 %v3519
        %3598 = vmatprep.subr.mxu0 0.0
        %3599 = vmatpush2.msra.mxu0 %v3518
        %3600 = vmatprep.subr.mxu0 0.0
        %3601 = vmatpush2.msra.mxu0 %v3517
        %3602 = vmatprep.subr.mxu0 0.0
        %3603 = vmatpush2.msra.mxu0 %v3516
        %3604 = vmatprep.subr.mxu0 0.0
        %3605 = vmatpush2.msra.mxu0 %v3515
        %3606 = vmatprep.subr.mxu0 0.0
        %3607 = vmatpush2.msra.mxu0 %v3514
        %3608 = vmatprep.subr.mxu0 0.0
        %3609 = vmatpush2.msra.mxu0 %v3513
        %3610 = vmatprep.subr.mxu0 0.0
        %3611 = vmatpush2.msra.mxu0 %v3512
        %3612 = vmatprep.subr.mxu0 0.0
        %3613 = vmatpush2.msra.mxu0 %v3511
        %3614 = vmatprep.subr.mxu0 0.0
        %3615 = vmatpush2.msra.mxu0 %v3510
        %3616 = vmatprep.subr.mxu0 0.0
        %3617 = vmatpush2.msra.mxu0 %v3509
        %3618 = vmatprep.subr.mxu0 0.0
        %3619 = vmatpush2.msra.mxu0 %v3508
        %3620 = vmatprep.mubr.f32.mxu0 %v3485
        %3621 = vmatmul.mubr.f32.gmra.mxu0 %v3484
        %v3622 = vpop.f32.mrf.mxu0
        %v3623 = vadd.f32 0.0, %v3622
        %v3624 = vpop.f32.mrf.mxu0
        %3625 = vmatprep.mubr.f32.mxu0 %v3489
        %3626 = vmatmul.mubr.f32.gmra.mxu0 %v3488
        %v3627 = vpop.f32.mrf.mxu0
        %v3628 = vadd.f32 0.0, %v3627
        %v3629 = vpop.f32.mrf.mxu0
        %3630 = vdwg.mxu0
        %3631 = vmatprep.subr.mxu0 0.0
        %3632 = vmatpush1.msra.mxu0 %v3539
        %3633 = vmatprep.subr.mxu0 0.0
        %3634 = vmatpush1.msra.mxu0 %v3538
        %3635 = vmatprep.subr.mxu0 0.0
        %3636 = vmatpush1.msra.mxu0 %v3537
        %3637 = vmatprep.subr.mxu0 0.0
        %3638 = vmatpush1.msra.mxu0 %v3536
        %3639 = vmatprep.subr.mxu0 0.0
        %3640 = vmatpush1.msra.mxu0 %v3535
        %3641 = vmatprep.subr.mxu0 0.0
        %3642 = vmatpush1.msra.mxu0 %v3534
        %3643 = vmatprep.subr.mxu0 0.0
        %3644 = vmatpush1.msra.mxu0 %v3533
        %3645 = vmatprep.subr.mxu0 0.0
        %3646 = vmatpush1.msra.mxu0 %v3532
        %3647 = vmatprep.subr.mxu0 0.0
        %3648 = vmatpush1.msra.mxu0 %v3531
        %3649 = vmatprep.subr.mxu0 0.0
        %3650 = vmatpush1.msra.mxu0 %v3530
        %3651 = vmatprep.subr.mxu0 0.0
        %3652 = vmatpush1.msra.mxu0 %v3529
        %3653 = vmatprep.subr.mxu0 0.0
        %3654 = vmatpush1.msra.mxu0 %v3528
        %3655 = vmatprep.subr.mxu0 0.0
        %3656 = vmatpush1.msra.mxu0 %v3527
        %3657 = vmatprep.subr.mxu0 0.0
        %3658 = vmatpush1.msra.mxu0 %v3526
        %3659 = vmatprep.subr.mxu0 0.0
        %3660 = vmatpush1.msra.mxu0 %v3525
        %3661 = vmatprep.subr.mxu0 0.0
        %3662 = vmatpush1.msra.mxu0 %v3524
        %3663 = vmatprep.subr.mxu0 0.0
        %3664 = vmatpush2.msra.mxu0 %v3555
        %3665 = vmatprep.subr.mxu0 0.0
        %3666 = vmatpush2.msra.mxu0 %v3554
        %3667 = vmatprep.subr.mxu0 0.0
        %3668 = vmatpush2.msra.mxu0 %v3553
        %3669 = vmatprep.subr.mxu0 0.0
        %3670 = vmatpush2.msra.mxu0 %v3552
        %3671 = vmatprep.subr.mxu0 0.0
        %3672 = vmatpush2.msra.mxu0 %v3551
        %3673 = vmatprep.subr.mxu0 0.0
        %3674 = vmatpush2.msra.mxu0 %v3550
        %3675 = vmatprep.subr.mxu0 0.0
        %3676 = vmatpush2.msra.mxu0 %v3549
        %3677 = vmatprep.subr.mxu0 0.0
        %3678 = vmatpush2.msra.mxu0 %v3548
        %3679 = vmatprep.subr.mxu0 0.0
        %3680 = vmatpush2.msra.mxu0 %v3547
        %3681 = vmatprep.subr.mxu0 0.0
        %3682 = vmatpush2.msra.mxu0 %v3546
        %3683 = vmatprep.subr.mxu0 0.0
        %3684 = vmatpush2.msra.mxu0 %v3545
        %3685 = vmatprep.subr.mxu0 0.0
        %3686 = vmatpush2.msra.mxu0 %v3544
        %3687 = vmatprep.subr.mxu0 0.0
        %3688 = vmatpush2.msra.mxu0 %v3543
        %3689 = vmatprep.subr.mxu0 0.0
        %3690 = vmatpush2.msra.mxu0 %v3542
        %3691 = vmatprep.subr.mxu0 0.0
        %3692 = vmatpush2.msra.mxu0 %v3541
        %3693 = vmatprep.subr.mxu0 0.0
        %3694 = vmatpush2.msra.mxu0 %v3540
        %3695 = vmatprep.mubr.f32.mxu0 %v3487
        %3696 = vmatmul.mubr.f32.gmra.mxu0 %v3486
        %v3697 = vpop.f32.mrf.mxu0
        %v3698 = vadd.f32 %v3623, %v3697
        %v3699 = vpop.f32.mrf.mxu0
        %3700 = vmatprep.mubr.f32.mxu0 %v3491
        %3701 = vmatmul.mubr.f32.gmra.mxu0 %v3490
        %v3702 = vpop.f32.mrf.mxu0
        %v3703 = vadd.f32 %v3628, %v3702
        %v3704 = vpop.f32.mrf.mxu0
        %3705 = vdwg.mxu0
        %v3706 = vadd.f32 %v3284, %v3698
        %v3707 = vadd.f32 %v3289, %v3703
        %v3708 = vld [vmem:[%s616 + $0x60] sm:$0xff]
        %v3709 = vld [vmem:[%s616 + $0x68] sm:$0xff]
        %v3710 = vld [vmem:[%s616 + $0x70] sm:$0xff]
        %v3711 = vld [vmem:[%s616 + $0x78] sm:$0xff]
        %v3712 = vld [vmem:[%s616 + $0xe0] sm:$0xff]
        %v3713 = vld [vmem:[%s616 + $0xe8] sm:$0xff]
        %v3714 = vld [vmem:[%s616 + $0xf0] sm:$0xff]
        %v3715 = vld [vmem:[%s616 + $0xf8] sm:$0xff]
        %v3716 = vld [vmem:[%s616 + $0x160] sm:$0xff]
        %v3717 = vld [vmem:[%s616 + $0x168] sm:$0xff]
        %v3718 = vld [vmem:[%s616 + $0x170] sm:$0xff]
        %v3719 = vld [vmem:[%s616 + $0x178] sm:$0xff]
        %v3720 = vld [vmem:[%s616 + $0x1e0] sm:$0xff]
        %v3721 = vld [vmem:[%s616 + $0x1e8] sm:$0xff]
        %v3722 = vld [vmem:[%s616 + $0x1f0] sm:$0xff]
        %v3723 = vld [vmem:[%s616 + $0x1f8] sm:$0xff]
        %v3724 = vld [vmem:[%s620 + $0xc] sm:$0xf]
        %v3726 = vlaneseq
        %v3727 = vshrl.u32 %v3726, 7
        %v3728 = vsub.s32 0, %v3727
        %v3729 = vrot.slane %v3724, %v3728
        %v3730 = vlaneseq
        %v3731 = vshrl.u32 %v3730, 7
        %v3732 = vsub.s32 1, %v3731
        %v3733 = vrot.slane %v3724, %v3732
        %v3734 = vlaneseq
        %v3735 = vshrl.u32 %v3734, 7
        %v3736 = vsub.s32 2, %v3735
        %v3737 = vrot.slane %v3724, %v3736
        %v3738 = vlaneseq
        %v3739 = vshrl.u32 %v3738, 7
        %v3740 = vsub.s32 3, %v3739
        %v3741 = vrot.slane %v3724, %v3740
        %3746 = vmatprep.subr.mxu0 0.0
        %3747 = vmatpush1.msra.mxu0 0.0
        %3748 = vmatprep.subr.mxu0 0.0
        %3749 = vmatpush1.msra.mxu0 0.0
        %3750 = vmatprep.subr.mxu0 0.0
        %3751 = vmatpush1.msra.mxu0 0.0
        %3752 = vmatprep.subr.mxu0 0.0
        %3753 = vmatpush1.msra.mxu0 0.0
        %3754 = vmatprep.subr.mxu0 0.0
        %3755 = vmatpush1.msra.mxu0 0.0
        %3756 = vmatprep.subr.mxu0 0.0
        %3757 = vmatpush1.msra.mxu0 0.0
        %3758 = vmatprep.subr.mxu0 0.0
        %3759 = vmatpush1.msra.mxu0 0.0
        %3760 = vmatprep.subr.mxu0 0.0
        %3761 = vmatpush1.msra.mxu0 0.0
        %3762 = vmatprep.subr.mxu0 0.0
        %3763 = vmatpush1.msra.mxu0 0.0
        %3764 = vmatprep.subr.mxu0 0.0
        %3765 = vmatpush1.msra.mxu0 0.0
        %3766 = vmatprep.subr.mxu0 0.0
        %3767 = vmatpush1.msra.mxu0 0.0
        %3768 = vmatprep.subr.mxu0 0.0
        %3769 = vmatpush1.msra.mxu0 0.0
        %3770 = vmatprep.subr.mxu0 %v3721
        %3771 = vmatpush1.msra.mxu0 %v3720
        %3772 = vmatprep.subr.mxu0 %v3717
        %3773 = vmatpush1.msra.mxu0 %v3716
        %3774 = vmatprep.subr.mxu0 %v3713
        %3775 = vmatpush1.msra.mxu0 %v3712
        %3776 = vmatprep.subr.mxu0 %v3709
        %3777 = vmatpush1.msra.mxu0 %v3708
        %3778 = vmatprep.subr.mxu0 0.0
        %3779 = vmatpush2.msra.mxu0 0.0
        %3780 = vmatprep.subr.mxu0 0.0
        %3781 = vmatpush2.msra.mxu0 0.0
        %3782 = vmatprep.subr.mxu0 0.0
        %3783 = vmatpush2.msra.mxu0 0.0
        %3784 = vmatprep.subr.mxu0 0.0
        %3785 = vmatpush2.msra.mxu0 0.0
        %3786 = vmatprep.subr.mxu0 0.0
        %3787 = vmatpush2.msra.mxu0 0.0
        %3788 = vmatprep.subr.mxu0 0.0
        %3789 = vmatpush2.msra.mxu0 0.0
        %3790 = vmatprep.subr.mxu0 0.0
        %3791 = vmatpush2.msra.mxu0 0.0
        %3792 = vmatprep.subr.mxu0 0.0
        %3793 = vmatpush2.msra.mxu0 0.0
        %3794 = vmatprep.subr.mxu0 0.0
        %3795 = vmatpush2.msra.mxu0 0.0
        %3796 = vmatprep.subr.mxu0 0.0
        %3797 = vmatpush2.msra.mxu0 0.0
        %3798 = vmatprep.subr.mxu0 0.0
        %3799 = vmatpush2.msra.mxu0 0.0
        %3800 = vmatprep.subr.mxu0 0.0
        %3801 = vmatpush2.msra.mxu0 0.0
        %3802 = vmatprep.subr.mxu0 0.0
        %3803 = vmatpush2.msra.mxu0 0.0
        %3804 = vmatprep.subr.mxu0 0.0
        %3805 = vmatpush2.msra.mxu0 0.0
        %3806 = vmatprep.subr.mxu0 0.0
        %3807 = vmatpush2.msra.mxu0 0.0
        %3808 = vmatprep.subr.mxu0 0.0
        %3809 = vmatpush2.msra.mxu0 0.0
        %3810 = vmatprep.mubr.f32.mxu0 0.0
        %3811 = vmatmul.mubr.f32.gmra.mxu0 %v2497
        %v3812 = vpop.f32.mrf.mxu0
        %v3813 = vadd.f32 %v3729, %v3812
        %v3814 = vpop.f32.mrf.mxu0
        %v3815 = vadd.f32 %v3733, %v3814
        %3816 = vmatprep.mubr.f32.mxu0 0.0
        %3817 = vmatmul.mubr.f32.gmra.mxu0 %v2500
        %v3818 = vpop.f32.mrf.mxu0
        %v3819 = vadd.f32 %v3729, %v3818
        %v3820 = vpop.f32.mrf.mxu0
        %v3821 = vadd.f32 %v3733, %v3820
        %3822 = vdwg.mxu0
        %3823 = vmatprep.subr.mxu0 0.0
        %3824 = vmatpush1.msra.mxu0 0.0
        %3825 = vmatprep.subr.mxu0 0.0
        %3826 = vmatpush1.msra.mxu0 0.0
        %3827 = vmatprep.subr.mxu0 0.0
        %3828 = vmatpush1.msra.mxu0 0.0
        %3829 = vmatprep.subr.mxu0 0.0
        %3830 = vmatpush1.msra.mxu0 0.0
        %3831 = vmatprep.subr.mxu0 0.0
        %3832 = vmatpush1.msra.mxu0 0.0
        %3833 = vmatprep.subr.mxu0 0.0
        %3834 = vmatpush1.msra.mxu0 0.0
        %3835 = vmatprep.subr.mxu0 0.0
        %3836 = vmatpush1.msra.mxu0 0.0
        %3837 = vmatprep.subr.mxu0 0.0
        %3838 = vmatpush1.msra.mxu0 0.0
        %3839 = vmatprep.subr.mxu0 0.0
        %3840 = vmatpush1.msra.mxu0 0.0
        %3841 = vmatprep.subr.mxu0 0.0
        %3842 = vmatpush1.msra.mxu0 0.0
        %3843 = vmatprep.subr.mxu0 0.0
        %3844 = vmatpush1.msra.mxu0 0.0
        %3845 = vmatprep.subr.mxu0 0.0
        %3846 = vmatpush1.msra.mxu0 0.0
        %3847 = vmatprep.subr.mxu0 %v3723
        %3848 = vmatpush1.msra.mxu0 %v3722
        %3849 = vmatprep.subr.mxu0 %v3719
        %3850 = vmatpush1.msra.mxu0 %v3718
        %3851 = vmatprep.subr.mxu0 %v3715
        %3852 = vmatpush1.msra.mxu0 %v3714
        %3853 = vmatprep.subr.mxu0 %v3711
        %3854 = vmatpush1.msra.mxu0 %v3710
        %3855 = vmatprep.subr.mxu0 0.0
        %3856 = vmatpush2.msra.mxu0 0.0
        %3857 = vmatprep.subr.mxu0 0.0
        %3858 = vmatpush2.msra.mxu0 0.0
        %3859 = vmatprep.subr.mxu0 0.0
        %3860 = vmatpush2.msra.mxu0 0.0
        %3861 = vmatprep.subr.mxu0 0.0
        %3862 = vmatpush2.msra.mxu0 0.0
        %3863 = vmatprep.subr.mxu0 0.0
        %3864 = vmatpush2.msra.mxu0 0.0
        %3865 = vmatprep.subr.mxu0 0.0
        %3866 = vmatpush2.msra.mxu0 0.0
        %3867 = vmatprep.subr.mxu0 0.0
        %3868 = vmatpush2.msra.mxu0 0.0
        %3869 = vmatprep.subr.mxu0 0.0
        %3870 = vmatpush2.msra.mxu0 0.0
        %3871 = vmatprep.subr.mxu0 0.0
        %3872 = vmatpush2.msra.mxu0 0.0
        %3873 = vmatprep.subr.mxu0 0.0
        %3874 = vmatpush2.msra.mxu0 0.0
        %3875 = vmatprep.subr.mxu0 0.0
        %3876 = vmatpush2.msra.mxu0 0.0
        %3877 = vmatprep.subr.mxu0 0.0
        %3878 = vmatpush2.msra.mxu0 0.0
        %3879 = vmatprep.subr.mxu0 0.0
        %3880 = vmatpush2.msra.mxu0 0.0
        %3881 = vmatprep.subr.mxu0 0.0
        %3882 = vmatpush2.msra.mxu0 0.0
        %3883 = vmatprep.subr.mxu0 0.0
        %3884 = vmatpush2.msra.mxu0 0.0
        %3885 = vmatprep.subr.mxu0 0.0
        %3886 = vmatpush2.msra.mxu0 0.0
        %3887 = vmatprep.mubr.f32.mxu0 0.0
        %3888 = vmatmul.mubr.f32.gmra.mxu0 %v2497
        %v3889 = vpop.f32.mrf.mxu0
        %v3890 = vadd.f32 %v3737, %v3889
        %v3891 = vpop.f32.mrf.mxu0
        %v3892 = vadd.f32 %v3741, %v3891
        %3893 = vmatprep.mubr.f32.mxu0 0.0
        %3894 = vmatmul.mubr.f32.gmra.mxu0 %v2500
        %v3895 = vpop.f32.mrf.mxu0
        %v3896 = vadd.f32 %v3737, %v3895
        %v3897 = vpop.f32.mrf.mxu0
        %v3898 = vadd.f32 %v3741, %v3897
        %3899 = vdwg.mxu0
        %v3900 = vmax.f32 %v3813, 0.0
        %v3901 = vmax.f32 %v3815, 0.0
        %v3902 = vmax.f32 %v3890, 0.0
        %v3903 = vmax.f32 %v3892, 0.0
        %v3904 = vmax.f32 %v3819, 0.0
        %v3905 = vmax.f32 %v3821, 0.0
        %v3906 = vmax.f32 %v3896, 0.0
        %v3907 = vmax.f32 %v3898, 0.0
        %v3908 = vld [vmem:[%s625 + $0x600] sm:$0xff]
        %v3909 = vld [vmem:[%s625 + $0x608] sm:$0xff]
        %v3910 = vld [vmem:[%s625 + $0x610] sm:$0xff]
        %v3911 = vld [vmem:[%s625 + $0x618] sm:$0xff]
        %v3912 = vld [vmem:[%s625 + $0x620] sm:$0xff]
        %v3913 = vld [vmem:[%s625 + $0x628] sm:$0xff]
        %v3914 = vld [vmem:[%s625 + $0x630] sm:$0xff]
        %v3915 = vld [vmem:[%s625 + $0x638] sm:$0xff]
        %v3916 = vld [vmem:[%s625 + $0x640] sm:$0xff]
        %v3917 = vld [vmem:[%s625 + $0x648] sm:$0xff]
        %v3918 = vld [vmem:[%s625 + $0x650] sm:$0xff]
        %v3919 = vld [vmem:[%s625 + $0x658] sm:$0xff]
        %v3920 = vld [vmem:[%s625 + $0x660] sm:$0xff]
        %v3921 = vld [vmem:[%s625 + $0x668] sm:$0xff]
        %v3922 = vld [vmem:[%s625 + $0x670] sm:$0xff]
        %v3923 = vld [vmem:[%s625 + $0x678] sm:$0xff]
        %v3924 = vld [vmem:[%s625 + $0x680] sm:$0xff]
        %v3925 = vld [vmem:[%s625 + $0x688] sm:$0xff]
        %v3926 = vld [vmem:[%s625 + $0x690] sm:$0xff]
        %v3927 = vld [vmem:[%s625 + $0x698] sm:$0xff]
        %v3928 = vld [vmem:[%s625 + $0x6a0] sm:$0xff]
        %v3929 = vld [vmem:[%s625 + $0x6a8] sm:$0xff]
        %v3930 = vld [vmem:[%s625 + $0x6b0] sm:$0xff]
        %v3931 = vld [vmem:[%s625 + $0x6b8] sm:$0xff]
        %v3932 = vld [vmem:[%s625 + $0x6c0] sm:$0xff]
        %v3933 = vld [vmem:[%s625 + $0x6c8] sm:$0xff]
        %v3934 = vld [vmem:[%s625 + $0x6d0] sm:$0xff]
        %v3935 = vld [vmem:[%s625 + $0x6d8] sm:$0xff]
        %v3936 = vld [vmem:[%s625 + $0x6e0] sm:$0xff]
        %v3937 = vld [vmem:[%s625 + $0x6e8] sm:$0xff]
        %v3938 = vld [vmem:[%s625 + $0x6f0] sm:$0xff]
        %v3939 = vld [vmem:[%s625 + $0x6f8] sm:$0xff]
        %v3940 = vld [vmem:[%s625 + $0x700] sm:$0xff]
        %v3941 = vld [vmem:[%s625 + $0x708] sm:$0xff]
        %v3942 = vld [vmem:[%s625 + $0x710] sm:$0xff]
        %v3943 = vld [vmem:[%s625 + $0x718] sm:$0xff]
        %v3944 = vld [vmem:[%s625 + $0x720] sm:$0xff]
        %v3945 = vld [vmem:[%s625 + $0x728] sm:$0xff]
        %v3946 = vld [vmem:[%s625 + $0x730] sm:$0xff]
        %v3947 = vld [vmem:[%s625 + $0x738] sm:$0xff]
        %v3948 = vld [vmem:[%s625 + $0x740] sm:$0xff]
        %v3949 = vld [vmem:[%s625 + $0x748] sm:$0xff]
        %v3950 = vld [vmem:[%s625 + $0x750] sm:$0xff]
        %v3951 = vld [vmem:[%s625 + $0x758] sm:$0xff]
        %v3952 = vld [vmem:[%s625 + $0x760] sm:$0xff]
        %v3953 = vld [vmem:[%s625 + $0x768] sm:$0xff]
        %v3954 = vld [vmem:[%s625 + $0x770] sm:$0xff]
        %v3955 = vld [vmem:[%s625 + $0x778] sm:$0xff]
        %v3956 = vld [vmem:[%s625 + $0x780] sm:$0xff]
        %v3957 = vld [vmem:[%s625 + $0x788] sm:$0xff]
        %v3958 = vld [vmem:[%s625 + $0x790] sm:$0xff]
        %v3959 = vld [vmem:[%s625 + $0x798] sm:$0xff]
        %v3960 = vld [vmem:[%s625 + $0x7a0] sm:$0xff]
        %v3961 = vld [vmem:[%s625 + $0x7a8] sm:$0xff]
        %v3962 = vld [vmem:[%s625 + $0x7b0] sm:$0xff]
        %v3963 = vld [vmem:[%s625 + $0x7b8] sm:$0xff]
        %v3964 = vld [vmem:[%s625 + $0x7c0] sm:$0xff]
        %v3965 = vld [vmem:[%s625 + $0x7c8] sm:$0xff]
        %v3966 = vld [vmem:[%s625 + $0x7d0] sm:$0xff]
        %v3967 = vld [vmem:[%s625 + $0x7d8] sm:$0xff]
        %v3968 = vld [vmem:[%s625 + $0x7e0] sm:$0xff]
        %v3969 = vld [vmem:[%s625 + $0x7e8] sm:$0xff]
        %v3970 = vld [vmem:[%s625 + $0x7f0] sm:$0xff]
        %v3971 = vld [vmem:[%s625 + $0x7f8] sm:$0xff]
        %3972 = vmatprep.subr.mxu0 0.0
        %3973 = vmatpush1.msra.mxu0 %v3923
        %3974 = vmatprep.subr.mxu0 0.0
        %3975 = vmatpush1.msra.mxu0 %v3922
        %3976 = vmatprep.subr.mxu0 0.0
        %3977 = vmatpush1.msra.mxu0 %v3921
        %3978 = vmatprep.subr.mxu0 0.0
        %3979 = vmatpush1.msra.mxu0 %v3920
        %3980 = vmatprep.subr.mxu0 0.0
        %3981 = vmatpush1.msra.mxu0 %v3919
        %3982 = vmatprep.subr.mxu0 0.0
        %3983 = vmatpush1.msra.mxu0 %v3918
        %3984 = vmatprep.subr.mxu0 0.0
        %3985 = vmatpush1.msra.mxu0 %v3917
        %3986 = vmatprep.subr.mxu0 0.0
        %3987 = vmatpush1.msra.mxu0 %v3916
        %3988 = vmatprep.subr.mxu0 0.0
        %3989 = vmatpush1.msra.mxu0 %v3915
        %3990 = vmatprep.subr.mxu0 0.0
        %3991 = vmatpush1.msra.mxu0 %v3914
        %3992 = vmatprep.subr.mxu0 0.0
        %3993 = vmatpush1.msra.mxu0 %v3913
        %3994 = vmatprep.subr.mxu0 0.0
        %3995 = vmatpush1.msra.mxu0 %v3912
        %3996 = vmatprep.subr.mxu0 0.0
        %3997 = vmatpush1.msra.mxu0 %v3911
        %3998 = vmatprep.subr.mxu0 0.0
        %3999 = vmatpush1.msra.mxu0 %v3910
        %4000 = vmatprep.subr.mxu0 0.0
        %4001 = vmatpush1.msra.mxu0 %v3909
        %4002 = vmatprep.subr.mxu0 0.0
        %4003 = vmatpush1.msra.mxu0 %v3908
        %4004 = vmatprep.subr.mxu0 0.0
        %4005 = vmatpush2.msra.mxu0 %v3939
        %4006 = vmatprep.subr.mxu0 0.0
        %4007 = vmatpush2.msra.mxu0 %v3938
        %4008 = vmatprep.subr.mxu0 0.0
        %4009 = vmatpush2.msra.mxu0 %v3937
        %4010 = vmatprep.subr.mxu0 0.0
        %4011 = vmatpush2.msra.mxu0 %v3936
        %4012 = vmatprep.subr.mxu0 0.0
        %4013 = vmatpush2.msra.mxu0 %v3935
        %4014 = vmatprep.subr.mxu0 0.0
        %4015 = vmatpush2.msra.mxu0 %v3934
        %4016 = vmatprep.subr.mxu0 0.0
        %4017 = vmatpush2.msra.mxu0 %v3933
        %4018 = vmatprep.subr.mxu0 0.0
        %4019 = vmatpush2.msra.mxu0 %v3932
        %4020 = vmatprep.subr.mxu0 0.0
        %4021 = vmatpush2.msra.mxu0 %v3931
        %4022 = vmatprep.subr.mxu0 0.0
        %4023 = vmatpush2.msra.mxu0 %v3930
        %4024 = vmatprep.subr.mxu0 0.0
        %4025 = vmatpush2.msra.mxu0 %v3929
        %4026 = vmatprep.subr.mxu0 0.0
        %4027 = vmatpush2.msra.mxu0 %v3928
        %4028 = vmatprep.subr.mxu0 0.0
        %4029 = vmatpush2.msra.mxu0 %v3927
        %4030 = vmatprep.subr.mxu0 0.0
        %4031 = vmatpush2.msra.mxu0 %v3926
        %4032 = vmatprep.subr.mxu0 0.0
        %4033 = vmatpush2.msra.mxu0 %v3925
        %4034 = vmatprep.subr.mxu0 0.0
        %4035 = vmatpush2.msra.mxu0 %v3924
        %4036 = vmatprep.mubr.f32.mxu0 %v3901
        %4037 = vmatmul.mubr.f32.gmra.mxu0 %v3900
        %v4038 = vpop.f32.mrf.mxu0
        %v4039 = vadd.f32 0.0, %v4038
        %v4040 = vpop.f32.mrf.mxu0
        %4041 = vmatprep.mubr.f32.mxu0 %v3905
        %4042 = vmatmul.mubr.f32.gmra.mxu0 %v3904
        %v4043 = vpop.f32.mrf.mxu0
        %v4044 = vadd.f32 0.0, %v4043
        %v4045 = vpop.f32.mrf.mxu0
        %4046 = vdwg.mxu0
        %4047 = vmatprep.subr.mxu0 0.0
        %4048 = vmatpush1.msra.mxu0 %v3955
        %4049 = vmatprep.subr.mxu0 0.0
        %4050 = vmatpush1.msra.mxu0 %v3954
        %4051 = vmatprep.subr.mxu0 0.0
        %4052 = vmatpush1.msra.mxu0 %v3953
        %4053 = vmatprep.subr.mxu0 0.0
        %4054 = vmatpush1.msra.mxu0 %v3952
        %4055 = vmatprep.subr.mxu0 0.0
        %4056 = vmatpush1.msra.mxu0 %v3951
        %4057 = vmatprep.subr.mxu0 0.0
        %4058 = vmatpush1.msra.mxu0 %v3950
        %4059 = vmatprep.subr.mxu0 0.0
        %4060 = vmatpush1.msra.mxu0 %v3949
        %4061 = vmatprep.subr.mxu0 0.0
        %4062 = vmatpush1.msra.mxu0 %v3948
        %4063 = vmatprep.subr.mxu0 0.0
        %4064 = vmatpush1.msra.mxu0 %v3947
        %4065 = vmatprep.subr.mxu0 0.0
        %4066 = vmatpush1.msra.mxu0 %v3946
        %4067 = vmatprep.subr.mxu0 0.0
        %4068 = vmatpush1.msra.mxu0 %v3945
        %4069 = vmatprep.subr.mxu0 0.0
        %4070 = vmatpush1.msra.mxu0 %v3944
        %4071 = vmatprep.subr.mxu0 0.0
        %4072 = vmatpush1.msra.mxu0 %v3943
        %4073 = vmatprep.subr.mxu0 0.0
        %4074 = vmatpush1.msra.mxu0 %v3942
        %4075 = vmatprep.subr.mxu0 0.0
        %4076 = vmatpush1.msra.mxu0 %v3941
        %4077 = vmatprep.subr.mxu0 0.0
        %4078 = vmatpush1.msra.mxu0 %v3940
        %4079 = vmatprep.subr.mxu0 0.0
        %4080 = vmatpush2.msra.mxu0 %v3971
        %4081 = vmatprep.subr.mxu0 0.0
        %4082 = vmatpush2.msra.mxu0 %v3970
        %4083 = vmatprep.subr.mxu0 0.0
        %4084 = vmatpush2.msra.mxu0 %v3969
        %4085 = vmatprep.subr.mxu0 0.0
        %4086 = vmatpush2.msra.mxu0 %v3968
        %4087 = vmatprep.subr.mxu0 0.0
        %4088 = vmatpush2.msra.mxu0 %v3967
        %4089 = vmatprep.subr.mxu0 0.0
        %4090 = vmatpush2.msra.mxu0 %v3966
        %4091 = vmatprep.subr.mxu0 0.0
        %4092 = vmatpush2.msra.mxu0 %v3965
        %4093 = vmatprep.subr.mxu0 0.0
        %4094 = vmatpush2.msra.mxu0 %v3964
        %4095 = vmatprep.subr.mxu0 0.0
        %4096 = vmatpush2.msra.mxu0 %v3963
        %4097 = vmatprep.subr.mxu0 0.0
        %4098 = vmatpush2.msra.mxu0 %v3962
        %4099 = vmatprep.subr.mxu0 0.0
        %4100 = vmatpush2.msra.mxu0 %v3961
        %4101 = vmatprep.subr.mxu0 0.0
        %4102 = vmatpush2.msra.mxu0 %v3960
        %4103 = vmatprep.subr.mxu0 0.0
        %4104 = vmatpush2.msra.mxu0 %v3959
        %4105 = vmatprep.subr.mxu0 0.0
        %4106 = vmatpush2.msra.mxu0 %v3958
        %4107 = vmatprep.subr.mxu0 0.0
        %4108 = vmatpush2.msra.mxu0 %v3957
        %4109 = vmatprep.subr.mxu0 0.0
        %4110 = vmatpush2.msra.mxu0 %v3956
        %4111 = vmatprep.mubr.f32.mxu0 %v3903
        %4112 = vmatmul.mubr.f32.gmra.mxu0 %v3902
        %v4113 = vpop.f32.mrf.mxu0
        %v4114 = vadd.f32 %v4039, %v4113
        %v4115 = vpop.f32.mrf.mxu0
        %4116 = vmatprep.mubr.f32.mxu0 %v3907
        %4117 = vmatmul.mubr.f32.gmra.mxu0 %v3906
        %v4118 = vpop.f32.mrf.mxu0
        %v4119 = vadd.f32 %v4044, %v4118
        %v4120 = vpop.f32.mrf.mxu0
        %4121 = vdwg.mxu0
        %v4122 = vadd.f32 %v3706, %v4114
        %v4123 = vadd.f32 %v3707, %v4119
        %v4124 = vld [vmem:[%s628] sm:$0x1]
        %v4126 = vlaneseq
        %v4127 = vshrl.u32 %v4126, 7
        %v4128 = vsub.s32 0, %v4127
        %v4129 = vrot.slane %v4124, %v4128
        %v4131 = vadd.f32 %v4122, %v4129
        %v4132 = vadd.f32 %v4123, %v4129
        %v4133 = vadd.f32 %v2456, %v4131
        %v4134 = vadd.f32 %v2457, %v4132
        %v4135 = vld [vmem:[%s637] sm:$0x1]
        %v4136 = vld [vmem:[%s640] sm:$0x1]
        %v4137 = vsel %vm664, %v4133, 0.0
        %4138 = vadd.xlane.f32.xlu0 %v4137
        %v4139 = vpop.xlane.xlu0 %4138
        %v4140 = vsel %vm664, %v4134, 0.0
        %4141 = vadd.xlane.f32.xlu0 %v4140
        %v4142 = vpop.xlane.xlu0 %4141
        %v4143 = vmul.f32 %v4139, %v2421
        %v4144 = vmul.f32 %v4142, %v2421
        %v4145 = vsub.f32 %v4133, %v4143
        %v4146 = vsub.f32 %v4134, %v4144
        %v4147 = vmul.f32 %v4145, %v4145
        %v4148 = vmul.f32 %v4146, %v4146
        %v4149 = vsel %vm664, %v4147, 0.0
        %4150 = vadd.xlane.f32.xlu0 %v4149
        %v4151 = vpop.xlane.xlu0 %4150
        %v4152 = vsel %vm664, %v4148, 0.0
        %4153 = vadd.xlane.f32.xlu0 %v4152
        %v4154 = vpop.xlane.xlu0 %4153
        %v4155 = vmul.f32 %v4151, %v2421
        %v4156 = vmul.f32 %v4154, %v2421
        %v4157 = vadd.f32 %v4155, 1e-05
        %v4158 = vadd.f32 %v4156, 1e-05
        %v4159 = vrsqrt.pop %v4157
        %v4160 = vrsqrt.pop %v4158
        %v4161 = vmul.f32 %v4145, %v4159
        %v4162 = vmul.f32 %v4146, %v4160
        %v4164 = vlaneseq
        %v4165 = vshrl.u32 %v4164, 7
        %v4166 = vsub.s32 0, %v4165
        %v4167 = vrot.slane %v4135, %v4166
        %v4169 = vmul.f32 %v4161, %v4167
        %v4170 = vmul.f32 %v4162, %v4167
        %v4172 = vlaneseq
        %v4173 = vshrl.u32 %v4172, 7
        %v4174 = vsub.s32 0, %v4173
        %v4175 = vrot.slane %v4136, %v4174
        %v4177 = vadd.f32 %v4169, %v4175
        %v4178 = vadd.f32 %v4170, %v4175
        %4179 = vst.msk [vmem:[#allocation2] sm:$0xff] %vm664, %v4177
        %4180 = vst.msk [vmem:[#allocation2 + $0x8] sm:$0xff] %vm664, %v4178
        // Predicated region
        $region77: #{tpu_custom_call.1} parent=71 // pred_check
          %p4181 = pneg %p393
        $region78: #{tpu_custom_call.1} parent=71 // pred_check_branch
          %4183 = sbr.rel (%p4181) target = $region80
        $region79: #{tpu_custom_call.1} parent=71 // pred_region
          %s4184 = smul.u32 2, %s29
          %s4186 = ssub.s32 256, 256
          %4187 = vsyncadd [#allocation3], %s4186
          %s4188 = smul.addr %s4184, 128
          %s4189 = scalar_lea.hbm %s13, %s4188
          %s4190 = sshll.u32 [#allocation2], 4
          %s4191 = int_to_ptr.vmem [resolvable:$true] %s4190
          %4196 = dma.vmem_to_hbm [thread:$0]  %s4191, 256, %s4189, [#allocation3], 128, 128, 8
        $region80: #{tpu_custom_call.1} parent=71 // pred_fallthru
          _
        // Predicated region
        $region81: #{tpu_custom_call.1} parent=71 // pred_check
          %p4197 = pneg %p393
        $region82: #{tpu_custom_call.1} parent=71 // pred_check_branch
          %4199 = sbr.rel (%p4197) target = $region84
        $region83: #{tpu_custom_call.1} parent=71 // pred_region
          %4200 = dma.done [#allocation3], 256
        $region84: #{tpu_custom_call.1} parent=71 // pred_fallthru
          _
      $region72: #{tpu_custom_call.1} parent=5 // pred_fallthru
        _
      %p4201 = scmp.le.s32.totalorder 2, %s20
      // Predicated region
      $region85: #{tpu_custom_call.1} parent=5 // pred_check
        %p4202 = pneg %p4201
      $region86: #{tpu_custom_call.1} parent=5 // pred_check_branch
        %4204 = sbr.rel (%p4202) target = $region88
      $region87: #{tpu_custom_call.1} parent=5 // pred_region
        %s4205 = ssub.s32 %s20, 2
      $region88: #{tpu_custom_call.1} parent=5 // pred_fallthru
        _
    $region6: #{tpu_custom_call.1} parent=1 // loop_footer
      %s24 = sadd.s32 1, %s20
    $region7: #{tpu_custom_call.1} parent=1 // loop_footer_branch
      %19 = sbr.rel target = $region3
    $region8: #{tpu_custom_call.1} parent=1 // loop_exit
      _
    %4206 = vsyncpa [#allocation3], 1
    %s4207 = scalar_lea.sflag [#allocation3], 1
    %4208 = vsyncpa %s4207, 1

</llo_original>
